<compile_context>
chip_gen: v7x
topology: tpu7x:2x2x1
jax: 0.10.0
libtpu: 0.0.40
codegen_flags: <defaults>
</compile_context>

<pallas_src>
import numpy as np

import jax
import jax.numpy as jnp
from jax import lax
from jax.experimental import pallas as pl
from jax.experimental.pallas import tpu as pltpu

EPS = 1e-5


def _tile_w(v, w_reps):
    # (1, C) -> (1, W*C): channel vector repeated once per spatial column,
    # matching the (w, c) ordering of the dense (N*H, W*C) activation layout.
    return jnp.concatenate([v] * w_reps, axis=1)


def cpm_stage_kernel(x_ref, wb_ref, b_ref, g_ref, beta_ref, out_ref, pad_ref):
    # x_ref   : (N, H, W*C)           input activations (NHWC with W,C fused)
    # wb_ref  : (3, 3, (W+2)*C, W*C)  per-layer, per-ky banded conv weights
    # b_ref   : (3, C)                conv biases
    # g_ref   : (3, C)                BN gammas
    # beta_ref: (3, C)                BN betas
    # out_ref : (N*H, W*C)            lane-dense output slab (== NHWC row-major)
    # pad_ref : (N, H+2, (W+2)*C)     zero-padded activation scratch
    N, H, WC = x_ref.shape
    C = b_ref.shape[-1]
    W = WC // C
    NH = N * H
    NHW = N * H * W
    inv_n = 1.0 / float(NHW)

    # Zero the padded scratch ONCE: the interior is fully overwritten before
    # every conv, so only the 1-pixel halo must remain zero across the layers.
    pad_ref[...] = jnp.zeros(pad_ref.shape, pad_ref.dtype)
    pad_ref[:, 1:H + 1, C:(W + 1) * C] = x_ref[...]

    for li in range(3):
        # ---- conv3x3 "SAME": 3 dense banded matmuls (one per kernel row) ---
        xrow = pad_ref[:, 0:H, :].reshape(NH, (W + 2) * C)   # ref slice, ky=0
        y = jnp.dot(xrow, wb_ref[li, 0], preferred_element_type=jnp.float32)
        for ky in (1, 2):
            xrow = pad_ref[:, ky:ky + H, :].reshape(NH, (W + 2) * C)
            y = y + jnp.dot(xrow, wb_ref[li, ky],
                            preferred_element_type=jnp.float32)
        y = y + _tile_w(b_ref[li][None, :], W)               # conv bias

        # ---- BatchNorm (training-mode batch stats), single pass ------------
        s1 = jnp.sum(y, axis=0, keepdims=True)               # (1, W*C)
        s2 = jnp.sum(y * y, axis=0, keepdims=True)           # (1, W*C)
        # fold the W spatial copies of each channel into per-channel sums
        s1c = s1[:, 0:C]
        s2c = s2[:, 0:C]
        for wi in range(1, W):
            s1c = s1c + s1[:, wi * C:(wi + 1) * C]
            s2c = s2c + s2[:, wi * C:(wi + 1) * C]
        mean = s1c * inv_n                                   # (1, C)
        var = s2c * inv_n - mean * mean                      # biased variance
        scale = g_ref[li][None, :] * lax.rsqrt(var + EPS)    # rsqrt -> EUP
        shift = beta_ref[li][None, :] - mean * scale
        y = y * _tile_w(scale, W) + _tile_w(shift, W)

        if li < 2:
            y = jnp.maximum(y, 0.0)                          # ReLU (layers 1,2)
            pad_ref[:, 1:H + 1, C:(W + 1) * C] = y.reshape(N, H, WC)
        else:
            out_ref[...] = y                                 # lane-dense store


def build_banded_weights(w_hwio, W):
    """(L, 3, 3, Cin, Cout) HWIO conv weights -> (L, 3, (W+2)*Cin, W*Cout).

    B[li, ky, (wo+kx)*Cin + ci, wo*Cout + co] = w_hwio[li, ky, kx, ci, co],
    so a padded row-slab (N*H, (W+2)*Cin) matmul'd with B[li, ky] produces the
    ky-contribution of the 3x3 SAME conv for every output column at once.
    One-time host-side weight-layout transform (the analogue of repacking
    weights at checkpoint-load time).
    """
    L, KH, KW, Cin, Cout = w_hwio.shape
    wb = np.zeros((L, KH, (W + 2) * Cin, W * Cout), np.float32)
    w_np = np.asarray(w_hwio, dtype=np.float32)
    for li in range(L):
        for ky in range(KH):
            for kx in range(KW):
                for wo in range(W):
                    wi = wo + kx
                    wb[li, ky, wi * Cin:(wi + 1) * Cin,
                       wo * Cout:(wo + 1) * Cout] = w_np[li, ky, kx]
    return jnp.asarray(wb)


def cpm_stage_g3(x, w, b, g, beta):
    """x: (N,H,W,C) NHWC; w: (3,3,3,C,C) per-layer HWIO; b/g/beta: (3,C)."""
    N, H, W, C = x.shape
    wb = build_banded_weights(w, W)           # host-side, one-time prepack
    x2 = x.reshape(N, H, W * C)               # free row-major view
    y = pl.pallas_call(
        cpm_stage_kernel,
        out_shape=jax.ShapeDtypeStruct((N * H, W * C), jnp.float32),
        in_specs=[pl.BlockSpec(memory_space=pltpu.MemorySpace.VMEM)] * 5,
        out_specs=pl.BlockSpec(memory_space=pltpu.MemorySpace.VMEM),
        scratch_shapes=[pltpu.VMEM((N, H + 2, (W + 2) * C), jnp.float32)],
        compiler_params=pltpu.CompilerParams(
            # headroom when shapes grow (v5e scoped default is only 16 MiB);
            # safe on every generation.
            vmem_limit_bytes=32 * 1024 * 1024),
    )(x2, wb, b, g, beta)
    return y.reshape(N, H, W, C)              # free row-major view back to NHWC


def cpm_stage_g3_ref(x, w, b, g, beta):
    """Pure-JAX reference (NHWC), mirrors the PyTorch forward (train-mode BN)."""
    y = x
    for li in range(3):
        y = lax.conv_general_dilated(
            y, w[li], window_strides=(1, 1), padding="SAME",
            dimension_numbers=("NHWC", "HWIO", "NHWC")) + b[li]
        mean = jnp.mean(y, axis=(0, 1, 2), keepdims=True)
        var = jnp.mean(jnp.square(y - mean), axis=(0, 1, 2), keepdims=True)
        y = (y - mean) * lax.rsqrt(var + EPS) * g[li] + beta[li]
        if li < 2:
            y = jnp.maximum(y, 0.0)
    return y


if __name__ == "__main__":
    # NOTE: the PyTorch module only type-checks when in_channels == out_channels
    # (conv2/conv3 are declared with in_channels inputs but consume conv1/conv2
    # outputs), so we use C_in = C_out = C.
    N, H, W, C = 2, 16, 16, 16

    key = jax.random.PRNGKey(0)
    kx, kw, kb, kg, kbeta = jax.random.split(key, 5)

    x = jax.random.normal(kx, (N, H, W, C), dtype=jnp.float32)
    # deterministic parameter init (synthetic; not a checkpoint load)
    w = jax.random.normal(kw, (3, 3, 3, C, C), dtype=jnp.float32) * 0.1
    b = jax.random.normal(kb, (3, C), dtype=jnp.float32) * 0.05
    g = 1.0 + 0.1 * jax.random.normal(kg, (3, C), dtype=jnp.float32)
    beta = 0.05 * jax.random.normal(kbeta, (3, C), dtype=jnp.float32)

    out = jax.block_until_ready(cpm_stage_g3(x, w, b, g, beta))
    ref = jax.block_until_ready(cpm_stage_g3_ref(x, w, b, g, beta))

    np.testing.assert_allclose(np.asarray(out), np.asarray(ref),
                               rtol=1e-4, atol=1e-4)
    print("KERNEL_OK")
</pallas_src>

<mosaic_0001>
module attributes {stable_mosaic.version = 11 : i64} {
  func.func @cpm_stage_kernel(%arg0: memref<2x16x256xf32, #tpu.memory_space<vmem>>, %arg1: memref<3x3x288x256xf32, #tpu.memory_space<vmem>>, %arg2: memref<3x16xf32, #tpu.memory_space<vmem>>, %arg3: memref<3x16xf32, #tpu.memory_space<vmem>>, %arg4: memref<3x16xf32, #tpu.memory_space<vmem>>, %arg5: memref<32x256xf32, #tpu.memory_space<vmem>>, %arg6: memref<2x18x288xf32, #tpu.memory_space<vmem>>) attributes {dimension_semantics = [], scalar_prefetch = 0 : i64, scratch_operands = 1 : i64, tpu.core_type = #tpu.core_type<tc>} {
    %cst = arith.constant 0.000000e+00 : f32
    %0 = vector.broadcast %cst : f32 to vector<2x18x288xf32>
    %c0 = arith.constant 0 : index
    %c0_0 = arith.constant 0 : index
    %c0_1 = arith.constant 0 : index
    %1 = vector.load %arg6[%c0, %c0_0, %c0_1] : memref<2x18x288xf32, #tpu.memory_space<vmem>>, vector<2x18x288xf32>
    tpu.vector_store %arg6[%c0, %c0_0, %c0_1], %0 {strides = array<i32>} : memref<2x18x288xf32, #tpu.memory_space<vmem>>, vector<2x18x288xf32>,
    %c0_2 = arith.constant 0 : index
    %c0_3 = arith.constant 0 : index
    %c0_4 = arith.constant 0 : index
    %2 = vector.load %arg0[%c0_2, %c0_3, %c0_4] : memref<2x16x256xf32, #tpu.memory_space<vmem>>, vector<2x16x256xf32>
    %c0_5 = arith.constant 0 : index
    %c1 = arith.constant 1 : index
    %c16 = arith.constant 16 : index
    %3 = vector.load %arg6[%c0_5, %c1, %c16] : memref<2x18x288xf32, #tpu.memory_space<vmem>>, vector<2x16x256xf32>
    tpu.vector_store %arg6[%c0_5, %c1, %c16], %2 {strides = array<i32>} : memref<2x18x288xf32, #tpu.memory_space<vmem>>, vector<2x16x256xf32>,
    %c0_6 = arith.constant 0 : index
    %c0_7 = arith.constant 0 : index
    %c0_8 = arith.constant 0 : index
    %4 = vector.load %arg6[%c0_6, %c0_7, %c0_8] : memref<2x18x288xf32, #tpu.memory_space<vmem>>, vector<2x16x288xf32>
    %5 = vector.shape_cast %4 : vector<2x16x288xf32> to vector<32x288xf32>
    %c0_9 = arith.constant 0 : index
    %c0_10 = arith.constant 0 : index
    %c0_11 = arith.constant 0 : index
    %c0_12 = arith.constant 0 : index
    %6 = vector.load %arg1[%c0_9, %c0_10, %c0_11, %c0_12] : memref<3x3x288x256xf32, #tpu.memory_space<vmem>>, vector<1x1x288x256xf32>
    %7 = vector.shape_cast %6 : vector<1x1x288x256xf32> to vector<288x256xf32>
    %cst_13 = arith.constant dense<0.000000e+00> : vector<32x256xf32>
    %8 = tpu.matmul %5, %7, %cst_13 {dimension_numbers = #tpu.dot_dimension_numbers<[1], [0], [0], [1], [0, 0, 1, 1], [], []>} : vector<32x288xf32>, vector<288x256xf32>, vector<32x256xf32> -> vector<32x256xf32>
    %c0_14 = arith.constant 0 : index
    %c1_15 = arith.constant 1 : index
    %c0_16 = arith.constant 0 : index
    %9 = vector.load %arg6[%c0_14, %c1_15, %c0_16] : memref<2x18x288xf32, #tpu.memory_space<vmem>>, vector<2x16x288xf32>
    %10 = vector.shape_cast %9 : vector<2x16x288xf32> to vector<32x288xf32>
    %c0_17 = arith.constant 0 : index
    %c1_18 = arith.constant 1 : index
    %c0_19 = arith.constant 0 : index
    %c0_20 = arith.constant 0 : index
    %11 = vector.load %arg1[%c0_17, %c1_18, %c0_19, %c0_20] : memref<3x3x288x256xf32, #tpu.memory_space<vmem>>, vector<1x1x288x256xf32>
    %12 = vector.shape_cast %11 : vector<1x1x288x256xf32> to vector<288x256xf32>
    %cst_21 = arith.constant dense<0.000000e+00> : vector<32x256xf32>
    %13 = tpu.matmul %10, %12, %cst_21 {dimension_numbers = #tpu.dot_dimension_numbers<[1], [0], [0], [1], [0, 0, 1, 1], [], []>} : vector<32x288xf32>, vector<288x256xf32>, vector<32x256xf32> -> vector<32x256xf32>
    %14 = arith.addf %8, %13 : vector<32x256xf32>
    %c0_22 = arith.constant 0 : index
    %c2 = arith.constant 2 : index
    %c0_23 = arith.constant 0 : index
    %15 = vector.load %arg6[%c0_22, %c2, %c0_23] : memref<2x18x288xf32, #tpu.memory_space<vmem>>, vector<2x16x288xf32>
    %16 = vector.shape_cast %15 : vector<2x16x288xf32> to vector<32x288xf32>
    %c0_24 = arith.constant 0 : index
    %c2_25 = arith.constant 2 : index
    %c0_26 = arith.constant 0 : index
    %c0_27 = arith.constant 0 : index
    %17 = vector.load %arg1[%c0_24, %c2_25, %c0_26, %c0_27] : memref<3x3x288x256xf32, #tpu.memory_space<vmem>>, vector<1x1x288x256xf32>
    %18 = vector.shape_cast %17 : vector<1x1x288x256xf32> to vector<288x256xf32>
    %cst_28 = arith.constant dense<0.000000e+00> : vector<32x256xf32>
    %19 = tpu.matmul %16, %18, %cst_28 {dimension_numbers = #tpu.dot_dimension_numbers<[1], [0], [0], [1], [0, 0, 1, 1], [], []>} : vector<32x288xf32>, vector<288x256xf32>, vector<32x256xf32> -> vector<32x256xf32>
    %20 = arith.addf %14, %19 : vector<32x256xf32>
    %c0_29 = arith.constant 0 : index
    %c0_30 = arith.constant 0 : index
    %21 = vector.load %arg2[%c0_29, %c0_30] : memref<3x16xf32, #tpu.memory_space<vmem>>, vector<1x16xf32>
    %22 = vector.shape_cast %21 : vector<1x16xf32> to vector<16xf32>
    %23 = vector.shape_cast %22 : vector<16xf32> to vector<1x16xf32>
    %24 = tpu.concatenate %23, %23, %23, %23, %23, %23, %23, %23, %23, %23, %23, %23, %23, %23, %23, %23 in 1 : vector<1x16xf32>, vector<1x16xf32>, vector<1x16xf32>, vector<1x16xf32>, vector<1x16xf32>, vector<1x16xf32>, vector<1x16xf32>, vector<1x16xf32>, vector<1x16xf32>, vector<1x16xf32>, vector<1x16xf32>, vector<1x16xf32>, vector<1x16xf32>, vector<1x16xf32>, vector<1x16xf32>, vector<1x16xf32> -> vector<1x256xf32>
    %25 = vector.broadcast %24 : vector<1x256xf32> to vector<32x256xf32>
    %26 = arith.addf %20, %25 : vector<32x256xf32>
    %cst_31 = arith.constant dense<0.000000e+00> : vector<256xf32>
    %27 = vector.multi_reduction <add>, %26, %cst_31 [0] : vector<32x256xf32> to vector<256xf32>
    %28 = vector.shape_cast %27 : vector<256xf32> to vector<1x256xf32>
    %29 = arith.mulf %26, %26 : vector<32x256xf32>
    %cst_32 = arith.constant dense<0.000000e+00> : vector<256xf32>
    %30 = vector.multi_reduction <add>, %29, %cst_32 [0] : vector<32x256xf32> to vector<256xf32>
    %31 = vector.shape_cast %30 : vector<256xf32> to vector<1x256xf32>
    %32 = vector.extract_strided_slice %28 {offsets = [0, 0], sizes = [1, 16], strides = [1, 1]} : vector<1x256xf32> to vector<1x16xf32>
    %33 = vector.extract_strided_slice %31 {offsets = [0, 0], sizes = [1, 16], strides = [1, 1]} : vector<1x256xf32> to vector<1x16xf32>
    %34 = vector.extract_strided_slice %28 {offsets = [0, 16], sizes = [1, 16], strides = [1, 1]} : vector<1x256xf32> to vector<1x16xf32>
    %35 = arith.addf %32, %34 : vector<1x16xf32>
    %36 = vector.extract_strided_slice %31 {offsets = [0, 16], sizes = [1, 16], strides = [1, 1]} : vector<1x256xf32> to vector<1x16xf32>
    %37 = arith.addf %33, %36 : vector<1x16xf32>
    %38 = vector.extract_strided_slice %28 {offsets = [0, 32], sizes = [1, 16], strides = [1, 1]} : vector<1x256xf32> to vector<1x16xf32>
    %39 = arith.addf %35, %38 : vector<1x16xf32>
    %40 = vector.extract_strided_slice %31 {offsets = [0, 32], sizes = [1, 16], strides = [1, 1]} : vector<1x256xf32> to vector<1x16xf32>
    %41 = arith.addf %37, %40 : vector<1x16xf32>
    %42 = vector.extract_strided_slice %28 {offsets = [0, 48], sizes = [1, 16], strides = [1, 1]} : vector<1x256xf32> to vector<1x16xf32>
    %43 = arith.addf %39, %42 : vector<1x16xf32>
    %44 = vector.extract_strided_slice %31 {offsets = [0, 48], sizes = [1, 16], strides = [1, 1]} : vector<1x256xf32> to vector<1x16xf32>
    %45 = arith.addf %41, %44 : vector<1x16xf32>
    %46 = vector.extract_strided_slice %28 {offsets = [0, 64], sizes = [1, 16], strides = [1, 1]} : vector<1x256xf32> to vector<1x16xf32>
    %47 = arith.addf %43, %46 : vector<1x16xf32>
    %48 = vector.extract_strided_slice %31 {offsets = [0, 64], sizes = [1, 16], strides = [1, 1]} : vector<1x256xf32> to vector<1x16xf32>
    %49 = arith.addf %45, %48 : vector<1x16xf32>
    %50 = vector.extract_strided_slice %28 {offsets = [0, 80], sizes = [1, 16], strides = [1, 1]} : vector<1x256xf32> to vector<1x16xf32>
    %51 = arith.addf %47, %50 : vector<1x16xf32>
    %52 = vector.extract_strided_slice %31 {offsets = [0, 80], sizes = [1, 16], strides = [1, 1]} : vector<1x256xf32> to vector<1x16xf32>
    %53 = arith.addf %49, %52 : vector<1x16xf32>
    %54 = vector.extract_strided_slice %28 {offsets = [0, 96], sizes = [1, 16], strides = [1, 1]} : vector<1x256xf32> to vector<1x16xf32>
    %55 = arith.addf %51, %54 : vector<1x16xf32>
    %56 = vector.extract_strided_slice %31 {offsets = [0, 96], sizes = [1, 16], strides = [1, 1]} : vector<1x256xf32> to vector<1x16xf32>
    %57 = arith.addf %53, %56 : vector<1x16xf32>
    %58 = vector.extract_strided_slice %28 {offsets = [0, 112], sizes = [1, 16], strides = [1, 1]} : vector<1x256xf32> to vector<1x16xf32>
    %59 = arith.addf %55, %58 : vector<1x16xf32>
    %60 = vector.extract_strided_slice %31 {offsets = [0, 112], sizes = [1, 16], strides = [1, 1]} : vector<1x256xf32> to vector<1x16xf32>
    %61 = arith.addf %57, %60 : vector<1x16xf32>
    %62 = vector.extract_strided_slice %28 {offsets = [0, 128], sizes = [1, 16], strides = [1, 1]} : vector<1x256xf32> to vector<1x16xf32>
    %63 = arith.addf %59, %62 : vector<1x16xf32>
    %64 = vector.extract_strided_slice %31 {offsets = [0, 128], sizes = [1, 16], strides = [1, 1]} : vector<1x256xf32> to vector<1x16xf32>
    %65 = arith.addf %61, %64 : vector<1x16xf32>
    %66 = vector.extract_strided_slice %28 {offsets = [0, 144], sizes = [1, 16], strides = [1, 1]} : vector<1x256xf32> to vector<1x16xf32>
    %67 = arith.addf %63, %66 : vector<1x16xf32>
    %68 = vector.extract_strided_slice %31 {offsets = [0, 144], sizes = [1, 16], strides = [1, 1]} : vector<1x256xf32> to vector<1x16xf32>
    %69 = arith.addf %65, %68 : vector<1x16xf32>
    %70 = vector.extract_strided_slice %28 {offsets = [0, 160], sizes = [1, 16], strides = [1, 1]} : vector<1x256xf32> to vector<1x16xf32>
    %71 = arith.addf %67, %70 : vector<1x16xf32>
    %72 = vector.extract_strided_slice %31 {offsets = [0, 160], sizes = [1, 16], strides = [1, 1]} : vector<1x256xf32> to vector<1x16xf32>
    %73 = arith.addf %69, %72 : vector<1x16xf32>
    %74 = vector.extract_strided_slice %28 {offsets = [0, 176], sizes = [1, 16], strides = [1, 1]} : vector<1x256xf32> to vector<1x16xf32>
    %75 = arith.addf %71, %74 : vector<1x16xf32>
    %76 = vector.extract_strided_slice %31 {offsets = [0, 176], sizes = [1, 16], strides = [1, 1]} : vector<1x256xf32> to vector<1x16xf32>
    %77 = arith.addf %73, %76 : vector<1x16xf32>
    %78 = vector.extract_strided_slice %28 {offsets = [0, 192], sizes = [1, 16], strides = [1, 1]} : vector<1x256xf32> to vector<1x16xf32>
    %79 = arith.addf %75, %78 : vector<1x16xf32>
    %80 = vector.extract_strided_slice %31 {offsets = [0, 192], sizes = [1, 16], strides = [1, 1]} : vector<1x256xf32> to vector<1x16xf32>
    %81 = arith.addf %77, %80 : vector<1x16xf32>
    %82 = vector.extract_strided_slice %28 {offsets = [0, 208], sizes = [1, 16], strides = [1, 1]} : vector<1x256xf32> to vector<1x16xf32>
    %83 = arith.addf %79, %82 : vector<1x16xf32>
    %84 = vector.extract_strided_slice %31 {offsets = [0, 208], sizes = [1, 16], strides = [1, 1]} : vector<1x256xf32> to vector<1x16xf32>
    %85 = arith.addf %81, %84 : vector<1x16xf32>
    %86 = vector.extract_strided_slice %28 {offsets = [0, 224], sizes = [1, 16], strides = [1, 1]} : vector<1x256xf32> to vector<1x16xf32>
    %87 = arith.addf %83, %86 : vector<1x16xf32>
    %88 = vector.extract_strided_slice %31 {offsets = [0, 224], sizes = [1, 16], strides = [1, 1]} : vector<1x256xf32> to vector<1x16xf32>
    %89 = arith.addf %85, %88 : vector<1x16xf32>
    %90 = vector.extract_strided_slice %28 {offsets = [0, 240], sizes = [1, 16], strides = [1, 1]} : vector<1x256xf32> to vector<1x16xf32>
    %91 = arith.addf %87, %90 : vector<1x16xf32>
    %92 = vector.extract_strided_slice %31 {offsets = [0, 240], sizes = [1, 16], strides = [1, 1]} : vector<1x256xf32> to vector<1x16xf32>
    %93 = arith.addf %89, %92 : vector<1x16xf32>
    %cst_33 = arith.constant 0.001953125 : f32
    %94 = vector.broadcast %cst_33 : f32 to vector<1x16xf32>
    %95 = arith.mulf %91, %94 : vector<1x16xf32>
    %cst_34 = arith.constant 0.001953125 : f32
    %96 = vector.broadcast %cst_34 : f32 to vector<1x16xf32>
    %97 = arith.mulf %93, %96 : vector<1x16xf32>
    %98 = arith.mulf %95, %95 : vector<1x16xf32>
    %99 = arith.subf %97, %98 : vector<1x16xf32>
    %c0_35 = arith.constant 0 : index
    %c0_36 = arith.constant 0 : index
    %100 = vector.load %arg3[%c0_35, %c0_36] : memref<3x16xf32, #tpu.memory_space<vmem>>, vector<1x16xf32>
    %101 = vector.shape_cast %100 : vector<1x16xf32> to vector<16xf32>
    %102 = vector.shape_cast %101 : vector<16xf32> to vector<1x16xf32>
    %cst_37 = arith.constant 9.99999974E-6 : f32
    %103 = vector.broadcast %cst_37 : f32 to vector<1x16xf32>
    %104 = arith.addf %99, %103 : vector<1x16xf32>
    %105 = math.rsqrt %104 : vector<1x16xf32>
    %106 = arith.mulf %102, %105 : vector<1x16xf32>
    %c0_38 = arith.constant 0 : index
    %c0_39 = arith.constant 0 : index
    %107 = vector.load %arg4[%c0_38, %c0_39] : memref<3x16xf32, #tpu.memory_space<vmem>>, vector<1x16xf32>
    %108 = vector.shape_cast %107 : vector<1x16xf32> to vector<16xf32>
    %109 = vector.shape_cast %108 : vector<16xf32> to vector<1x16xf32>
    %110 = arith.mulf %95, %106 : vector<1x16xf32>
    %111 = arith.subf %109, %110 : vector<1x16xf32>
    %112 = tpu.concatenate %106, %106, %106, %106, %106, %106, %106, %106, %106, %106, %106, %106, %106, %106, %106, %106 in 1 : vector<1x16xf32>, vector<1x16xf32>, vector<1x16xf32>, vector<1x16xf32>, vector<1x16xf32>, vector<1x16xf32>, vector<1x16xf32>, vector<1x16xf32>, vector<1x16xf32>, vector<1x16xf32>, vector<1x16xf32>, vector<1x16xf32>, vector<1x16xf32>, vector<1x16xf32>, vector<1x16xf32>, vector<1x16xf32> -> vector<1x256xf32>
    %113 = vector.broadcast %112 : vector<1x256xf32> to vector<32x256xf32>
    %114 = arith.mulf %26, %113 : vector<32x256xf32>
    %115 = tpu.concatenate %111, %111, %111, %111, %111, %111, %111, %111, %111, %111, %111, %111, %111, %111, %111, %111 in 1 : vector<1x16xf32>, vector<1x16xf32>, vector<1x16xf32>, vector<1x16xf32>, vector<1x16xf32>, vector<1x16xf32>, vector<1x16xf32>, vector<1x16xf32>, vector<1x16xf32>, vector<1x16xf32>, vector<1x16xf32>, vector<1x16xf32>, vector<1x16xf32>, vector<1x16xf32>, vector<1x16xf32>, vector<1x16xf32> -> vector<1x256xf32>
    %116 = vector.broadcast %115 : vector<1x256xf32> to vector<32x256xf32>
    %117 = arith.addf %114, %116 : vector<32x256xf32>
    %cst_40 = arith.constant 0.000000e+00 : f32
    %118 = vector.broadcast %cst_40 : f32 to vector<32x256xf32>
    %119 = arith.maximumf %117, %118 : vector<32x256xf32>
    %120 = vector.shape_cast %119 : vector<32x256xf32> to vector<2x16x256xf32>
    %c0_41 = arith.constant 0 : index
    %c1_42 = arith.constant 1 : index
    %c16_43 = arith.constant 16 : index
    %121 = vector.load %arg6[%c0_41, %c1_42, %c16_43] : memref<2x18x288xf32, #tpu.memory_space<vmem>>, vector<2x16x256xf32>
    tpu.vector_store %arg6[%c0_41, %c1_42, %c16_43], %120 {strides = array<i32>} : memref<2x18x288xf32, #tpu.memory_space<vmem>>, vector<2x16x256xf32>,
    %c0_44 = arith.constant 0 : index
    %c0_45 = arith.constant 0 : index
    %c0_46 = arith.constant 0 : index
    %122 = vector.load %arg6[%c0_44, %c0_45, %c0_46] : memref<2x18x288xf32, #tpu.memory_space<vmem>>, vector<2x16x288xf32>
    %123 = vector.shape_cast %122 : vector<2x16x288xf32> to vector<32x288xf32>
    %c1_47 = arith.constant 1 : index
    %c0_48 = arith.constant 0 : index
    %c0_49 = arith.constant 0 : index
    %c0_50 = arith.constant 0 : index
    %124 = vector.load %arg1[%c1_47, %c0_48, %c0_49, %c0_50] : memref<3x3x288x256xf32, #tpu.memory_space<vmem>>, vector<1x1x288x256xf32>
    %125 = vector.shape_cast %124 : vector<1x1x288x256xf32> to vector<288x256xf32>
    %cst_51 = arith.constant dense<0.000000e+00> : vector<32x256xf32>
    %126 = tpu.matmul %123, %125, %cst_51 {dimension_numbers = #tpu.dot_dimension_numbers<[1], [0], [0], [1], [0, 0, 1, 1], [], []>} : vector<32x288xf32>, vector<288x256xf32>, vector<32x256xf32> -> vector<32x256xf32>
    %c0_52 = arith.constant 0 : index
    %c1_53 = arith.constant 1 : index
    %c0_54 = arith.constant 0 : index
    %127 = vector.load %arg6[%c0_52, %c1_53, %c0_54] : memref<2x18x288xf32, #tpu.memory_space<vmem>>, vector<2x16x288xf32>
    %128 = vector.shape_cast %127 : vector<2x16x288xf32> to vector<32x288xf32>
    %c1_55 = arith.constant 1 : index
    %c1_56 = arith.constant 1 : index
    %c0_57 = arith.constant 0 : index
    %c0_58 = arith.constant 0 : index
    %129 = vector.load %arg1[%c1_55, %c1_56, %c0_57, %c0_58] : memref<3x3x288x256xf32, #tpu.memory_space<vmem>>, vector<1x1x288x256xf32>
    %130 = vector.shape_cast %129 : vector<1x1x288x256xf32> to vector<288x256xf32>
    %cst_59 = arith.constant dense<0.000000e+00> : vector<32x256xf32>
    %131 = tpu.matmul %128, %130, %cst_59 {dimension_numbers = #tpu.dot_dimension_numbers<[1], [0], [0], [1], [0, 0, 1, 1], [], []>} : vector<32x288xf32>, vector<288x256xf32>, vector<32x256xf32> -> vector<32x256xf32>
    %132 = arith.addf %126, %131 : vector<32x256xf32>
    %c0_60 = arith.constant 0 : index
    %c2_61 = arith.constant 2 : index
    %c0_62 = arith.constant 0 : index
    %133 = vector.load %arg6[%c0_60, %c2_61, %c0_62] : memref<2x18x288xf32, #tpu.memory_space<vmem>>, vector<2x16x288xf32>
    %134 = vector.shape_cast %133 : vector<2x16x288xf32> to vector<32x288xf32>
    %c1_63 = arith.constant 1 : index
    %c2_64 = arith.constant 2 : index
    %c0_65 = arith.constant 0 : index
    %c0_66 = arith.constant 0 : index
    %135 = vector.load %arg1[%c1_63, %c2_64, %c0_65, %c0_66] : memref<3x3x288x256xf32, #tpu.memory_space<vmem>>, vector<1x1x288x256xf32>
    %136 = vector.shape_cast %135 : vector<1x1x288x256xf32> to vector<288x256xf32>
    %cst_67 = arith.constant dense<0.000000e+00> : vector<32x256xf32>
    %137 = tpu.matmul %134, %136, %cst_67 {dimension_numbers = #tpu.dot_dimension_numbers<[1], [0], [0], [1], [0, 0, 1, 1], [], []>} : vector<32x288xf32>, vector<288x256xf32>, vector<32x256xf32> -> vector<32x256xf32>
    %138 = arith.addf %132, %137 : vector<32x256xf32>
    %c1_68 = arith.constant 1 : index
    %c0_69 = arith.constant 0 : index
    %139 = vector.load %arg2[%c1_68, %c0_69] : memref<3x16xf32, #tpu.memory_space<vmem>>, vector<1x16xf32>
    %140 = vector.shape_cast %139 : vector<1x16xf32> to vector<16xf32>
    %141 = vector.shape_cast %140 : vector<16xf32> to vector<1x16xf32>
    %142 = tpu.concatenate %141, %141, %141, %141, %141, %141, %141, %141, %141, %141, %141, %141, %141, %141, %141, %141 in 1 : vector<1x16xf32>, vector<1x16xf32>, vector<1x16xf32>, vector<1x16xf32>, vector<1x16xf32>, vector<1x16xf32>, vector<1x16xf32>, vector<1x16xf32>, vector<1x16xf32>, vector<1x16xf32>, vector<1x16xf32>, vector<1x16xf32>, vector<1x16xf32>, vector<1x16xf32>, vector<1x16xf32>, vector<1x16xf32> -> vector<1x256xf32>
    %143 = vector.broadcast %142 : vector<1x256xf32> to vector<32x256xf32>
    %144 = arith.addf %138, %143 : vector<32x256xf32>
    %cst_70 = arith.constant dense<0.000000e+00> : vector<256xf32>
    %145 = vector.multi_reduction <add>, %144, %cst_70 [0] : vector<32x256xf32> to vector<256xf32>
    %146 = vector.shape_cast %145 : vector<256xf32> to vector<1x256xf32>
    %147 = arith.mulf %144, %144 : vector<32x256xf32>
    %cst_71 = arith.constant dense<0.000000e+00> : vector<256xf32>
    %148 = vector.multi_reduction <add>, %147, %cst_71 [0] : vector<32x256xf32> to vector<256xf32>
    %149 = vector.shape_cast %148 : vector<256xf32> to vector<1x256xf32>
    %150 = vector.extract_strided_slice %146 {offsets = [0, 0], sizes = [1, 16], strides = [1, 1]} : vector<1x256xf32> to vector<1x16xf32>
    %151 = vector.extract_strided_slice %149 {offsets = [0, 0], sizes = [1, 16], strides = [1, 1]} : vector<1x256xf32> to vector<1x16xf32>
    %152 = vector.extract_strided_slice %146 {offsets = [0, 16], sizes = [1, 16], strides = [1, 1]} : vector<1x256xf32> to vector<1x16xf32>
    %153 = arith.addf %150, %152 : vector<1x16xf32>
    %154 = vector.extract_strided_slice %149 {offsets = [0, 16], sizes = [1, 16], strides = [1, 1]} : vector<1x256xf32> to vector<1x16xf32>
    %155 = arith.addf %151, %154 : vector<1x16xf32>
    %156 = vector.extract_strided_slice %146 {offsets = [0, 32], sizes = [1, 16], strides = [1, 1]} : vector<1x256xf32> to vector<1x16xf32>
    %157 = arith.addf %153, %156 : vector<1x16xf32>
    %158 = vector.extract_strided_slice %149 {offsets = [0, 32], sizes = [1, 16], strides = [1, 1]} : vector<1x256xf32> to vector<1x16xf32>
    %159 = arith.addf %155, %158 : vector<1x16xf32>
    %160 = vector.extract_strided_slice %146 {offsets = [0, 48], sizes = [1, 16], strides = [1, 1]} : vector<1x256xf32> to vector<1x16xf32>
    %161 = arith.addf %157, %160 : vector<1x16xf32>
    %162 = vector.extract_strided_slice %149 {offsets = [0, 48], sizes = [1, 16], strides = [1, 1]} : vector<1x256xf32> to vector<1x16xf32>
    %163 = arith.addf %159, %162 : vector<1x16xf32>
    %164 = vector.extract_strided_slice %146 {offsets = [0, 64], sizes = [1, 16], strides = [1, 1]} : vector<1x256xf32> to vector<1x16xf32>
    %165 = arith.addf %161, %164 : vector<1x16xf32>
    %166 = vector.extract_strided_slice %149 {offsets = [0, 64], sizes = [1, 16], strides = [1, 1]} : vector<1x256xf32> to vector<1x16xf32>
    %167 = arith.addf %163, %166 : vector<1x16xf32>
    %168 = vector.extract_strided_slice %146 {offsets = [0, 80], sizes = [1, 16], strides = [1, 1]} : vector<1x256xf32> to vector<1x16xf32>
    %169 = arith.addf %165, %168 : vector<1x16xf32>
    %170 = vector.extract_strided_slice %149 {offsets = [0, 80], sizes = [1, 16], strides = [1, 1]} : vector<1x256xf32> to vector<1x16xf32>
    %171 = arith.addf %167, %170 : vector<1x16xf32>
    %172 = vector.extract_strided_slice %146 {offsets = [0, 96], sizes = [1, 16], strides = [1, 1]} : vector<1x256xf32> to vector<1x16xf32>
    %173 = arith.addf %169, %172 : vector<1x16xf32>
    %174 = vector.extract_strided_slice %149 {offsets = [0, 96], sizes = [1, 16], strides = [1, 1]} : vector<1x256xf32> to vector<1x16xf32>
    %175 = arith.addf %171, %174 : vector<1x16xf32>
    %176 = vector.extract_strided_slice %146 {offsets = [0, 112], sizes = [1, 16], strides = [1, 1]} : vector<1x256xf32> to vector<1x16xf32>
    %177 = arith.addf %173, %176 : vector<1x16xf32>
    %178 = vector.extract_strided_slice %149 {offsets = [0, 112], sizes = [1, 16], strides = [1, 1]} : vector<1x256xf32> to vector<1x16xf32>
    %179 = arith.addf %175, %178 : vector<1x16xf32>
    %180 = vector.extract_strided_slice %146 {offsets = [0, 128], sizes = [1, 16], strides = [1, 1]} : vector<1x256xf32> to vector<1x16xf32>
    %181 = arith.addf %177, %180 : vector<1x16xf32>
    %182 = vector.extract_strided_slice %149 {offsets = [0, 128], sizes = [1, 16], strides = [1, 1]} : vector<1x256xf32> to vector<1x16xf32>
    %183 = arith.addf %179, %182 : vector<1x16xf32>
    %184 = vector.extract_strided_slice %146 {offsets = [0, 144], sizes = [1, 16], strides = [1, 1]} : vector<1x256xf32> to vector<1x16xf32>
    %185 = arith.addf %181, %184 : vector<1x16xf32>
    %186 = vector.extract_strided_slice %149 {offsets = [0, 144], sizes = [1, 16], strides = [1, 1]} : vector<1x256xf32> to vector<1x16xf32>
    %187 = arith.addf %183, %186 : vector<1x16xf32>
    %188 = vector.extract_strided_slice %146 {offsets = [0, 160], sizes = [1, 16], strides = [1, 1]} : vector<1x256xf32> to vector<1x16xf32>
    %189 = arith.addf %185, %188 : vector<1x16xf32>
    %190 = vector.extract_strided_slice %149 {offsets = [0, 160], sizes = [1, 16], strides = [1, 1]} : vector<1x256xf32> to vector<1x16xf32>
    %191 = arith.addf %187, %190 : vector<1x16xf32>
    %192 = vector.extract_strided_slice %146 {offsets = [0, 176], sizes = [1, 16], strides = [1, 1]} : vector<1x256xf32> to vector<1x16xf32>
    %193 = arith.addf %189, %192 : vector<1x16xf32>
    %194 = vector.extract_strided_slice %149 {offsets = [0, 176], sizes = [1, 16], strides = [1, 1]} : vector<1x256xf32> to vector<1x16xf32>
    %195 = arith.addf %191, %194 : vector<1x16xf32>
    %196 = vector.extract_strided_slice %146 {offsets = [0, 192], sizes = [1, 16], strides = [1, 1]} : vector<1x256xf32> to vector<1x16xf32>
    %197 = arith.addf %193, %196 : vector<1x16xf32>
    %198 = vector.extract_strided_slice %149 {offsets = [0, 192], sizes = [1, 16], strides = [1, 1]} : vector<1x256xf32> to vector<1x16xf32>
    %199 = arith.addf %195, %198 : vector<1x16xf32>
    %200 = vector.extract_strided_slice %146 {offsets = [0, 208], sizes = [1, 16], strides = [1, 1]} : vector<1x256xf32> to vector<1x16xf32>
    %201 = arith.addf %197, %200 : vector<1x16xf32>
    %202 = vector.extract_strided_slice %149 {offsets = [0, 208], sizes = [1, 16], strides = [1, 1]} : vector<1x256xf32> to vector<1x16xf32>
    %203 = arith.addf %199, %202 : vector<1x16xf32>
    %204 = vector.extract_strided_slice %146 {offsets = [0, 224], sizes = [1, 16], strides = [1, 1]} : vector<1x256xf32> to vector<1x16xf32>
    %205 = arith.addf %201, %204 : vector<1x16xf32>
    %206 = vector.extract_strided_slice %149 {offsets = [0, 224], sizes = [1, 16], strides = [1, 1]} : vector<1x256xf32> to vector<1x16xf32>
    %207 = arith.addf %203, %206 : vector<1x16xf32>
    %208 = vector.extract_strided_slice %146 {offsets = [0, 240], sizes = [1, 16], strides = [1, 1]} : vector<1x256xf32> to vector<1x16xf32>
    %209 = arith.addf %205, %208 : vector<1x16xf32>
    %210 = vector.extract_strided_slice %149 {offsets = [0, 240], sizes = [1, 16], strides = [1, 1]} : vector<1x256xf32> to vector<1x16xf32>
    %211 = arith.addf %207, %210 : vector<1x16xf32>
    %cst_72 = arith.constant 0.001953125 : f32
    %212 = vector.broadcast %cst_72 : f32 to vector<1x16xf32>
    %213 = arith.mulf %209, %212 : vector<1x16xf32>
    %cst_73 = arith.constant 0.001953125 : f32
    %214 = vector.broadcast %cst_73 : f32 to vector<1x16xf32>
    %215 = arith.mulf %211, %214 : vector<1x16xf32>
    %216 = arith.mulf %213, %213 : vector<1x16xf32>
    %217 = arith.subf %215, %216 : vector<1x16xf32>
    %c1_74 = arith.constant 1 : index
    %c0_75 = arith.constant 0 : index
    %218 = vector.load %arg3[%c1_74, %c0_75] : memref<3x16xf32, #tpu.memory_space<vmem>>, vector<1x16xf32>
    %219 = vector.shape_cast %218 : vector<1x16xf32> to vector<16xf32>
    %220 = vector.shape_cast %219 : vector<16xf32> to vector<1x16xf32>
    %cst_76 = arith.constant 9.99999974E-6 : f32
    %221 = vector.broadcast %cst_76 : f32 to vector<1x16xf32>
    %222 = arith.addf %217, %221 : vector<1x16xf32>
    %223 = math.rsqrt %222 : vector<1x16xf32>
    %224 = arith.mulf %220, %223 : vector<1x16xf32>
    %c1_77 = arith.constant 1 : index
    %c0_78 = arith.constant 0 : index
    %225 = vector.load %arg4[%c1_77, %c0_78] : memref<3x16xf32, #tpu.memory_space<vmem>>, vector<1x16xf32>
    %226 = vector.shape_cast %225 : vector<1x16xf32> to vector<16xf32>
    %227 = vector.shape_cast %226 : vector<16xf32> to vector<1x16xf32>
    %228 = arith.mulf %213, %224 : vector<1x16xf32>
    %229 = arith.subf %227, %228 : vector<1x16xf32>
    %230 = tpu.concatenate %224, %224, %224, %224, %224, %224, %224, %224, %224, %224, %224, %224, %224, %224, %224, %224 in 1 : vector<1x16xf32>, vector<1x16xf32>, vector<1x16xf32>, vector<1x16xf32>, vector<1x16xf32>, vector<1x16xf32>, vector<1x16xf32>, vector<1x16xf32>, vector<1x16xf32>, vector<1x16xf32>, vector<1x16xf32>, vector<1x16xf32>, vector<1x16xf32>, vector<1x16xf32>, vector<1x16xf32>, vector<1x16xf32> -> vector<1x256xf32>
    %231 = vector.broadcast %230 : vector<1x256xf32> to vector<32x256xf32>
    %232 = arith.mulf %144, %231 : vector<32x256xf32>
    %233 = tpu.concatenate %229, %229, %229, %229, %229, %229, %229, %229, %229, %229, %229, %229, %229, %229, %229, %229 in 1 : vector<1x16xf32>, vector<1x16xf32>, vector<1x16xf32>, vector<1x16xf32>, vector<1x16xf32>, vector<1x16xf32>, vector<1x16xf32>, vector<1x16xf32>, vector<1x16xf32>, vector<1x16xf32>, vector<1x16xf32>, vector<1x16xf32>, vector<1x16xf32>, vector<1x16xf32>, vector<1x16xf32>, vector<1x16xf32> -> vector<1x256xf32>
    %234 = vector.broadcast %233 : vector<1x256xf32> to vector<32x256xf32>
    %235 = arith.addf %232, %234 : vector<32x256xf32>
    %cst_79 = arith.constant 0.000000e+00 : f32
    %236 = vector.broadcast %cst_79 : f32 to vector<32x256xf32>
    %237 = arith.maximumf %235, %236 : vector<32x256xf32>
    %238 = vector.shape_cast %237 : vector<32x256xf32> to vector<2x16x256xf32>
    %c0_80 = arith.constant 0 : index
    %c1_81 = arith.constant 1 : index
    %c16_82 = arith.constant 16 : index
    %239 = vector.load %arg6[%c0_80, %c1_81, %c16_82] : memref<2x18x288xf32, #tpu.memory_space<vmem>>, vector<2x16x256xf32>
    tpu.vector_store %arg6[%c0_80, %c1_81, %c16_82], %238 {strides = array<i32>} : memref<2x18x288xf32, #tpu.memory_space<vmem>>, vector<2x16x256xf32>,
    %c0_83 = arith.constant 0 : index
    %c0_84 = arith.constant 0 : index
    %c0_85 = arith.constant 0 : index
    %240 = vector.load %arg6[%c0_83, %c0_84, %c0_85] : memref<2x18x288xf32, #tpu.memory_space<vmem>>, vector<2x16x288xf32>
    %241 = vector.shape_cast %240 : vector<2x16x288xf32> to vector<32x288xf32>
    %c2_86 = arith.constant 2 : index
    %c0_87 = arith.constant 0 : index
    %c0_88 = arith.constant 0 : index
    %c0_89 = arith.constant 0 : index
    %242 = vector.load %arg1[%c2_86, %c0_87, %c0_88, %c0_89] : memref<3x3x288x256xf32, #tpu.memory_space<vmem>>, vector<1x1x288x256xf32>
    %243 = vector.shape_cast %242 : vector<1x1x288x256xf32> to vector<288x256xf32>
    %cst_90 = arith.constant dense<0.000000e+00> : vector<32x256xf32>
    %244 = tpu.matmul %241, %243, %cst_90 {dimension_numbers = #tpu.dot_dimension_numbers<[1], [0], [0], [1], [0, 0, 1, 1], [], []>} : vector<32x288xf32>, vector<288x256xf32>, vector<32x256xf32> -> vector<32x256xf32>
    %c0_91 = arith.constant 0 : index
    %c1_92 = arith.constant 1 : index
    %c0_93 = arith.constant 0 : index
    %245 = vector.load %arg6[%c0_91, %c1_92, %c0_93] : memref<2x18x288xf32, #tpu.memory_space<vmem>>, vector<2x16x288xf32>
    %246 = vector.shape_cast %245 : vector<2x16x288xf32> to vector<32x288xf32>
    %c2_94 = arith.constant 2 : index
    %c1_95 = arith.constant 1 : index
    %c0_96 = arith.constant 0 : index
    %c0_97 = arith.constant 0 : index
    %247 = vector.load %arg1[%c2_94, %c1_95, %c0_96, %c0_97] : memref<3x3x288x256xf32, #tpu.memory_space<vmem>>, vector<1x1x288x256xf32>
    %248 = vector.shape_cast %247 : vector<1x1x288x256xf32> to vector<288x256xf32>
    %cst_98 = arith.constant dense<0.000000e+00> : vector<32x256xf32>
    %249 = tpu.matmul %246, %248, %cst_98 {dimension_numbers = #tpu.dot_dimension_numbers<[1], [0], [0], [1], [0, 0, 1, 1], [], []>} : vector<32x288xf32>, vector<288x256xf32>, vector<32x256xf32> -> vector<32x256xf32>
    %250 = arith.addf %244, %249 : vector<32x256xf32>
    %c0_99 = arith.constant 0 : index
    %c2_100 = arith.constant 2 : index
    %c0_101 = arith.constant 0 : index
    %251 = vector.load %arg6[%c0_99, %c2_100, %c0_101] : memref<2x18x288xf32, #tpu.memory_space<vmem>>, vector<2x16x288xf32>
    %252 = vector.shape_cast %251 : vector<2x16x288xf32> to vector<32x288xf32>
    %c2_102 = arith.constant 2 : index
    %c2_103 = arith.constant 2 : index
    %c0_104 = arith.constant 0 : index
    %c0_105 = arith.constant 0 : index
    %253 = vector.load %arg1[%c2_102, %c2_103, %c0_104, %c0_105] : memref<3x3x288x256xf32, #tpu.memory_space<vmem>>, vector<1x1x288x256xf32>
    %254 = vector.shape_cast %253 : vector<1x1x288x256xf32> to vector<288x256xf32>
    %cst_106 = arith.constant dense<0.000000e+00> : vector<32x256xf32>
    %255 = tpu.matmul %252, %254, %cst_106 {dimension_numbers = #tpu.dot_dimension_numbers<[1], [0], [0], [1], [0, 0, 1, 1], [], []>} : vector<32x288xf32>, vector<288x256xf32>, vector<32x256xf32> -> vector<32x256xf32>
    %256 = arith.addf %250, %255 : vector<32x256xf32>
    %c2_107 = arith.constant 2 : index
    %c0_108 = arith.constant 0 : index
    %257 = vector.load %arg2[%c2_107, %c0_108] : memref<3x16xf32, #tpu.memory_space<vmem>>, vector<1x16xf32>
    %258 = vector.shape_cast %257 : vector<1x16xf32> to vector<16xf32>
    %259 = vector.shape_cast %258 : vector<16xf32> to vector<1x16xf32>
    %260 = tpu.concatenate %259, %259, %259, %259, %259, %259, %259, %259, %259, %259, %259, %259, %259, %259, %259, %259 in 1 : vector<1x16xf32>, vector<1x16xf32>, vector<1x16xf32>, vector<1x16xf32>, vector<1x16xf32>, vector<1x16xf32>, vector<1x16xf32>, vector<1x16xf32>, vector<1x16xf32>, vector<1x16xf32>, vector<1x16xf32>, vector<1x16xf32>, vector<1x16xf32>, vector<1x16xf32>, vector<1x16xf32>, vector<1x16xf32> -> vector<1x256xf32>
    %261 = vector.broadcast %260 : vector<1x256xf32> to vector<32x256xf32>
    %262 = arith.addf %256, %261 : vector<32x256xf32>
    %cst_109 = arith.constant dense<0.000000e+00> : vector<256xf32>
    %263 = vector.multi_reduction <add>, %262, %cst_109 [0] : vector<32x256xf32> to vector<256xf32>
    %264 = vector.shape_cast %263 : vector<256xf32> to vector<1x256xf32>
    %265 = arith.mulf %262, %262 : vector<32x256xf32>
    %cst_110 = arith.constant dense<0.000000e+00> : vector<256xf32>
    %266 = vector.multi_reduction <add>, %265, %cst_110 [0] : vector<32x256xf32> to vector<256xf32>
    %267 = vector.shape_cast %266 : vector<256xf32> to vector<1x256xf32>
    %268 = vector.extract_strided_slice %264 {offsets = [0, 0], sizes = [1, 16], strides = [1, 1]} : vector<1x256xf32> to vector<1x16xf32>
    %269 = vector.extract_strided_slice %267 {offsets = [0, 0], sizes = [1, 16], strides = [1, 1]} : vector<1x256xf32> to vector<1x16xf32>
    %270 = vector.extract_strided_slice %264 {offsets = [0, 16], sizes = [1, 16], strides = [1, 1]} : vector<1x256xf32> to vector<1x16xf32>
    %271 = arith.addf %268, %270 : vector<1x16xf32>
    %272 = vector.extract_strided_slice %267 {offsets = [0, 16], sizes = [1, 16], strides = [1, 1]} : vector<1x256xf32> to vector<1x16xf32>
    %273 = arith.addf %269, %272 : vector<1x16xf32>
    %274 = vector.extract_strided_slice %264 {offsets = [0, 32], sizes = [1, 16], strides = [1, 1]} : vector<1x256xf32> to vector<1x16xf32>
    %275 = arith.addf %271, %274 : vector<1x16xf32>
    %276 = vector.extract_strided_slice %267 {offsets = [0, 32], sizes = [1, 16], strides = [1, 1]} : vector<1x256xf32> to vector<1x16xf32>
    %277 = arith.addf %273, %276 : vector<1x16xf32>
    %278 = vector.extract_strided_slice %264 {offsets = [0, 48], sizes = [1, 16], strides = [1, 1]} : vector<1x256xf32> to vector<1x16xf32>
    %279 = arith.addf %275, %278 : vector<1x16xf32>
    %280 = vector.extract_strided_slice %267 {offsets = [0, 48], sizes = [1, 16], strides = [1, 1]} : vector<1x256xf32> to vector<1x16xf32>
    %281 = arith.addf %277, %280 : vector<1x16xf32>
    %282 = vector.extract_strided_slice %264 {offsets = [0, 64], sizes = [1, 16], strides = [1, 1]} : vector<1x256xf32> to vector<1x16xf32>
    %283 = arith.addf %279, %282 : vector<1x16xf32>
    %284 = vector.extract_strided_slice %267 {offsets = [0, 64], sizes = [1, 16], strides = [1, 1]} : vector<1x256xf32> to vector<1x16xf32>
    %285 = arith.addf %281, %284 : vector<1x16xf32>
    %286 = vector.extract_strided_slice %264 {offsets = [0, 80], sizes = [1, 16], strides = [1, 1]} : vector<1x256xf32> to vector<1x16xf32>
    %287 = arith.addf %283, %286 : vector<1x16xf32>
    %288 = vector.extract_strided_slice %267 {offsets = [0, 80], sizes = [1, 16], strides = [1, 1]} : vector<1x256xf32> to vector<1x16xf32>
    %289 = arith.addf %285, %288 : vector<1x16xf32>
    %290 = vector.extract_strided_slice %264 {offsets = [0, 96], sizes = [1, 16], strides = [1, 1]} : vector<1x256xf32> to vector<1x16xf32>
    %291 = arith.addf %287, %290 : vector<1x16xf32>
    %292 = vector.extract_strided_slice %267 {offsets = [0, 96], sizes = [1, 16], strides = [1, 1]} : vector<1x256xf32> to vector<1x16xf32>
    %293 = arith.addf %289, %292 : vector<1x16xf32>
    %294 = vector.extract_strided_slice %264 {offsets = [0, 112], sizes = [1, 16], strides = [1, 1]} : vector<1x256xf32> to vector<1x16xf32>
    %295 = arith.addf %291, %294 : vector<1x16xf32>
    %296 = vector.extract_strided_slice %267 {offsets = [0, 112], sizes = [1, 16], strides = [1, 1]} : vector<1x256xf32> to vector<1x16xf32>
    %297 = arith.addf %293, %296 : vector<1x16xf32>
    %298 = vector.extract_strided_slice %264 {offsets = [0, 128], sizes = [1, 16], strides = [1, 1]} : vector<1x256xf32> to vector<1x16xf32>
    %299 = arith.addf %295, %298 : vector<1x16xf32>
    %300 = vector.extract_strided_slice %267 {offsets = [0, 128], sizes = [1, 16], strides = [1, 1]} : vector<1x256xf32> to vector<1x16xf32>
    %301 = arith.addf %297, %300 : vector<1x16xf32>
    %302 = vector.extract_strided_slice %264 {offsets = [0, 144], sizes = [1, 16], strides = [1, 1]} : vector<1x256xf32> to vector<1x16xf32>
    %303 = arith.addf %299, %302 : vector<1x16xf32>
    %304 = vector.extract_strided_slice %267 {offsets = [0, 144], sizes = [1, 16], strides = [1, 1]} : vector<1x256xf32> to vector<1x16xf32>
    %305 = arith.addf %301, %304 : vector<1x16xf32>
    %306 = vector.extract_strided_slice %264 {offsets = [0, 160], sizes = [1, 16], strides = [1, 1]} : vector<1x256xf32> to vector<1x16xf32>
    %307 = arith.addf %303, %306 : vector<1x16xf32>
    %308 = vector.extract_strided_slice %267 {offsets = [0, 160], sizes = [1, 16], strides = [1, 1]} : vector<1x256xf32> to vector<1x16xf32>
    %309 = arith.addf %305, %308 : vector<1x16xf32>
    %310 = vector.extract_strided_slice %264 {offsets = [0, 176], sizes = [1, 16], strides = [1, 1]} : vector<1x256xf32> to vector<1x16xf32>
    %311 = arith.addf %307, %310 : vector<1x16xf32>
    %312 = vector.extract_strided_slice %267 {offsets = [0, 176], sizes = [1, 16], strides = [1, 1]} : vector<1x256xf32> to vector<1x16xf32>
    %313 = arith.addf %309, %312 : vector<1x16xf32>
    %314 = vector.extract_strided_slice %264 {offsets = [0, 192], sizes = [1, 16], strides = [1, 1]} : vector<1x256xf32> to vector<1x16xf32>
    %315 = arith.addf %311, %314 : vector<1x16xf32>
    %316 = vector.extract_strided_slice %267 {offsets = [0, 192], sizes = [1, 16], strides = [1, 1]} : vector<1x256xf32> to vector<1x16xf32>
    %317 = arith.addf %313, %316 : vector<1x16xf32>
    %318 = vector.extract_strided_slice %264 {offsets = [0, 208], sizes = [1, 16], strides = [1, 1]} : vector<1x256xf32> to vector<1x16xf32>
    %319 = arith.addf %315, %318 : vector<1x16xf32>
    %320 = vector.extract_strided_slice %267 {offsets = [0, 208], sizes = [1, 16], strides = [1, 1]} : vector<1x256xf32> to vector<1x16xf32>
    %321 = arith.addf %317, %320 : vector<1x16xf32>
    %322 = vector.extract_strided_slice %264 {offsets = [0, 224], sizes = [1, 16], strides = [1, 1]} : vector<1x256xf32> to vector<1x16xf32>
    %323 = arith.addf %319, %322 : vector<1x16xf32>
    %324 = vector.extract_strided_slice %267 {offsets = [0, 224], sizes = [1, 16], strides = [1, 1]} : vector<1x256xf32> to vector<1x16xf32>
    %325 = arith.addf %321, %324 : vector<1x16xf32>
    %326 = vector.extract_strided_slice %264 {offsets = [0, 240], sizes = [1, 16], strides = [1, 1]} : vector<1x256xf32> to vector<1x16xf32>
    %327 = arith.addf %323, %326 : vector<1x16xf32>
    %328 = vector.extract_strided_slice %267 {offsets = [0, 240], sizes = [1, 16], strides = [1, 1]} : vector<1x256xf32> to vector<1x16xf32>
    %329 = arith.addf %325, %328 : vector<1x16xf32>
    %cst_111 = arith.constant 0.001953125 : f32
    %330 = vector.broadcast %cst_111 : f32 to vector<1x16xf32>
    %331 = arith.mulf %327, %330 : vector<1x16xf32>
    %cst_112 = arith.constant 0.001953125 : f32
    %332 = vector.broadcast %cst_112 : f32 to vector<1x16xf32>
    %333 = arith.mulf %329, %332 : vector<1x16xf32>
    %334 = arith.mulf %331, %331 : vector<1x16xf32>
    %335 = arith.subf %333, %334 : vector<1x16xf32>
    %c2_113 = arith.constant 2 : index
    %c0_114 = arith.constant 0 : index
    %336 = vector.load %arg3[%c2_113, %c0_114] : memref<3x16xf32, #tpu.memory_space<vmem>>, vector<1x16xf32>
    %337 = vector.shape_cast %336 : vector<1x16xf32> to vector<16xf32>
    %338 = vector.shape_cast %337 : vector<16xf32> to vector<1x16xf32>
    %cst_115 = arith.constant 9.99999974E-6 : f32
    %339 = vector.broadcast %cst_115 : f32 to vector<1x16xf32>
    %340 = arith.addf %335, %339 : vector<1x16xf32>
    %341 = math.rsqrt %340 : vector<1x16xf32>
    %342 = arith.mulf %338, %341 : vector<1x16xf32>
    %c2_116 = arith.constant 2 : index
    %c0_117 = arith.constant 0 : index
    %343 = vector.load %arg4[%c2_116, %c0_117] : memref<3x16xf32, #tpu.memory_space<vmem>>, vector<1x16xf32>
    %344 = vector.shape_cast %343 : vector<1x16xf32> to vector<16xf32>
    %345 = vector.shape_cast %344 : vector<16xf32> to vector<1x16xf32>
    %346 = arith.mulf %331, %342 : vector<1x16xf32>
    %347 = arith.subf %345, %346 : vector<1x16xf32>
    %348 = tpu.concatenate %342, %342, %342, %342, %342, %342, %342, %342, %342, %342, %342, %342, %342, %342, %342, %342 in 1 : vector<1x16xf32>, vector<1x16xf32>, vector<1x16xf32>, vector<1x16xf32>, vector<1x16xf32>, vector<1x16xf32>, vector<1x16xf32>, vector<1x16xf32>, vector<1x16xf32>, vector<1x16xf32>, vector<1x16xf32>, vector<1x16xf32>, vector<1x16xf32>, vector<1x16xf32>, vector<1x16xf32>, vector<1x16xf32> -> vector<1x256xf32>
    %349 = vector.broadcast %348 : vector<1x256xf32> to vector<32x256xf32>
    %350 = arith.mulf %262, %349 : vector<32x256xf32>
    %351 = tpu.concatenate %347, %347, %347, %347, %347, %347, %347, %347, %347, %347, %347, %347, %347, %347, %347, %347 in 1 : vector<1x16xf32>, vector<1x16xf32>, vector<1x16xf32>, vector<1x16xf32>, vector<1x16xf32>, vector<1x16xf32>, vector<1x16xf32>, vector<1x16xf32>, vector<1x16xf32>, vector<1x16xf32>, vector<1x16xf32>, vector<1x16xf32>, vector<1x16xf32>, vector<1x16xf32>, vector<1x16xf32>, vector<1x16xf32> -> vector<1x256xf32>
    %352 = vector.broadcast %351 : vector<1x256xf32> to vector<32x256xf32>
    %353 = arith.addf %350, %352 : vector<32x256xf32>
    %c0_118 = arith.constant 0 : index
    %c0_119 = arith.constant 0 : index
    %354 = vector.load %arg5[%c0_118, %c0_119] : memref<32x256xf32, #tpu.memory_space<vmem>>, vector<32x256xf32>
    tpu.vector_store %arg5[%c0_118, %c0_119], %353 {strides = array<i32>} : memref<32x256xf32, #tpu.memory_space<vmem>>, vector<32x256xf32>,
    return
  }
}

</mosaic_0001>

<llo_original>
// kernel: tpu_custom_call.1
$region0: #{tpu_custom_call.1}
  #allocation0 [shape = 'u32[]', space=smem, size = 0x4, offset = 0x4, fixed_abs, tag = 'smem constant byte address 0x4 - core index']
  #allocation1 [shape = 'u32[144,128]{1,0:T(1,128)}', space=vmem, size = 0x12000, scoped, tag = 'internal scratch']
  #allocation2 [shape = 'f32[2,18,288]{2,1,0:T(8,128)}', space=vmem, size = 0x12000, scoped, tag = 'scratch operand']
  %s0 = inlined_call_operand.hbm [shape: f32[2,16,256], index: 0, kind: input, shape index: {}]
  %s1 = inlined_call_operand.hbm [shape: f32[3,3,288,256], index: 1, kind: input, shape index: {}]
  %s2 = inlined_call_operand.hbm [shape: f32[3,16], index: 2, kind: input, shape index: {}]
  %s3 = inlined_call_operand.hbm [shape: f32[3,16], index: 3, kind: input, shape index: {}]
  %s4 = inlined_call_operand.hbm [shape: f32[3,16], index: 4, kind: input, shape index: {}]
  %s5 = inlined_call_operand.hbm [shape: f32[32,256], index: 5, kind: output, shape index: {}]
  %s6 = sld [smem:[#allocation0]]
  $region50: #{tpu_custom_call.1} parent=0
    _
  %s8 = ssub.s32 1, %s6
  %s9 = scalar_select 0, %s8, %s6
  $region1: #{tpu_custom_call.1} parent=0
    #allocation3 [shape = 'u8[32768]{0}', space=vmem, size = 0x8000, scoped, tag = 'input window, operand 0, single buffered']
    #allocation4 [shape = 's32[1]{0}', space=sflag, size = 0x4, scoped, tag = 'scoped memory for tpu_custom_call.1']
    #allocation5 [shape = 's32[1]{0}', space=sflag, size = 0x4, scoped, tag = 'scoped memory for tpu_custom_call.1']
    #allocation6 [shape = 'u8[2654208]{0}', space=vmem, size = 0x288000, scoped, tag = 'input window, operand 1, single buffered']
    #allocation7 [shape = 's32[1]{0}', space=sflag, size = 0x4, scoped, tag = 'scoped memory for tpu_custom_call.1']
    #allocation8 [shape = 'u8[2048]{0}', space=vmem, size = 0x800, scoped, tag = 'input window, operand 2, single buffered']
    #allocation9 [shape = 'u8[2048]{0}', space=vmem, size = 0x800, scoped, tag = 'input window, operand 3, single buffered']
    #allocation10 [shape = 's32[1]{0}', space=sflag, size = 0x4, scoped, tag = 'scoped memory for tpu_custom_call.1']
    #allocation11 [shape = 'u8[2048]{0}', space=vmem, size = 0x800, scoped, tag = 'input window, operand 4, single buffered']
    #allocation12 [shape = 'u8[32768]{0}', space=vmem, size = 0x8000, scoped, tag = 'output window, operand 0, single buffered']
    %10 = vsyncpa [#allocation4], 0
    %11 = vsyncpa [#allocation7], 0
    %12 = vsyncpa [#allocation10], 0
    %13 = vsyncpa [#allocation5], 0
    // Predicated region
    $region2: #{tpu_custom_call.1} parent=1 // pred_check
      _
    $region3: #{tpu_custom_call.1} parent=1 // pred_check_branch
      %15 = sbr.rel (0) target = $region5
    $region4: #{tpu_custom_call.1} parent=1 // pred_region
      %s17 = ssub.s32 1024, 1024
      %18 = vsyncadd [#allocation4], %s17
      %s19 = sshll.u32 [#allocation3], 4
      %s20 = int_to_ptr.vmem [resolvable:$true] %s19
      %25 = dma.hbm_to_vmem [thread:$0]  %s0, 1024, %s20, [#allocation4], 256, 256, 16
    $region5: #{tpu_custom_call.1} parent=1 // pred_fallthru
      _
    // Predicated region
    $region6: #{tpu_custom_call.1} parent=1 // pred_check
      _
    $region7: #{tpu_custom_call.1} parent=1 // pred_check_branch
      %27 = sbr.rel (0) target = $region9
    $region8: #{tpu_custom_call.1} parent=1 // pred_region
      %s29 = ssub.s32 82944, 82944
      %30 = vsyncadd [#allocation7], %s29
      %s31 = sshll.u32 [#allocation6], 4
      %s32 = int_to_ptr.vmem [resolvable:$true] %s31
      %37 = dma.hbm_to_vmem [thread:$0]  %s1, 82944, %s32, [#allocation7], 256, 256, 16
    $region9: #{tpu_custom_call.1} parent=1 // pred_fallthru
      _
    // Predicated region
    $region10: #{tpu_custom_call.1} parent=1 // pred_check
      _
    $region11: #{tpu_custom_call.1} parent=1 // pred_check_branch
      %39 = sbr.rel (0) target = $region13
    $region12: #{tpu_custom_call.1} parent=1 // pred_region
      %s41 = ssub.s32 64, 64
      %42 = vsyncadd [#allocation7], %s41
      %s44 = sshll.u32 [#allocation8], 4
      %s45 = int_to_ptr.vmem [resolvable:$true] %s44
      %47 = dma.hbm_to_vmem [thread:$0]  %s2, 64, %s45, [#allocation7]
    $region13: #{tpu_custom_call.1} parent=1 // pred_fallthru
      _
    // Predicated region
    $region14: #{tpu_custom_call.1} parent=1 // pred_check
      _
    $region15: #{tpu_custom_call.1} parent=1 // pred_check_branch
      %49 = sbr.rel (0) target = $region17
    $region16: #{tpu_custom_call.1} parent=1 // pred_region
      %s51 = ssub.s32 64, 64
      %52 = vsyncadd [#allocation10], %s51
      %s54 = sshll.u32 [#allocation9], 4
      %s55 = int_to_ptr.vmem [resolvable:$true] %s54
      %57 = dma.hbm_to_vmem [thread:$0]  %s3, 64, %s55, [#allocation10]
    $region17: #{tpu_custom_call.1} parent=1 // pred_fallthru
      _
    // Predicated region
    $region18: #{tpu_custom_call.1} parent=1 // pred_check
      _
    $region19: #{tpu_custom_call.1} parent=1 // pred_check_branch
      %59 = sbr.rel (0) target = $region21
    $region20: #{tpu_custom_call.1} parent=1 // pred_region
      %s61 = ssub.s32 64, 64
      %62 = vsyncadd [#allocation10], %s61
      %s64 = sshll.u32 [#allocation11], 4
      %s65 = int_to_ptr.vmem [resolvable:$true] %s64
      %67 = dma.hbm_to_vmem [thread:$0]  %s4, 64, %s65, [#allocation10]
    $region21: #{tpu_custom_call.1} parent=1 // pred_fallthru
      _
    // Predicated region
    $region22: #{tpu_custom_call.1} parent=1 // pred_check
      _
    $region23: #{tpu_custom_call.1} parent=1 // pred_check_branch
      %69 = sbr.rel (0) target = $region25
    $region24: #{tpu_custom_call.1} parent=1 // pred_region
      %70 = dma.done [#allocation4], 1024
    $region25: #{tpu_custom_call.1} parent=1 // pred_fallthru
      _
    // Predicated region
    $region26: #{tpu_custom_call.1} parent=1 // pred_check
      _
    $region27: #{tpu_custom_call.1} parent=1 // pred_check_branch
      %72 = sbr.rel (0) target = $region29
    $region28: #{tpu_custom_call.1} parent=1 // pred_region
      %73 = dma.done [#allocation7], 82944
    $region29: #{tpu_custom_call.1} parent=1 // pred_fallthru
      _
    // Predicated region
    $region30: #{tpu_custom_call.1} parent=1 // pred_check
      _
    $region31: #{tpu_custom_call.1} parent=1 // pred_check_branch
      %75 = sbr.rel (0) target = $region33
    $region32: #{tpu_custom_call.1} parent=1 // pred_region
      %76 = dma.done [#allocation7], 64
    $region33: #{tpu_custom_call.1} parent=1 // pred_fallthru
      _
    // Predicated region
    $region34: #{tpu_custom_call.1} parent=1 // pred_check
      _
    $region35: #{tpu_custom_call.1} parent=1 // pred_check_branch
      %78 = sbr.rel (0) target = $region37
    $region36: #{tpu_custom_call.1} parent=1 // pred_region
      %79 = dma.done [#allocation10], 64
    $region37: #{tpu_custom_call.1} parent=1 // pred_fallthru
      _
    // Predicated region
    $region38: #{tpu_custom_call.1} parent=1 // pred_check
      _
    $region39: #{tpu_custom_call.1} parent=1 // pred_check_branch
      %81 = sbr.rel (0) target = $region41
    $region40: #{tpu_custom_call.1} parent=1 // pred_region
      %82 = dma.done [#allocation10], 64
    $region41: #{tpu_custom_call.1} parent=1 // pred_fallthru
      _
    %83 = vst [vmem:[#allocation2] sm:$0xff] 0.0
    %84 = vst [vmem:[#allocation2 + $0x8] sm:$0xff] 0.0
    %vm85 = vcmask 261120
    %86 = vst.msk [vmem:[#allocation2 + $0x10] sm:$0xff] %vm85, 0.0
    %87 = vst [vmem:[#allocation2 + $0x18] sm:$0xff] 0.0
    %88 = vst [vmem:[#allocation2 + $0x20] sm:$0xff] 0.0
    %89 = vst.msk [vmem:[#allocation2 + $0x28] sm:$0xff] %vm85, 0.0
    %90 = vst [vmem:[#allocation2 + $0x30] sm:$0x3] 0.0
    %91 = vst [vmem:[#allocation2 + $0x38] sm:$0x3] 0.0
    %vm92 = vcmask 254976
    %93 = vst.msk [vmem:[#allocation2 + $0x40] sm:$0x3] %vm92, 0.0
    %94 = vst [vmem:[#allocation2 + $0x48] sm:$0xff] 0.0
    %95 = vst [vmem:[#allocation2 + $0x50] sm:$0xff] 0.0
    %96 = vst.msk [vmem:[#allocation2 + $0x58] sm:$0xff] %vm85, 0.0
    %97 = vst [vmem:[#allocation2 + $0x60] sm:$0xff] 0.0
    %98 = vst [vmem:[#allocation2 + $0x68] sm:$0xff] 0.0
    %99 = vst.msk [vmem:[#allocation2 + $0x70] sm:$0xff] %vm85, 0.0
    %100 = vst [vmem:[#allocation2 + $0x78] sm:$0x3] 0.0
    %101 = vst [vmem:[#allocation2 + $0x80] sm:$0x3] 0.0
    %102 = vst.msk [vmem:[#allocation2 + $0x88] sm:$0x3] %vm92, 0.0
    %v103 = vld [vmem:[#allocation3] sm:$0xff]
    %v104 = vld [vmem:[#allocation3 + $0x8] sm:$0xff]
    %v105 = vld [vmem:[#allocation3 + $0x10] sm:$0xff]
    %v106 = vld [vmem:[#allocation3 + $0x18] sm:$0xff]
    %v107 = vld [vmem:[#allocation3 + $0x20] sm:$0xff]
    %v108 = vld [vmem:[#allocation3 + $0x28] sm:$0xff]
    %v109 = vld [vmem:[#allocation3 + $0x30] sm:$0xff]
    %v110 = vld [vmem:[#allocation3 + $0x38] sm:$0xff]
    %vm119 = vcmask 1040384
    %v120 = vrot.slane %v103, 7
    %v121 = vrot.slane %v104, 7
    %v122 = vrot.slane %v105, 7
    %v123 = vsel %vm119, %v120, %v122
    %v124 = vrot.slane %v106, 7
    %v125 = vsel %vm119, %v121, %v124
    %v126 = vrot.slane %v107, 7
    %v127 = vrot.slane %v108, 7
    %v128 = vrot.slane %v109, 7
    %v129 = vsel %vm119, %v126, %v128
    %v130 = vrot.slane %v110, 7
    %v131 = vsel %vm119, %v127, %v130
    %132 = vrot.lane.b32.xlu0 %v120, 16
    %v133 = vpop.permute.xlu0 %132
    %134 = vrot.lane.b32.xlu0 %v121, 16
    %v135 = vpop.permute.xlu0 %134
    %136 = vrot.lane.b32.xlu0 %v123, 16
    %v137 = vpop.permute.xlu0 %136
    %138 = vrot.lane.b32.xlu0 %v125, 16
    %v139 = vpop.permute.xlu0 %138
    %140 = vrot.lane.b32.xlu0 %v122, 16
    %v141 = vpop.permute.xlu0 %140
    %142 = vrot.lane.b32.xlu0 %v124, 16
    %v143 = vpop.permute.xlu0 %142
    %144 = vrot.lane.b32.xlu0 %v126, 16
    %v145 = vpop.permute.xlu0 %144
    %146 = vrot.lane.b32.xlu0 %v127, 16
    %v147 = vpop.permute.xlu0 %146
    %148 = vrot.lane.b32.xlu0 %v129, 16
    %v149 = vpop.permute.xlu0 %148
    %150 = vrot.lane.b32.xlu0 %v131, 16
    %v151 = vpop.permute.xlu0 %150
    %152 = vrot.lane.b32.xlu0 %v128, 16
    %v153 = vpop.permute.xlu0 %152
    %154 = vrot.lane.b32.xlu0 %v130, 16
    %v155 = vpop.permute.xlu0 %154
    %vm156 = vcmask 130048
    %v157 = vsel %vm156, %v133, %v135
    %v158 = vsel %vm156, %v137, %v139
    %v159 = vsel %vm156, %v141, %v143
    %v160 = vsel %vm156, %v145, %v147
    %v161 = vsel %vm156, %v149, %v151
    %v162 = vsel %vm156, %v153, %v155
    %vm181 = vcmask 1047681
    %182 = vst.msk [vmem:[#allocation2] sm:$0xfe] %vm181, %v133
    %183 = vst [vmem:[#allocation2 + $0x8] sm:$0xfe] %v157
    %vm184 = vcmask 130049
    %185 = vst.msk [vmem:[#allocation2 + $0x10] sm:$0xfe] %vm184, %v135
    %vm186 = vcmask 1047680
    %187 = vst.msk [vmem:[#allocation2 + $0x18] sm:$0xff] %vm186, %v137
    %188 = vst [vmem:[#allocation2 + $0x20] sm:$0xff] %v158
    %189 = vst.msk [vmem:[#allocation2 + $0x28] sm:$0xff] %vm156, %v139
    %vm190 = vcmask 1040512
    %191 = vst.msk [vmem:[#allocation2 + $0x30] sm:$0x1] %vm190, %v141
    %192 = vst [vmem:[#allocation2 + $0x38] sm:$0x1] %v159
    %vm193 = vcmask 122880
    %194 = vst.msk [vmem:[#allocation2 + $0x40] sm:$0x1] %vm193, %v143
    %195 = vst.msk [vmem:[#allocation2 + $0x48] sm:$0xfe] %vm181, %v145
    %196 = vst [vmem:[#allocation2 + $0x50] sm:$0xfe] %v160
    %197 = vst.msk [vmem:[#allocation2 + $0x58] sm:$0xfe] %vm184, %v147
    %198 = vst.msk [vmem:[#allocation2 + $0x60] sm:$0xff] %vm186, %v149
    %199 = vst [vmem:[#allocation2 + $0x68] sm:$0xff] %v161
    %200 = vst.msk [vmem:[#allocation2 + $0x70] sm:$0xff] %vm156, %v151
    %201 = vst.msk [vmem:[#allocation2 + $0x78] sm:$0x1] %vm190, %v153
    %202 = vst [vmem:[#allocation2 + $0x80] sm:$0x1] %v162
    %203 = vst.msk [vmem:[#allocation2 + $0x88] sm:$0x1] %vm193, %v155
    %v204 = vld [vmem:[#allocation2] sm:$0xff]
    %v205 = vld [vmem:[#allocation2 + $0x8] sm:$0xff]
    %v206 = vld [vmem:[#allocation2 + $0x10] sm:$0xff]
    %v207 = vld [vmem:[#allocation2 + $0x18] sm:$0xff]
    %v208 = vld [vmem:[#allocation2 + $0x20] sm:$0xff]
    %v209 = vld [vmem:[#allocation2 + $0x28] sm:$0xff]
    %v210 = vld [vmem:[#allocation2 + $0x48] sm:$0xff]
    %v211 = vld [vmem:[#allocation2 + $0x50] sm:$0xff]
    %v212 = vld [vmem:[#allocation2 + $0x58] sm:$0xff]
    %v213 = vld [vmem:[#allocation2 + $0x60] sm:$0xff]
    %v214 = vld [vmem:[#allocation2 + $0x68] sm:$0xff]
    %v215 = vld [vmem:[#allocation2 + $0x70] sm:$0xff]
    %v216 = vld [vmem:[#allocation6] sm:$0xff]
    %v217 = vld [vmem:[#allocation6 + $0x8] sm:$0xff]
    %v218 = vld [vmem:[#allocation6 + $0x10] sm:$0xff]
    %v219 = vld [vmem:[#allocation6 + $0x18] sm:$0xff]
    %v220 = vld [vmem:[#allocation6 + $0x20] sm:$0xff]
    %v221 = vld [vmem:[#allocation6 + $0x28] sm:$0xff]
    %v222 = vld [vmem:[#allocation6 + $0x30] sm:$0xff]
    %v223 = vld [vmem:[#allocation6 + $0x38] sm:$0xff]
    %v224 = vld [vmem:[#allocation6 + $0x40] sm:$0xff]
    %v225 = vld [vmem:[#allocation6 + $0x48] sm:$0xff]
    %v226 = vld [vmem:[#allocation6 + $0x50] sm:$0xff]
    %v227 = vld [vmem:[#allocation6 + $0x58] sm:$0xff]
    %v228 = vld [vmem:[#allocation6 + $0x60] sm:$0xff]
    %v229 = vld [vmem:[#allocation6 + $0x68] sm:$0xff]
    %v230 = vld [vmem:[#allocation6 + $0x70] sm:$0xff]
    %v231 = vld [vmem:[#allocation6 + $0x78] sm:$0xff]
    %v232 = vld [vmem:[#allocation6 + $0x80] sm:$0xff]
    %v233 = vld [vmem:[#allocation6 + $0x88] sm:$0xff]
    %v234 = vld [vmem:[#allocation6 + $0x90] sm:$0xff]
    %v235 = vld [vmem:[#allocation6 + $0x98] sm:$0xff]
    %v236 = vld [vmem:[#allocation6 + $0xa0] sm:$0xff]
    %v237 = vld [vmem:[#allocation6 + $0xa8] sm:$0xff]
    %v238 = vld [vmem:[#allocation6 + $0xb0] sm:$0xff]
    %v239 = vld [vmem:[#allocation6 + $0xb8] sm:$0xff]
    %v240 = vld [vmem:[#allocation6 + $0xc0] sm:$0xff]
    %v241 = vld [vmem:[#allocation6 + $0xc8] sm:$0xff]
    %v242 = vld [vmem:[#allocation6 + $0xd0] sm:$0xff]
    %v243 = vld [vmem:[#allocation6 + $0xd8] sm:$0xff]
    %v244 = vld [vmem:[#allocation6 + $0xe0] sm:$0xff]
    %v245 = vld [vmem:[#allocation6 + $0xe8] sm:$0xff]
    %v246 = vld [vmem:[#allocation6 + $0xf0] sm:$0xff]
    %v247 = vld [vmem:[#allocation6 + $0xf8] sm:$0xff]
    %v248 = vld [vmem:[#allocation6 + $0x100] sm:$0xff]
    %v249 = vld [vmem:[#allocation6 + $0x108] sm:$0xff]
    %v250 = vld [vmem:[#allocation6 + $0x110] sm:$0xff]
    %v251 = vld [vmem:[#allocation6 + $0x118] sm:$0xff]
    %v252 = vld [vmem:[#allocation6 + $0x120] sm:$0xff]
    %v253 = vld [vmem:[#allocation6 + $0x128] sm:$0xff]
    %v254 = vld [vmem:[#allocation6 + $0x130] sm:$0xff]
    %v255 = vld [vmem:[#allocation6 + $0x138] sm:$0xff]
    %v256 = vld [vmem:[#allocation6 + $0x140] sm:$0xff]
    %v257 = vld [vmem:[#allocation6 + $0x148] sm:$0xff]
    %v258 = vld [vmem:[#allocation6 + $0x150] sm:$0xff]
    %v259 = vld [vmem:[#allocation6 + $0x158] sm:$0xff]
    %v260 = vld [vmem:[#allocation6 + $0x160] sm:$0xff]
    %v261 = vld [vmem:[#allocation6 + $0x168] sm:$0xff]
    %v262 = vld [vmem:[#allocation6 + $0x170] sm:$0xff]
    %v263 = vld [vmem:[#allocation6 + $0x178] sm:$0xff]
    %v264 = vld [vmem:[#allocation6 + $0x180] sm:$0xff]
    %v265 = vld [vmem:[#allocation6 + $0x188] sm:$0xff]
    %v266 = vld [vmem:[#allocation6 + $0x190] sm:$0xff]
    %v267 = vld [vmem:[#allocation6 + $0x198] sm:$0xff]
    %v268 = vld [vmem:[#allocation6 + $0x1a0] sm:$0xff]
    %v269 = vld [vmem:[#allocation6 + $0x1a8] sm:$0xff]
    %v270 = vld [vmem:[#allocation6 + $0x1b0] sm:$0xff]
    %v271 = vld [vmem:[#allocation6 + $0x1b8] sm:$0xff]
    %v272 = vld [vmem:[#allocation6 + $0x1c0] sm:$0xff]
    %v273 = vld [vmem:[#allocation6 + $0x1c8] sm:$0xff]
    %v274 = vld [vmem:[#allocation6 + $0x1d0] sm:$0xff]
    %v275 = vld [vmem:[#allocation6 + $0x1d8] sm:$0xff]
    %v276 = vld [vmem:[#allocation6 + $0x1e0] sm:$0xff]
    %v277 = vld [vmem:[#allocation6 + $0x1e8] sm:$0xff]
    %v278 = vld [vmem:[#allocation6 + $0x1f0] sm:$0xff]
    %v279 = vld [vmem:[#allocation6 + $0x1f8] sm:$0xff]
    %v280 = vld [vmem:[#allocation6 + $0x200] sm:$0xff]
    %v281 = vld [vmem:[#allocation6 + $0x208] sm:$0xff]
    %v282 = vld [vmem:[#allocation6 + $0x210] sm:$0xff]
    %v283 = vld [vmem:[#allocation6 + $0x218] sm:$0xff]
    %v284 = vld [vmem:[#allocation6 + $0x220] sm:$0xff]
    %v285 = vld [vmem:[#allocation6 + $0x228] sm:$0xff]
    %v286 = vld [vmem:[#allocation6 + $0x230] sm:$0xff]
    %v287 = vld [vmem:[#allocation6 + $0x238] sm:$0xff]
    %v288 = vld [vmem:[#allocation2] sm:$0xfe]
    %v289 = vld [vmem:[#allocation2 + $0x8] sm:$0xfe]
    %v290 = vld [vmem:[#allocation2 + $0x10] sm:$0xfe]
    %v291 = vld [vmem:[#allocation2 + $0x30] sm:$0x1]
    %v292 = vld [vmem:[#allocation2 + $0x38] sm:$0x1]
    %v293 = vld [vmem:[#allocation2 + $0x40] sm:$0x1]
    %v294 = vld [vmem:[#allocation2 + $0x48] sm:$0xfe]
    %v295 = vld [vmem:[#allocation2 + $0x50] sm:$0xfe]
    %v296 = vld [vmem:[#allocation2 + $0x58] sm:$0xfe]
    %v297 = vld [vmem:[#allocation2 + $0x78] sm:$0x1]
    %v298 = vld [vmem:[#allocation2 + $0x80] sm:$0x1]
    %v299 = vld [vmem:[#allocation2 + $0x88] sm:$0x1]
    %vm318 = vcmask 1046528
    %v319 = vrot.slane %v288, 1
    %v320 = vrot.slane %v207, 1
    %v321 = vsel %vm318, %v319, %v320
    %v322 = vrot.slane %v289, 1
    %v323 = vrot.slane %v208, 1
    %v324 = vsel %vm318, %v322, %v323
    %v325 = vrot.slane %v290, 1
    %v326 = vrot.slane %v209, 1
    %v327 = vsel %vm318, %v325, %v326
    %v328 = vrot.slane %v291, 1
    %v329 = vsel %vm318, %v320, %v328
    %v330 = vrot.slane %v292, 1
    %v331 = vsel %vm318, %v323, %v330
    %v332 = vrot.slane %v293, 1
    %v333 = vsel %vm318, %v326, %v332
    %v334 = vrot.slane %v294, 1
    %v335 = vrot.slane %v213, 1
    %v336 = vsel %vm318, %v334, %v335
    %v337 = vrot.slane %v295, 1
    %v338 = vrot.slane %v214, 1
    %v339 = vsel %vm318, %v337, %v338
    %v340 = vrot.slane %v296, 1
    %v341 = vrot.slane %v215, 1
    %v342 = vsel %vm318, %v340, %v341
    %v343 = vrot.slane %v297, 1
    %v344 = vsel %vm318, %v335, %v343
    %v345 = vrot.slane %v298, 1
    %v346 = vsel %vm318, %v338, %v345
    %v347 = vrot.slane %v299, 1
    %v348 = vsel %vm318, %v341, %v347
    %s357 = scalar_lea.vmem [#allocation6], 576
    %v358 = vld [vmem:[%s357] sm:$0xff]
    %v359 = vld [vmem:[%s357 + $0x8] sm:$0xff]
    %v360 = vld [vmem:[%s357 + $0x10] sm:$0xff]
    %v361 = vld [vmem:[%s357 + $0x18] sm:$0xff]
    %v362 = vld [vmem:[%s357 + $0x20] sm:$0xff]
    %v363 = vld [vmem:[%s357 + $0x28] sm:$0xff]
    %v364 = vld [vmem:[%s357 + $0x30] sm:$0xff]
    %v365 = vld [vmem:[%s357 + $0x38] sm:$0xff]
    %v366 = vld [vmem:[%s357 + $0x40] sm:$0xff]
    %v367 = vld [vmem:[%s357 + $0x48] sm:$0xff]
    %v368 = vld [vmem:[%s357 + $0x50] sm:$0xff]
    %v369 = vld [vmem:[%s357 + $0x58] sm:$0xff]
    %v370 = vld [vmem:[%s357 + $0x60] sm:$0xff]
    %v371 = vld [vmem:[%s357 + $0x68] sm:$0xff]
    %v372 = vld [vmem:[%s357 + $0x70] sm:$0xff]
    %v373 = vld [vmem:[%s357 + $0x78] sm:$0xff]
    %v374 = vld [vmem:[%s357 + $0x80] sm:$0xff]
    %v375 = vld [vmem:[%s357 + $0x88] sm:$0xff]
    %v376 = vld [vmem:[%s357 + $0x90] sm:$0xff]
    %v377 = vld [vmem:[%s357 + $0x98] sm:$0xff]
    %v378 = vld [vmem:[%s357 + $0xa0] sm:$0xff]
    %v379 = vld [vmem:[%s357 + $0xa8] sm:$0xff]
    %v380 = vld [vmem:[%s357 + $0xb0] sm:$0xff]
    %v381 = vld [vmem:[%s357 + $0xb8] sm:$0xff]
    %v382 = vld [vmem:[%s357 + $0xc0] sm:$0xff]
    %v383 = vld [vmem:[%s357 + $0xc8] sm:$0xff]
    %v384 = vld [vmem:[%s357 + $0xd0] sm:$0xff]
    %v385 = vld [vmem:[%s357 + $0xd8] sm:$0xff]
    %v386 = vld [vmem:[%s357 + $0xe0] sm:$0xff]
    %v387 = vld [vmem:[%s357 + $0xe8] sm:$0xff]
    %v388 = vld [vmem:[%s357 + $0xf0] sm:$0xff]
    %v389 = vld [vmem:[%s357 + $0xf8] sm:$0xff]
    %v390 = vld [vmem:[%s357 + $0x100] sm:$0xff]
    %v391 = vld [vmem:[%s357 + $0x108] sm:$0xff]
    %v392 = vld [vmem:[%s357 + $0x110] sm:$0xff]
    %v393 = vld [vmem:[%s357 + $0x118] sm:$0xff]
    %v394 = vld [vmem:[%s357 + $0x120] sm:$0xff]
    %v395 = vld [vmem:[%s357 + $0x128] sm:$0xff]
    %v396 = vld [vmem:[%s357 + $0x130] sm:$0xff]
    %v397 = vld [vmem:[%s357 + $0x138] sm:$0xff]
    %v398 = vld [vmem:[%s357 + $0x140] sm:$0xff]
    %v399 = vld [vmem:[%s357 + $0x148] sm:$0xff]
    %v400 = vld [vmem:[%s357 + $0x150] sm:$0xff]
    %v401 = vld [vmem:[%s357 + $0x158] sm:$0xff]
    %v402 = vld [vmem:[%s357 + $0x160] sm:$0xff]
    %v403 = vld [vmem:[%s357 + $0x168] sm:$0xff]
    %v404 = vld [vmem:[%s357 + $0x170] sm:$0xff]
    %v405 = vld [vmem:[%s357 + $0x178] sm:$0xff]
    %v406 = vld [vmem:[%s357 + $0x180] sm:$0xff]
    %v407 = vld [vmem:[%s357 + $0x188] sm:$0xff]
    %v408 = vld [vmem:[%s357 + $0x190] sm:$0xff]
    %v409 = vld [vmem:[%s357 + $0x198] sm:$0xff]
    %v410 = vld [vmem:[%s357 + $0x1a0] sm:$0xff]
    %v411 = vld [vmem:[%s357 + $0x1a8] sm:$0xff]
    %v412 = vld [vmem:[%s357 + $0x1b0] sm:$0xff]
    %v413 = vld [vmem:[%s357 + $0x1b8] sm:$0xff]
    %v414 = vld [vmem:[%s357 + $0x1c0] sm:$0xff]
    %v415 = vld [vmem:[%s357 + $0x1c8] sm:$0xff]
    %v416 = vld [vmem:[%s357 + $0x1d0] sm:$0xff]
    %v417 = vld [vmem:[%s357 + $0x1d8] sm:$0xff]
    %v418 = vld [vmem:[%s357 + $0x1e0] sm:$0xff]
    %v419 = vld [vmem:[%s357 + $0x1e8] sm:$0xff]
    %v420 = vld [vmem:[%s357 + $0x1f0] sm:$0xff]
    %v421 = vld [vmem:[%s357 + $0x1f8] sm:$0xff]
    %v422 = vld [vmem:[%s357 + $0x200] sm:$0xff]
    %v423 = vld [vmem:[%s357 + $0x208] sm:$0xff]
    %v424 = vld [vmem:[%s357 + $0x210] sm:$0xff]
    %v425 = vld [vmem:[%s357 + $0x218] sm:$0xff]
    %v426 = vld [vmem:[%s357 + $0x220] sm:$0xff]
    %v427 = vld [vmem:[%s357 + $0x228] sm:$0xff]
    %v428 = vld [vmem:[%s357 + $0x230] sm:$0xff]
    %v429 = vld [vmem:[%s357 + $0x238] sm:$0xff]
    %v430 = vsel %vm85, %v327, 0
    %v432 = vsel %vm85, %v333, 0
    %v434 = vsel %vm85, %v342, 0
    %v436 = vsel %vm85, %v348, 0
    %438 = vmatprep.subr.mxu0 %v359
    %439 = vmatpush1.msra.mxu0 %v358
    %440 = vmatprep.subr.mxu0 %v361
    %441 = vmatpush1.msra.mxu0 %v360
    %442 = vmatprep.subr.mxu0 %v363
    %443 = vmatpush1.msra.mxu0 %v362
    %444 = vmatprep.subr.mxu0 %v365
    %445 = vmatpush1.msra.mxu0 %v364
    %446 = vmatprep.subr.mxu0 %v367
    %447 = vmatpush1.msra.mxu0 %v366
    %448 = vmatprep.subr.mxu0 %v369
    %449 = vmatpush1.msra.mxu0 %v368
    %450 = vmatprep.subr.mxu0 %v371
    %451 = vmatpush1.msra.mxu0 %v370
    %452 = vmatprep.subr.mxu0 %v373
    %453 = vmatpush1.msra.mxu0 %v372
    %454 = vmatprep.subr.mxu0 %v375
    %455 = vmatpush1.msra.mxu0 %v374
    %456 = vmatprep.subr.mxu0 %v377
    %457 = vmatpush1.msra.mxu0 %v376
    %458 = vmatprep.subr.mxu0 %v379
    %459 = vmatpush1.msra.mxu0 %v378
    %460 = vmatprep.subr.mxu0 %v381
    %461 = vmatpush1.msra.mxu0 %v380
    %462 = vmatprep.subr.mxu0 %v383
    %463 = vmatpush1.msra.mxu0 %v382
    %464 = vmatprep.subr.mxu0 %v385
    %465 = vmatpush1.msra.mxu0 %v384
    %466 = vmatprep.subr.mxu0 %v387
    %467 = vmatpush1.msra.mxu0 %v386
    %468 = vmatprep.subr.mxu0 %v389
    %469 = vmatpush1.msra.mxu0 %v388
    %470 = vmatprep.subr.mxu0 %v391
    %471 = vmatpush1.msra.mxu0 %v390
    %472 = vmatprep.subr.mxu0 %v393
    %473 = vmatpush1.msra.mxu0 %v392
    %474 = vmatprep.subr.mxu0 %v395
    %475 = vmatpush1.msra.mxu0 %v394
    %476 = vmatprep.subr.mxu0 %v397
    %477 = vmatpush1.msra.mxu0 %v396
    %478 = vmatprep.subr.mxu0 %v399
    %479 = vmatpush1.msra.mxu0 %v398
    %480 = vmatprep.subr.mxu0 %v401
    %481 = vmatpush1.msra.mxu0 %v400
    %482 = vmatprep.subr.mxu0 %v403
    %483 = vmatpush1.msra.mxu0 %v402
    %484 = vmatprep.subr.mxu0 %v405
    %485 = vmatpush1.msra.mxu0 %v404
    %486 = vmatprep.subr.mxu0 %v407
    %487 = vmatpush1.msra.mxu0 %v406
    %488 = vmatprep.subr.mxu0 %v409
    %489 = vmatpush1.msra.mxu0 %v408
    %490 = vmatprep.subr.mxu0 %v411
    %491 = vmatpush1.msra.mxu0 %v410
    %492 = vmatprep.subr.mxu0 %v413
    %493 = vmatpush1.msra.mxu0 %v412
    %494 = vmatprep.subr.mxu0 %v415
    %495 = vmatpush1.msra.mxu0 %v414
    %496 = vmatprep.subr.mxu0 %v417
    %497 = vmatpush1.msra.mxu0 %v416
    %498 = vmatprep.subr.mxu0 %v419
    %499 = vmatpush1.msra.mxu0 %v418
    %500 = vmatprep.subr.mxu0 %v421
    %501 = vmatpush1.msra.mxu0 %v420
    %502 = vmatprep.mubr.f32.mxu0 %v324
    %503 = vmatmul.mubr.f32.gmra.mrb[0].mxu0 %v321
    %v504 = vpop.f32.mrb[0].mxu0
    %v505 = vadd.f32 0.0, %v504
    %v506 = vpop.f32.mrb[0].mxu0
    %v507 = vadd.f32 0.0, %v506
    %508 = vmatprep.mubr.f32.mxu0 %v331
    %509 = vmatmul.mubr.f32.gmra.mrb[0].mxu0 %v329
    %v510 = vpop.f32.mrb[0].mxu0
    %v511 = vadd.f32 0.0, %v510
    %v512 = vpop.f32.mrb[0].mxu0
    %v513 = vadd.f32 0.0, %v512
    %514 = vmatprep.mubr.f32.mxu0 %v339
    %515 = vmatmul.mubr.f32.gmra.mrb[0].mxu0 %v336
    %v516 = vpop.f32.mrb[0].mxu0
    %v517 = vadd.f32 0.0, %v516
    %v518 = vpop.f32.mrb[0].mxu0
    %v519 = vadd.f32 0.0, %v518
    %520 = vmatprep.mubr.f32.mxu0 %v346
    %521 = vmatmul.mubr.f32.gmra.mrb[0].mxu0 %v344
    %v522 = vpop.f32.mrb[0].mxu0
    %v523 = vadd.f32 0.0, %v522
    %v524 = vpop.f32.mrb[0].mxu0
    %v525 = vadd.f32 0.0, %v524
    %526 = vdwg.mxu0
    %527 = vmatprep.subr.mxu0 %v423
    %528 = vmatpush1.msra.mxu0 %v422
    %529 = vmatprep.subr.mxu0 %v425
    %530 = vmatpush1.msra.mxu0 %v424
    %531 = vmatprep.subr.mxu0 %v427
    %532 = vmatpush1.msra.mxu0 %v426
    %533 = vmatprep.subr.mxu0 %v429
    %534 = vmatpush1.msra.mxu0 %v428
    %535 = vmatprep.subr.mxu0 0.0
    %536 = vmatpush1.msra.mxu0 0.0
    %537 = vmatprep.subr.mxu0 0.0
    %538 = vmatpush1.msra.mxu0 0.0
    %539 = vmatprep.subr.mxu0 0.0
    %540 = vmatpush1.msra.mxu0 0.0
    %541 = vmatprep.subr.mxu0 0.0
    %542 = vmatpush1.msra.mxu0 0.0
    %543 = vmatprep.subr.mxu0 0.0
    %544 = vmatpush1.msra.mxu0 0.0
    %545 = vmatprep.subr.mxu0 0.0
    %546 = vmatpush1.msra.mxu0 0.0
    %547 = vmatprep.subr.mxu0 0.0
    %548 = vmatpush1.msra.mxu0 0.0
    %549 = vmatprep.subr.mxu0 0.0
    %550 = vmatpush1.msra.mxu0 0.0
    %551 = vmatprep.subr.mxu0 0.0
    %552 = vmatpush1.msra.mxu0 0.0
    %553 = vmatprep.subr.mxu0 0.0
    %554 = vmatpush1.msra.mxu0 0.0
    %555 = vmatprep.subr.mxu0 0.0
    %556 = vmatpush1.msra.mxu0 0.0
    %557 = vmatprep.subr.mxu0 0.0
    %558 = vmatpush1.msra.mxu0 0.0
    %559 = vmatprep.subr.mxu0 0.0
    %560 = vmatpush1.msra.mxu0 0.0
    %561 = vmatprep.subr.mxu0 0.0
    %562 = vmatpush1.msra.mxu0 0.0
    %563 = vmatprep.subr.mxu0 0.0
    %564 = vmatpush1.msra.mxu0 0.0
    %565 = vmatprep.subr.mxu0 0.0
    %566 = vmatpush1.msra.mxu0 0.0
    %567 = vmatprep.subr.mxu0 0.0
    %568 = vmatpush1.msra.mxu0 0.0
    %569 = vmatprep.subr.mxu0 0.0
    %570 = vmatpush1.msra.mxu0 0.0
    %571 = vmatprep.subr.mxu0 0.0
    %572 = vmatpush1.msra.mxu0 0.0
    %573 = vmatprep.subr.mxu0 0.0
    %574 = vmatpush1.msra.mxu0 0.0
    %575 = vmatprep.subr.mxu0 0.0
    %576 = vmatpush1.msra.mxu0 0.0
    %577 = vmatprep.subr.mxu0 0.0
    %578 = vmatpush1.msra.mxu0 0.0
    %579 = vmatprep.subr.mxu0 0.0
    %580 = vmatpush1.msra.mxu0 0.0
    %581 = vmatprep.subr.mxu0 0.0
    %582 = vmatpush1.msra.mxu0 0.0
    %583 = vmatprep.subr.mxu0 0.0
    %584 = vmatpush1.msra.mxu0 0.0
    %585 = vmatprep.subr.mxu0 0.0
    %586 = vmatpush1.msra.mxu0 0.0
    %587 = vmatprep.subr.mxu0 0.0
    %588 = vmatpush1.msra.mxu0 0.0
    %589 = vmatprep.subr.mxu0 0.0
    %590 = vmatpush1.msra.mxu0 0.0
    %591 = vmatprep.mubr.f32.mxu0 0.0
    %592 = vmatmul.mubr.f32.gmra.mrb[0].mxu0 %v430
    %v593 = vpop.f32.mrb[0].mxu0
    %v594 = vadd.f32 %v505, %v593
    %v595 = vpop.f32.mrb[0].mxu0
    %v596 = vadd.f32 %v507, %v595
    %597 = vmatprep.mubr.f32.mxu0 0.0
    %598 = vmatmul.mubr.f32.gmra.mrb[0].mxu0 %v432
    %v599 = vpop.f32.mrb[0].mxu0
    %v600 = vadd.f32 %v511, %v599
    %v601 = vpop.f32.mrb[0].mxu0
    %v602 = vadd.f32 %v513, %v601
    %603 = vmatprep.mubr.f32.mxu0 0.0
    %604 = vmatmul.mubr.f32.gmra.mrb[0].mxu0 %v434
    %v605 = vpop.f32.mrb[0].mxu0
    %v606 = vadd.f32 %v517, %v605
    %v607 = vpop.f32.mrb[0].mxu0
    %v608 = vadd.f32 %v519, %v607
    %609 = vmatprep.mubr.f32.mxu0 0.0
    %610 = vmatmul.mubr.f32.gmra.mrb[0].mxu0 %v436
    %v611 = vpop.f32.mrb[0].mxu0
    %v612 = vadd.f32 %v523, %v611
    %v613 = vpop.f32.mrb[0].mxu0
    %v614 = vadd.f32 %v525, %v613
    %615 = vdwg.mxu0
    %v617 = vsel %vm85, %v206, 0
    %v619 = vsel %vm85, %v209, 0
    %v622 = vsel %vm85, %v212, 0
    %v624 = vsel %vm85, %v215, 0
    %626 = vmatprep.subr.mxu0 %v217
    %627 = vmatpush1.msra.mxu0 %v216
    %628 = vmatprep.subr.mxu0 %v219
    %629 = vmatpush1.msra.mxu0 %v218
    %630 = vmatprep.subr.mxu0 %v221
    %631 = vmatpush1.msra.mxu0 %v220
    %632 = vmatprep.subr.mxu0 %v223
    %633 = vmatpush1.msra.mxu0 %v222
    %634 = vmatprep.subr.mxu0 %v225
    %635 = vmatpush1.msra.mxu0 %v224
    %636 = vmatprep.subr.mxu0 %v227
    %637 = vmatpush1.msra.mxu0 %v226
    %638 = vmatprep.subr.mxu0 %v229
    %639 = vmatpush1.msra.mxu0 %v228
    %640 = vmatprep.subr.mxu0 %v231
    %641 = vmatpush1.msra.mxu0 %v230
    %642 = vmatprep.subr.mxu0 %v233
    %643 = vmatpush1.msra.mxu0 %v232
    %644 = vmatprep.subr.mxu0 %v235
    %645 = vmatpush1.msra.mxu0 %v234
    %646 = vmatprep.subr.mxu0 %v237
    %647 = vmatpush1.msra.mxu0 %v236
    %648 = vmatprep.subr.mxu0 %v239
    %649 = vmatpush1.msra.mxu0 %v238
    %650 = vmatprep.subr.mxu0 %v241
    %651 = vmatpush1.msra.mxu0 %v240
    %652 = vmatprep.subr.mxu0 %v243
    %653 = vmatpush1.msra.mxu0 %v242
    %654 = vmatprep.subr.mxu0 %v245
    %655 = vmatpush1.msra.mxu0 %v244
    %656 = vmatprep.subr.mxu0 %v247
    %657 = vmatpush1.msra.mxu0 %v246
    %658 = vmatprep.subr.mxu0 %v249
    %659 = vmatpush1.msra.mxu0 %v248
    %660 = vmatprep.subr.mxu0 %v251
    %661 = vmatpush1.msra.mxu0 %v250
    %662 = vmatprep.subr.mxu0 %v253
    %663 = vmatpush1.msra.mxu0 %v252
    %664 = vmatprep.subr.mxu0 %v255
    %665 = vmatpush1.msra.mxu0 %v254
    %666 = vmatprep.subr.mxu0 %v257
    %667 = vmatpush1.msra.mxu0 %v256
    %668 = vmatprep.subr.mxu0 %v259
    %669 = vmatpush1.msra.mxu0 %v258
    %670 = vmatprep.subr.mxu0 %v261
    %671 = vmatpush1.msra.mxu0 %v260
    %672 = vmatprep.subr.mxu0 %v263
    %673 = vmatpush1.msra.mxu0 %v262
    %674 = vmatprep.subr.mxu0 %v265
    %675 = vmatpush1.msra.mxu0 %v264
    %676 = vmatprep.subr.mxu0 %v267
    %677 = vmatpush1.msra.mxu0 %v266
    %678 = vmatprep.subr.mxu0 %v269
    %679 = vmatpush1.msra.mxu0 %v268
    %680 = vmatprep.subr.mxu0 %v271
    %681 = vmatpush1.msra.mxu0 %v270
    %682 = vmatprep.subr.mxu0 %v273
    %683 = vmatpush1.msra.mxu0 %v272
    %684 = vmatprep.subr.mxu0 %v275
    %685 = vmatpush1.msra.mxu0 %v274
    %686 = vmatprep.subr.mxu0 %v277
    %687 = vmatpush1.msra.mxu0 %v276
    %688 = vmatprep.subr.mxu0 %v279
    %689 = vmatpush1.msra.mxu0 %v278
    %690 = vmatprep.mubr.f32.mxu0 %v205
    %691 = vmatmul.mubr.f32.gmra.mrb[0].mxu0 %v204
    %v692 = vpop.f32.mrb[0].mxu0
    %v693 = vadd.f32 %v594, %v692
    %v694 = vpop.f32.mrb[0].mxu0
    %v695 = vadd.f32 %v596, %v694
    %696 = vmatprep.mubr.f32.mxu0 %v208
    %697 = vmatmul.mubr.f32.gmra.mrb[0].mxu0 %v207
    %v698 = vpop.f32.mrb[0].mxu0
    %v699 = vadd.f32 %v600, %v698
    %v700 = vpop.f32.mrb[0].mxu0
    %v701 = vadd.f32 %v602, %v700
    %702 = vmatprep.mubr.f32.mxu0 %v211
    %703 = vmatmul.mubr.f32.gmra.mrb[0].mxu0 %v210
    %v704 = vpop.f32.mrb[0].mxu0
    %v705 = vadd.f32 %v606, %v704
    %v706 = vpop.f32.mrb[0].mxu0
    %v707 = vadd.f32 %v608, %v706
    %708 = vmatprep.mubr.f32.mxu0 %v214
    %709 = vmatmul.mubr.f32.gmra.mrb[0].mxu0 %v213
    %v710 = vpop.f32.mrb[0].mxu0
    %v711 = vadd.f32 %v612, %v710
    %v712 = vpop.f32.mrb[0].mxu0
    %v713 = vadd.f32 %v614, %v712
    %714 = vdwg.mxu0
    %715 = vmatprep.subr.mxu0 %v281
    %716 = vmatpush1.msra.mxu0 %v280
    %717 = vmatprep.subr.mxu0 %v283
    %718 = vmatpush1.msra.mxu0 %v282
    %719 = vmatprep.subr.mxu0 %v285
    %720 = vmatpush1.msra.mxu0 %v284
    %721 = vmatprep.subr.mxu0 %v287
    %722 = vmatpush1.msra.mxu0 %v286
    %723 = vmatprep.subr.mxu0 0.0
    %724 = vmatpush1.msra.mxu0 0.0
    %725 = vmatprep.subr.mxu0 0.0
    %726 = vmatpush1.msra.mxu0 0.0
    %727 = vmatprep.subr.mxu0 0.0
    %728 = vmatpush1.msra.mxu0 0.0
    %729 = vmatprep.subr.mxu0 0.0
    %730 = vmatpush1.msra.mxu0 0.0
    %731 = vmatprep.subr.mxu0 0.0
    %732 = vmatpush1.msra.mxu0 0.0
    %733 = vmatprep.subr.mxu0 0.0
    %734 = vmatpush1.msra.mxu0 0.0
    %735 = vmatprep.subr.mxu0 0.0
    %736 = vmatpush1.msra.mxu0 0.0
    %737 = vmatprep.subr.mxu0 0.0
    %738 = vmatpush1.msra.mxu0 0.0
    %739 = vmatprep.subr.mxu0 0.0
    %740 = vmatpush1.msra.mxu0 0.0
    %741 = vmatprep.subr.mxu0 0.0
    %742 = vmatpush1.msra.mxu0 0.0
    %743 = vmatprep.subr.mxu0 0.0
    %744 = vmatpush1.msra.mxu0 0.0
    %745 = vmatprep.subr.mxu0 0.0
    %746 = vmatpush1.msra.mxu0 0.0
    %747 = vmatprep.subr.mxu0 0.0
    %748 = vmatpush1.msra.mxu0 0.0
    %749 = vmatprep.subr.mxu0 0.0
    %750 = vmatpush1.msra.mxu0 0.0
    %751 = vmatprep.subr.mxu0 0.0
    %752 = vmatpush1.msra.mxu0 0.0
    %753 = vmatprep.subr.mxu0 0.0
    %754 = vmatpush1.msra.mxu0 0.0
    %755 = vmatprep.subr.mxu0 0.0
    %756 = vmatpush1.msra.mxu0 0.0
    %757 = vmatprep.subr.mxu0 0.0
    %758 = vmatpush1.msra.mxu0 0.0
    %759 = vmatprep.subr.mxu0 0.0
    %760 = vmatpush1.msra.mxu0 0.0
    %761 = vmatprep.subr.mxu0 0.0
    %762 = vmatpush1.msra.mxu0 0.0
    %763 = vmatprep.subr.mxu0 0.0
    %764 = vmatpush1.msra.mxu0 0.0
    %765 = vmatprep.subr.mxu0 0.0
    %766 = vmatpush1.msra.mxu0 0.0
    %767 = vmatprep.subr.mxu0 0.0
    %768 = vmatpush1.msra.mxu0 0.0
    %769 = vmatprep.subr.mxu0 0.0
    %770 = vmatpush1.msra.mxu0 0.0
    %771 = vmatprep.subr.mxu0 0.0
    %772 = vmatpush1.msra.mxu0 0.0
    %773 = vmatprep.subr.mxu0 0.0
    %774 = vmatpush1.msra.mxu0 0.0
    %775 = vmatprep.subr.mxu0 0.0
    %776 = vmatpush1.msra.mxu0 0.0
    %777 = vmatprep.subr.mxu0 0.0
    %778 = vmatpush1.msra.mxu0 0.0
    %779 = vmatprep.mubr.f32.mxu0 0.0
    %780 = vmatmul.mubr.f32.gmra.mrb[0].mxu0 %v617
    %v781 = vpop.f32.mrb[0].mxu0
    %v782 = vadd.f32 %v693, %v781
    %v783 = vpop.f32.mrb[0].mxu0
    %v784 = vadd.f32 %v695, %v783
    %785 = vmatprep.mubr.f32.mxu0 0.0
    %786 = vmatmul.mubr.f32.gmra.mrb[0].mxu0 %v619
    %v787 = vpop.f32.mrb[0].mxu0
    %v788 = vadd.f32 %v699, %v787
    %v789 = vpop.f32.mrb[0].mxu0
    %v790 = vadd.f32 %v701, %v789
    %791 = vmatprep.mubr.f32.mxu0 0.0
    %792 = vmatmul.mubr.f32.gmra.mrb[0].mxu0 %v622
    %v793 = vpop.f32.mrb[0].mxu0
    %v794 = vadd.f32 %v705, %v793
    %v795 = vpop.f32.mrb[0].mxu0
    %v796 = vadd.f32 %v707, %v795
    %797 = vmatprep.mubr.f32.mxu0 0.0
    %798 = vmatmul.mubr.f32.gmra.mrb[0].mxu0 %v624
    %v799 = vpop.f32.mrb[0].mxu0
    %v800 = vadd.f32 %v711, %v799
    %v801 = vpop.f32.mrb[0].mxu0
    %v802 = vadd.f32 %v713, %v801
    %803 = vdwg.mxu0
    %v804 = vld [vmem:[#allocation2] sm:$0xfc]
    %v805 = vld [vmem:[#allocation2 + $0x8] sm:$0xfc]
    %v806 = vld [vmem:[#allocation2 + $0x10] sm:$0xfc]
    %v807 = vld [vmem:[#allocation2 + $0x30] sm:$0x3]
    %v808 = vld [vmem:[#allocation2 + $0x38] sm:$0x3]
    %v809 = vld [vmem:[#allocation2 + $0x40] sm:$0x3]
    %v810 = vld [vmem:[#allocation2 + $0x48] sm:$0xfc]
    %v811 = vld [vmem:[#allocation2 + $0x50] sm:$0xfc]
    %v812 = vld [vmem:[#allocation2 + $0x58] sm:$0xfc]
    %v813 = vld [vmem:[#allocation2 + $0x78] sm:$0x3]
    %v814 = vld [vmem:[#allocation2 + $0x80] sm:$0x3]
    %v815 = vld [vmem:[#allocation2 + $0x88] sm:$0x3]
    %vm828 = vcmask 1045504
    %v829 = vrot.slane %v804, 2
    %v830 = vrot.slane %v207, 2
    %v831 = vsel %vm828, %v829, %v830
    %v832 = vrot.slane %v805, 2
    %v833 = vrot.slane %v208, 2
    %v834 = vsel %vm828, %v832, %v833
    %v835 = vrot.slane %v806, 2
    %v836 = vrot.slane %v209, 2
    %v837 = vsel %vm828, %v835, %v836
    %v838 = vrot.slane %v807, 2
    %v839 = vsel %vm828, %v830, %v838
    %v840 = vrot.slane %v808, 2
    %v841 = vsel %vm828, %v833, %v840
    %v842 = vrot.slane %v809, 2
    %v843 = vsel %vm828, %v836, %v842
    %v844 = vrot.slane %v810, 2
    %v845 = vrot.slane %v213, 2
    %v846 = vsel %vm828, %v844, %v845
    %v847 = vrot.slane %v811, 2
    %v848 = vrot.slane %v214, 2
    %v849 = vsel %vm828, %v847, %v848
    %v850 = vrot.slane %v812, 2
    %v851 = vrot.slane %v215, 2
    %v852 = vsel %vm828, %v850, %v851
    %v853 = vrot.slane %v813, 2
    %v854 = vsel %vm828, %v845, %v853
    %v855 = vrot.slane %v814, 2
    %v856 = vsel %vm828, %v848, %v855
    %v857 = vrot.slane %v815, 2
    %v858 = vsel %vm828, %v851, %v857
    %s867 = scalar_lea.vmem [#allocation6], 1152
    %v868 = vld [vmem:[%s867] sm:$0xff]
    %v869 = vld [vmem:[%s867 + $0x8] sm:$0xff]
    %v870 = vld [vmem:[%s867 + $0x10] sm:$0xff]
    %v871 = vld [vmem:[%s867 + $0x18] sm:$0xff]
    %v872 = vld [vmem:[%s867 + $0x20] sm:$0xff]
    %v873 = vld [vmem:[%s867 + $0x28] sm:$0xff]
    %v874 = vld [vmem:[%s867 + $0x30] sm:$0xff]
    %v875 = vld [vmem:[%s867 + $0x38] sm:$0xff]
    %v876 = vld [vmem:[%s867 + $0x40] sm:$0xff]
    %v877 = vld [vmem:[%s867 + $0x48] sm:$0xff]
    %v878 = vld [vmem:[%s867 + $0x50] sm:$0xff]
    %v879 = vld [vmem:[%s867 + $0x58] sm:$0xff]
    %v880 = vld [vmem:[%s867 + $0x60] sm:$0xff]
    %v881 = vld [vmem:[%s867 + $0x68] sm:$0xff]
    %v882 = vld [vmem:[%s867 + $0x70] sm:$0xff]
    %v883 = vld [vmem:[%s867 + $0x78] sm:$0xff]
    %v884 = vld [vmem:[%s867 + $0x80] sm:$0xff]
    %v885 = vld [vmem:[%s867 + $0x88] sm:$0xff]
    %v886 = vld [vmem:[%s867 + $0x90] sm:$0xff]
    %v887 = vld [vmem:[%s867 + $0x98] sm:$0xff]
    %v888 = vld [vmem:[%s867 + $0xa0] sm:$0xff]
    %v889 = vld [vmem:[%s867 + $0xa8] sm:$0xff]
    %v890 = vld [vmem:[%s867 + $0xb0] sm:$0xff]
    %v891 = vld [vmem:[%s867 + $0xb8] sm:$0xff]
    %v892 = vld [vmem:[%s867 + $0xc0] sm:$0xff]
    %v893 = vld [vmem:[%s867 + $0xc8] sm:$0xff]
    %v894 = vld [vmem:[%s867 + $0xd0] sm:$0xff]
    %v895 = vld [vmem:[%s867 + $0xd8] sm:$0xff]
    %v896 = vld [vmem:[%s867 + $0xe0] sm:$0xff]
    %v897 = vld [vmem:[%s867 + $0xe8] sm:$0xff]
    %v898 = vld [vmem:[%s867 + $0xf0] sm:$0xff]
    %v899 = vld [vmem:[%s867 + $0xf8] sm:$0xff]
    %v900 = vld [vmem:[%s867 + $0x100] sm:$0xff]
    %v901 = vld [vmem:[%s867 + $0x108] sm:$0xff]
    %v902 = vld [vmem:[%s867 + $0x110] sm:$0xff]
    %v903 = vld [vmem:[%s867 + $0x118] sm:$0xff]
    %v904 = vld [vmem:[%s867 + $0x120] sm:$0xff]
    %v905 = vld [vmem:[%s867 + $0x128] sm:$0xff]
    %v906 = vld [vmem:[%s867 + $0x130] sm:$0xff]
    %v907 = vld [vmem:[%s867 + $0x138] sm:$0xff]
    %v908 = vld [vmem:[%s867 + $0x140] sm:$0xff]
    %v909 = vld [vmem:[%s867 + $0x148] sm:$0xff]
    %v910 = vld [vmem:[%s867 + $0x150] sm:$0xff]
    %v911 = vld [vmem:[%s867 + $0x158] sm:$0xff]
    %v912 = vld [vmem:[%s867 + $0x160] sm:$0xff]
    %v913 = vld [vmem:[%s867 + $0x168] sm:$0xff]
    %v914 = vld [vmem:[%s867 + $0x170] sm:$0xff]
    %v915 = vld [vmem:[%s867 + $0x178] sm:$0xff]
    %v916 = vld [vmem:[%s867 + $0x180] sm:$0xff]
    %v917 = vld [vmem:[%s867 + $0x188] sm:$0xff]
    %v918 = vld [vmem:[%s867 + $0x190] sm:$0xff]
    %v919 = vld [vmem:[%s867 + $0x198] sm:$0xff]
    %v920 = vld [vmem:[%s867 + $0x1a0] sm:$0xff]
    %v921 = vld [vmem:[%s867 + $0x1a8] sm:$0xff]
    %v922 = vld [vmem:[%s867 + $0x1b0] sm:$0xff]
    %v923 = vld [vmem:[%s867 + $0x1b8] sm:$0xff]
    %v924 = vld [vmem:[%s867 + $0x1c0] sm:$0xff]
    %v925 = vld [vmem:[%s867 + $0x1c8] sm:$0xff]
    %v926 = vld [vmem:[%s867 + $0x1d0] sm:$0xff]
    %v927 = vld [vmem:[%s867 + $0x1d8] sm:$0xff]
    %v928 = vld [vmem:[%s867 + $0x1e0] sm:$0xff]
    %v929 = vld [vmem:[%s867 + $0x1e8] sm:$0xff]
    %v930 = vld [vmem:[%s867 + $0x1f0] sm:$0xff]
    %v931 = vld [vmem:[%s867 + $0x1f8] sm:$0xff]
    %v932 = vld [vmem:[%s867 + $0x200] sm:$0xff]
    %v933 = vld [vmem:[%s867 + $0x208] sm:$0xff]
    %v934 = vld [vmem:[%s867 + $0x210] sm:$0xff]
    %v935 = vld [vmem:[%s867 + $0x218] sm:$0xff]
    %v936 = vld [vmem:[%s867 + $0x220] sm:$0xff]
    %v937 = vld [vmem:[%s867 + $0x228] sm:$0xff]
    %v938 = vld [vmem:[%s867 + $0x230] sm:$0xff]
    %v939 = vld [vmem:[%s867 + $0x238] sm:$0xff]
    %v940 = vsel %vm85, %v837, 0
    %v942 = vsel %vm85, %v843, 0
    %v944 = vsel %vm85, %v852, 0
    %v946 = vsel %vm85, %v858, 0
    %948 = vmatprep.subr.mxu0 %v869
    %949 = vmatpush1.msra.mxu0 %v868
    %950 = vmatprep.subr.mxu0 %v871
    %951 = vmatpush1.msra.mxu0 %v870
    %952 = vmatprep.subr.mxu0 %v873
    %953 = vmatpush1.msra.mxu0 %v872
    %954 = vmatprep.subr.mxu0 %v875
    %955 = vmatpush1.msra.mxu0 %v874
    %956 = vmatprep.subr.mxu0 %v877
    %957 = vmatpush1.msra.mxu0 %v876
    %958 = vmatprep.subr.mxu0 %v879
    %959 = vmatpush1.msra.mxu0 %v878
    %960 = vmatprep.subr.mxu0 %v881
    %961 = vmatpush1.msra.mxu0 %v880
    %962 = vmatprep.subr.mxu0 %v883
    %963 = vmatpush1.msra.mxu0 %v882
    %964 = vmatprep.subr.mxu0 %v885
    %965 = vmatpush1.msra.mxu0 %v884
    %966 = vmatprep.subr.mxu0 %v887
    %967 = vmatpush1.msra.mxu0 %v886
    %968 = vmatprep.subr.mxu0 %v889
    %969 = vmatpush1.msra.mxu0 %v888
    %970 = vmatprep.subr.mxu0 %v891
    %971 = vmatpush1.msra.mxu0 %v890
    %972 = vmatprep.subr.mxu0 %v893
    %973 = vmatpush1.msra.mxu0 %v892
    %974 = vmatprep.subr.mxu0 %v895
    %975 = vmatpush1.msra.mxu0 %v894
    %976 = vmatprep.subr.mxu0 %v897
    %977 = vmatpush1.msra.mxu0 %v896
    %978 = vmatprep.subr.mxu0 %v899
    %979 = vmatpush1.msra.mxu0 %v898
    %980 = vmatprep.subr.mxu0 %v901
    %981 = vmatpush1.msra.mxu0 %v900
    %982 = vmatprep.subr.mxu0 %v903
    %983 = vmatpush1.msra.mxu0 %v902
    %984 = vmatprep.subr.mxu0 %v905
    %985 = vmatpush1.msra.mxu0 %v904
    %986 = vmatprep.subr.mxu0 %v907
    %987 = vmatpush1.msra.mxu0 %v906
    %988 = vmatprep.subr.mxu0 %v909
    %989 = vmatpush1.msra.mxu0 %v908
    %990 = vmatprep.subr.mxu0 %v911
    %991 = vmatpush1.msra.mxu0 %v910
    %992 = vmatprep.subr.mxu0 %v913
    %993 = vmatpush1.msra.mxu0 %v912
    %994 = vmatprep.subr.mxu0 %v915
    %995 = vmatpush1.msra.mxu0 %v914
    %996 = vmatprep.subr.mxu0 %v917
    %997 = vmatpush1.msra.mxu0 %v916
    %998 = vmatprep.subr.mxu0 %v919
    %999 = vmatpush1.msra.mxu0 %v918
    %1000 = vmatprep.subr.mxu0 %v921
    %1001 = vmatpush1.msra.mxu0 %v920
    %1002 = vmatprep.subr.mxu0 %v923
    %1003 = vmatpush1.msra.mxu0 %v922
    %1004 = vmatprep.subr.mxu0 %v925
    %1005 = vmatpush1.msra.mxu0 %v924
    %1006 = vmatprep.subr.mxu0 %v927
    %1007 = vmatpush1.msra.mxu0 %v926
    %1008 = vmatprep.subr.mxu0 %v929
    %1009 = vmatpush1.msra.mxu0 %v928
    %1010 = vmatprep.subr.mxu0 %v931
    %1011 = vmatpush1.msra.mxu0 %v930
    %1012 = vmatprep.mubr.f32.mxu0 %v834
    %1013 = vmatmul.mubr.f32.gmra.mrb[0].mxu0 %v831
    %v1014 = vpop.f32.mrb[0].mxu0
    %v1015 = vadd.f32 0.0, %v1014
    %v1016 = vpop.f32.mrb[0].mxu0
    %v1017 = vadd.f32 0.0, %v1016
    %1018 = vmatprep.mubr.f32.mxu0 %v841
    %1019 = vmatmul.mubr.f32.gmra.mrb[0].mxu0 %v839
    %v1020 = vpop.f32.mrb[0].mxu0
    %v1021 = vadd.f32 0.0, %v1020
    %v1022 = vpop.f32.mrb[0].mxu0
    %v1023 = vadd.f32 0.0, %v1022
    %1024 = vmatprep.mubr.f32.mxu0 %v849
    %1025 = vmatmul.mubr.f32.gmra.mrb[0].mxu0 %v846
    %v1026 = vpop.f32.mrb[0].mxu0
    %v1027 = vadd.f32 0.0, %v1026
    %v1028 = vpop.f32.mrb[0].mxu0
    %v1029 = vadd.f32 0.0, %v1028
    %1030 = vmatprep.mubr.f32.mxu0 %v856
    %1031 = vmatmul.mubr.f32.gmra.mrb[0].mxu0 %v854
    %v1032 = vpop.f32.mrb[0].mxu0
    %v1033 = vadd.f32 0.0, %v1032
    %v1034 = vpop.f32.mrb[0].mxu0
    %v1035 = vadd.f32 0.0, %v1034
    %1036 = vdwg.mxu0
    %1037 = vmatprep.subr.mxu0 %v933
    %1038 = vmatpush1.msra.mxu0 %v932
    %1039 = vmatprep.subr.mxu0 %v935
    %1040 = vmatpush1.msra.mxu0 %v934
    %1041 = vmatprep.subr.mxu0 %v937
    %1042 = vmatpush1.msra.mxu0 %v936
    %1043 = vmatprep.subr.mxu0 %v939
    %1044 = vmatpush1.msra.mxu0 %v938
    %1045 = vmatprep.subr.mxu0 0.0
    %1046 = vmatpush1.msra.mxu0 0.0
    %1047 = vmatprep.subr.mxu0 0.0
    %1048 = vmatpush1.msra.mxu0 0.0
    %1049 = vmatprep.subr.mxu0 0.0
    %1050 = vmatpush1.msra.mxu0 0.0
    %1051 = vmatprep.subr.mxu0 0.0
    %1052 = vmatpush1.msra.mxu0 0.0
    %1053 = vmatprep.subr.mxu0 0.0
    %1054 = vmatpush1.msra.mxu0 0.0
    %1055 = vmatprep.subr.mxu0 0.0
    %1056 = vmatpush1.msra.mxu0 0.0
    %1057 = vmatprep.subr.mxu0 0.0
    %1058 = vmatpush1.msra.mxu0 0.0
    %1059 = vmatprep.subr.mxu0 0.0
    %1060 = vmatpush1.msra.mxu0 0.0
    %1061 = vmatprep.subr.mxu0 0.0
    %1062 = vmatpush1.msra.mxu0 0.0
    %1063 = vmatprep.subr.mxu0 0.0
    %1064 = vmatpush1.msra.mxu0 0.0
    %1065 = vmatprep.subr.mxu0 0.0
    %1066 = vmatpush1.msra.mxu0 0.0
    %1067 = vmatprep.subr.mxu0 0.0
    %1068 = vmatpush1.msra.mxu0 0.0
    %1069 = vmatprep.subr.mxu0 0.0
    %1070 = vmatpush1.msra.mxu0 0.0
    %1071 = vmatprep.subr.mxu0 0.0
    %1072 = vmatpush1.msra.mxu0 0.0
    %1073 = vmatprep.subr.mxu0 0.0
    %1074 = vmatpush1.msra.mxu0 0.0
    %1075 = vmatprep.subr.mxu0 0.0
    %1076 = vmatpush1.msra.mxu0 0.0
    %1077 = vmatprep.subr.mxu0 0.0
    %1078 = vmatpush1.msra.mxu0 0.0
    %1079 = vmatprep.subr.mxu0 0.0
    %1080 = vmatpush1.msra.mxu0 0.0
    %1081 = vmatprep.subr.mxu0 0.0
    %1082 = vmatpush1.msra.mxu0 0.0
    %1083 = vmatprep.subr.mxu0 0.0
    %1084 = vmatpush1.msra.mxu0 0.0
    %1085 = vmatprep.subr.mxu0 0.0
    %1086 = vmatpush1.msra.mxu0 0.0
    %1087 = vmatprep.subr.mxu0 0.0
    %1088 = vmatpush1.msra.mxu0 0.0
    %1089 = vmatprep.subr.mxu0 0.0
    %1090 = vmatpush1.msra.mxu0 0.0
    %1091 = vmatprep.subr.mxu0 0.0
    %1092 = vmatpush1.msra.mxu0 0.0
    %1093 = vmatprep.subr.mxu0 0.0
    %1094 = vmatpush1.msra.mxu0 0.0
    %1095 = vmatprep.subr.mxu0 0.0
    %1096 = vmatpush1.msra.mxu0 0.0
    %1097 = vmatprep.subr.mxu0 0.0
    %1098 = vmatpush1.msra.mxu0 0.0
    %1099 = vmatprep.subr.mxu0 0.0
    %1100 = vmatpush1.msra.mxu0 0.0
    %1101 = vmatprep.mubr.f32.mxu0 0.0
    %1102 = vmatmul.mubr.f32.gmra.mrb[0].mxu0 %v940
    %v1103 = vpop.f32.mrb[0].mxu0
    %v1104 = vadd.f32 %v1015, %v1103
    %v1105 = vpop.f32.mrb[0].mxu0
    %v1106 = vadd.f32 %v1017, %v1105
    %1107 = vmatprep.mubr.f32.mxu0 0.0
    %1108 = vmatmul.mubr.f32.gmra.mrb[0].mxu0 %v942
    %v1109 = vpop.f32.mrb[0].mxu0
    %v1110 = vadd.f32 %v1021, %v1109
    %v1111 = vpop.f32.mrb[0].mxu0
    %v1112 = vadd.f32 %v1023, %v1111
    %1113 = vmatprep.mubr.f32.mxu0 0.0
    %1114 = vmatmul.mubr.f32.gmra.mrb[0].mxu0 %v944
    %v1115 = vpop.f32.mrb[0].mxu0
    %v1116 = vadd.f32 %v1027, %v1115
    %v1117 = vpop.f32.mrb[0].mxu0
    %v1118 = vadd.f32 %v1029, %v1117
    %1119 = vmatprep.mubr.f32.mxu0 0.0
    %1120 = vmatmul.mubr.f32.gmra.mrb[0].mxu0 %v946
    %v1121 = vpop.f32.mrb[0].mxu0
    %v1122 = vadd.f32 %v1033, %v1121
    %v1123 = vpop.f32.mrb[0].mxu0
    %v1124 = vadd.f32 %v1035, %v1123
    %1125 = vdwg.mxu0
    %v1126 = vadd.f32 %v782, %v1104
    %v1127 = vadd.f32 %v784, %v1106
    %v1128 = vadd.f32 %v788, %v1110
    %v1129 = vadd.f32 %v790, %v1112
    %v1130 = vadd.f32 %v794, %v1116
    %v1131 = vadd.f32 %v796, %v1118
    %v1132 = vadd.f32 %v800, %v1122
    %v1133 = vadd.f32 %v802, %v1124
    %v1134 = vld [vmem:[#allocation8] sm:$0x1]
    %1136 = vrot.lane.b32.xlu0 %v1134, 16
    %v1137 = vpop.permute.xlu0 %1136
    %1139 = vrot.lane.b32.xlu0 %v1134, 32
    %v1140 = vpop.permute.xlu0 %1139
    %1142 = vrot.lane.b32.xlu0 %v1134, 48
    %v1143 = vpop.permute.xlu0 %1142
    %1145 = vrot.lane.b32.xlu0 %v1134, 64
    %v1146 = vpop.permute.xlu0 %1145
    %1148 = vrot.lane.b32.xlu0 %v1134, 80
    %v1149 = vpop.permute.xlu0 %1148
    %1151 = vrot.lane.b32.xlu0 %v1134, 96
    %v1152 = vpop.permute.xlu0 %1151
    %1154 = vrot.lane.b32.xlu0 %v1134, 112
    %v1155 = vpop.permute.xlu0 %1154
    %v1157 = vsel %vm156, %v1134, %v1137
    %v1158 = vsel %vm85, %v1157, %v1140
    %vm1159 = vcmask 392192
    %v1160 = vsel %vm1159, %v1158, %v1143
    %vm1161 = vcmask 523264
    %v1162 = vsel %vm1161, %v1160, %v1146
    %vm1163 = vcmask 654336
    %v1164 = vsel %vm1163, %v1162, %v1149
    %vm1165 = vcmask 785408
    %v1166 = vsel %vm1165, %v1164, %v1152
    %vm1167 = vcmask 916480
    %v1168 = vsel %vm1167, %v1166, %v1155
    %v1169 = vlaneseq
    %v1170 = vshrl.u32 %v1169, 7
    %v1171 = vsub.s32 0, %v1170
    %v1172 = vrot.slane %v1168, %v1171
    %v1173 = vadd.f32 %v1126, %v1172
    %v1174 = vadd.f32 %v1127, %v1172
    %v1175 = vadd.f32 %v1128, %v1172
    %v1176 = vadd.f32 %v1129, %v1172
    %v1177 = vadd.f32 %v1130, %v1172
    %v1178 = vadd.f32 %v1131, %v1172
    %v1179 = vadd.f32 %v1132, %v1172
    %v1180 = vadd.f32 %v1133, %v1172
    %v1181 = vadd.f32 %v1173, %v1175
    %v1182 = vadd.f32 %v1181, %v1177
    %v1183 = vadd.f32 %v1182, %v1179
    %v1184 = vrot.slane %v1183, 4
    %v1185 = vadd.f32 %v1183, %v1184
    %v1186 = vrot.slane %v1185, 2
    %v1187 = vadd.f32 %v1185, %v1186
    %v1188 = vrot.slane %v1187, 1
    %v1189 = vadd.f32 %v1187, %v1188
    %v1190 = vadd.f32 %v1174, %v1176
    %v1191 = vadd.f32 %v1190, %v1178
    %v1192 = vadd.f32 %v1191, %v1180
    %v1193 = vrot.slane %v1192, 4
    %v1194 = vadd.f32 %v1192, %v1193
    %v1195 = vrot.slane %v1194, 2
    %v1196 = vadd.f32 %v1194, %v1195
    %v1197 = vrot.slane %v1196, 1
    %v1198 = vadd.f32 %v1196, %v1197
    %v1199 = vmul.f32 %v1173, %v1173
    %v1200 = vmul.f32 %v1174, %v1174
    %v1201 = vmul.f32 %v1175, %v1175
    %v1202 = vmul.f32 %v1176, %v1176
    %v1203 = vmul.f32 %v1177, %v1177
    %v1204 = vmul.f32 %v1178, %v1178
    %v1205 = vmul.f32 %v1179, %v1179
    %v1206 = vmul.f32 %v1180, %v1180
    %v1207 = vadd.f32 %v1199, %v1201
    %v1208 = vadd.f32 %v1207, %v1203
    %v1209 = vadd.f32 %v1208, %v1205
    %v1210 = vrot.slane %v1209, 4
    %v1211 = vadd.f32 %v1209, %v1210
    %v1212 = vrot.slane %v1211, 2
    %v1213 = vadd.f32 %v1211, %v1212
    %v1214 = vrot.slane %v1213, 1
    %v1215 = vadd.f32 %v1213, %v1214
    %v1216 = vadd.f32 %v1200, %v1202
    %v1217 = vadd.f32 %v1216, %v1204
    %v1218 = vadd.f32 %v1217, %v1206
    %v1219 = vrot.slane %v1218, 4
    %v1220 = vadd.f32 %v1218, %v1219
    %v1221 = vrot.slane %v1220, 2
    %v1222 = vadd.f32 %v1220, %v1221
    %v1223 = vrot.slane %v1222, 1
    %v1224 = vadd.f32 %v1222, %v1223
    %1226 = vrot.lane.b32.xlu0 %v1189, 112
    %v1227 = vpop.permute.xlu0 %1226
    %v1229 = vadd.f32 %v1189, %v1227
    %1231 = vrot.lane.b32.xlu0 %v1215, 112
    %v1232 = vpop.permute.xlu0 %1231
    %v1234 = vadd.f32 %v1215, %v1232
    %1235 = vrot.lane.b32.xlu0 %v1189, 96
    %v1236 = vpop.permute.xlu0 %1235
    %v1238 = vadd.f32 %v1229, %v1236
    %1239 = vrot.lane.b32.xlu0 %v1215, 96
    %v1240 = vpop.permute.xlu0 %1239
    %v1242 = vadd.f32 %v1234, %v1240
    %1243 = vrot.lane.b32.xlu0 %v1189, 80
    %v1244 = vpop.permute.xlu0 %1243
    %v1246 = vadd.f32 %v1238, %v1244
    %1247 = vrot.lane.b32.xlu0 %v1215, 80
    %v1248 = vpop.permute.xlu0 %1247
    %v1250 = vadd.f32 %v1242, %v1248
    %1251 = vrot.lane.b32.xlu0 %v1189, 64
    %v1252 = vpop.permute.xlu0 %1251
    %v1254 = vadd.f32 %v1246, %v1252
    %1255 = vrot.lane.b32.xlu0 %v1215, 64
    %v1256 = vpop.permute.xlu0 %1255
    %v1258 = vadd.f32 %v1250, %v1256
    %1259 = vrot.lane.b32.xlu0 %v1189, 48
    %v1260 = vpop.permute.xlu0 %1259
    %v1262 = vadd.f32 %v1254, %v1260
    %1263 = vrot.lane.b32.xlu0 %v1215, 48
    %v1264 = vpop.permute.xlu0 %1263
    %v1266 = vadd.f32 %v1258, %v1264
    %1267 = vrot.lane.b32.xlu0 %v1189, 32
    %v1268 = vpop.permute.xlu0 %1267
    %v1270 = vadd.f32 %v1262, %v1268
    %1271 = vrot.lane.b32.xlu0 %v1215, 32
    %v1272 = vpop.permute.xlu0 %1271
    %v1274 = vadd.f32 %v1266, %v1272
    %1275 = vrot.lane.b32.xlu0 %v1189, 16
    %v1276 = vpop.permute.xlu0 %1275
    %v1278 = vadd.f32 %v1270, %v1276
    %1279 = vrot.lane.b32.xlu0 %v1215, 16
    %v1280 = vpop.permute.xlu0 %1279
    %v1282 = vadd.f32 %v1274, %v1280
    %v1283 = vadd.f32 %v1278, %v1198
    %v1284 = vadd.f32 %v1282, %v1224
    %1286 = vrot.lane.b32.xlu0 %v1198, 112
    %v1287 = vpop.permute.xlu0 %1286
    %v1289 = vadd.f32 %v1283, %v1287
    %1291 = vrot.lane.b32.xlu0 %v1224, 112
    %v1292 = vpop.permute.xlu0 %1291
    %v1294 = vadd.f32 %v1284, %v1292
    %1295 = vrot.lane.b32.xlu0 %v1198, 96
    %v1296 = vpop.permute.xlu0 %1295
    %v1298 = vadd.f32 %v1289, %v1296
    %1299 = vrot.lane.b32.xlu0 %v1224, 96
    %v1300 = vpop.permute.xlu0 %1299
    %v1302 = vadd.f32 %v1294, %v1300
    %1303 = vrot.lane.b32.xlu0 %v1198, 80
    %v1304 = vpop.permute.xlu0 %1303
    %v1306 = vadd.f32 %v1298, %v1304
    %1307 = vrot.lane.b32.xlu0 %v1224, 80
    %v1308 = vpop.permute.xlu0 %1307
    %v1310 = vadd.f32 %v1302, %v1308
    %1311 = vrot.lane.b32.xlu0 %v1198, 64
    %v1312 = vpop.permute.xlu0 %1311
    %v1314 = vadd.f32 %v1306, %v1312
    %1315 = vrot.lane.b32.xlu0 %v1224, 64
    %v1316 = vpop.permute.xlu0 %1315
    %v1318 = vadd.f32 %v1310, %v1316
    %1319 = vrot.lane.b32.xlu0 %v1198, 48
    %v1320 = vpop.permute.xlu0 %1319
    %v1322 = vadd.f32 %v1314, %v1320
    %1323 = vrot.lane.b32.xlu0 %v1224, 48
    %v1324 = vpop.permute.xlu0 %1323
    %v1326 = vadd.f32 %v1318, %v1324
    %1327 = vrot.lane.b32.xlu0 %v1198, 32
    %v1328 = vpop.permute.xlu0 %1327
    %v1330 = vadd.f32 %v1322, %v1328
    %1331 = vrot.lane.b32.xlu0 %v1224, 32
    %v1332 = vpop.permute.xlu0 %1331
    %v1334 = vadd.f32 %v1326, %v1332
    %1335 = vrot.lane.b32.xlu0 %v1198, 16
    %v1336 = vpop.permute.xlu0 %1335
    %v1338 = vadd.f32 %v1330, %v1336
    %1339 = vrot.lane.b32.xlu0 %v1224, 16
    %v1340 = vpop.permute.xlu0 %1339
    %v1342 = vadd.f32 %v1334, %v1340
    %v1343 = vmul.f32 %v1338, 0.001953125
    %v1344 = vmul.f32 %v1342, 0.001953125
    %v1345 = vmul.f32 %v1343, %v1343
    %v1346 = vsub.f32 %v1344, %v1345
    %v1347 = vld [vmem:[#allocation9] sm:$0x1]
    %v1348 = vadd.f32 %v1346, 1e-05
    %v1349 = vrsqrt.pop %v1348
    %v1350 = vmul.f32 %v1347, %v1349
    %v1351 = vld [vmem:[#allocation11] sm:$0x1]
    %v1352 = vmul.f32 %v1343, %v1350
    %v1353 = vsub.f32 %v1351, %v1352
    %1355 = vrot.lane.b32.xlu0 %v1350, 16
    %v1356 = vpop.permute.xlu0 %1355
    %1358 = vrot.lane.b32.xlu0 %v1350, 32
    %v1359 = vpop.permute.xlu0 %1358
    %1361 = vrot.lane.b32.xlu0 %v1350, 48
    %v1362 = vpop.permute.xlu0 %1361
    %1364 = vrot.lane.b32.xlu0 %v1350, 64
    %v1365 = vpop.permute.xlu0 %1364
    %1367 = vrot.lane.b32.xlu0 %v1350, 80
    %v1368 = vpop.permute.xlu0 %1367
    %1370 = vrot.lane.b32.xlu0 %v1350, 96
    %v1371 = vpop.permute.xlu0 %1370
    %1373 = vrot.lane.b32.xlu0 %v1350, 112
    %v1374 = vpop.permute.xlu0 %1373
    %v1376 = vsel %vm156, %v1350, %v1356
    %v1377 = vsel %vm85, %v1376, %v1359
    %v1378 = vsel %vm1159, %v1377, %v1362
    %v1379 = vsel %vm1161, %v1378, %v1365
    %v1380 = vsel %vm1163, %v1379, %v1368
    %v1381 = vsel %vm1165, %v1380, %v1371
    %v1382 = vsel %vm1167, %v1381, %v1374
    %v1383 = vlaneseq
    %v1384 = vshrl.u32 %v1383, 7
    %v1385 = vsub.s32 0, %v1384
    %v1386 = vrot.slane %v1382, %v1385
    %v1387 = vmul.f32 %v1173, %v1386
    %v1388 = vmul.f32 %v1174, %v1386
    %v1389 = vmul.f32 %v1175, %v1386
    %v1390 = vmul.f32 %v1176, %v1386
    %v1391 = vmul.f32 %v1177, %v1386
    %v1392 = vmul.f32 %v1178, %v1386
    %v1393 = vmul.f32 %v1179, %v1386
    %v1394 = vmul.f32 %v1180, %v1386
    %1396 = vrot.lane.b32.xlu0 %v1353, 16
    %v1397 = vpop.permute.xlu0 %1396
    %1399 = vrot.lane.b32.xlu0 %v1353, 32
    %v1400 = vpop.permute.xlu0 %1399
    %1402 = vrot.lane.b32.xlu0 %v1353, 48
    %v1403 = vpop.permute.xlu0 %1402
    %1405 = vrot.lane.b32.xlu0 %v1353, 64
    %v1406 = vpop.permute.xlu0 %1405
    %1408 = vrot.lane.b32.xlu0 %v1353, 80
    %v1409 = vpop.permute.xlu0 %1408
    %1411 = vrot.lane.b32.xlu0 %v1353, 96
    %v1412 = vpop.permute.xlu0 %1411
    %1414 = vrot.lane.b32.xlu0 %v1353, 112
    %v1415 = vpop.permute.xlu0 %1414
    %v1417 = vsel %vm156, %v1353, %v1397
    %v1418 = vsel %vm85, %v1417, %v1400
    %v1419 = vsel %vm1159, %v1418, %v1403
    %v1420 = vsel %vm1161, %v1419, %v1406
    %v1421 = vsel %vm1163, %v1420, %v1409
    %v1422 = vsel %vm1165, %v1421, %v1412
    %v1423 = vsel %vm1167, %v1422, %v1415
    %v1424 = vlaneseq
    %v1425 = vshrl.u32 %v1424, 7
    %v1426 = vsub.s32 0, %v1425
    %v1427 = vrot.slane %v1423, %v1426
    %v1428 = vadd.f32 %v1387, %v1427
    %v1429 = vadd.f32 %v1388, %v1427
    %v1430 = vadd.f32 %v1389, %v1427
    %v1431 = vadd.f32 %v1390, %v1427
    %v1432 = vadd.f32 %v1391, %v1427
    %v1433 = vadd.f32 %v1392, %v1427
    %v1434 = vadd.f32 %v1393, %v1427
    %v1435 = vadd.f32 %v1394, %v1427
    %v1436 = vmax.f32 %v1428, 0.0
    %v1437 = vmax.f32 %v1429, 0.0
    %v1438 = vmax.f32 %v1430, 0.0
    %v1439 = vmax.f32 %v1431, 0.0
    %v1440 = vmax.f32 %v1432, 0.0
    %v1441 = vmax.f32 %v1433, 0.0
    %v1442 = vmax.f32 %v1434, 0.0
    %v1443 = vmax.f32 %v1435, 0.0
    %v1452 = vrot.slane %v1436, 7
    %v1453 = vrot.slane %v1437, 7
    %v1454 = vrot.slane %v1438, 7
    %v1455 = vsel %vm119, %v1452, %v1454
    %v1456 = vrot.slane %v1439, 7
    %v1457 = vsel %vm119, %v1453, %v1456
    %v1458 = vrot.slane %v1440, 7
    %v1459 = vrot.slane %v1441, 7
    %v1460 = vrot.slane %v1442, 7
    %v1461 = vsel %vm119, %v1458, %v1460
    %v1462 = vrot.slane %v1443, 7
    %v1463 = vsel %vm119, %v1459, %v1462
    %1464 = vrot.lane.b32.xlu0 %v1452, 16
    %v1465 = vpop.permute.xlu0 %1464
    %1466 = vrot.lane.b32.xlu0 %v1453, 16
    %v1467 = vpop.permute.xlu0 %1466
    %1468 = vrot.lane.b32.xlu0 %v1455, 16
    %v1469 = vpop.permute.xlu0 %1468
    %1470 = vrot.lane.b32.xlu0 %v1457, 16
    %v1471 = vpop.permute.xlu0 %1470
    %1472 = vrot.lane.b32.xlu0 %v1454, 16
    %v1473 = vpop.permute.xlu0 %1472
    %1474 = vrot.lane.b32.xlu0 %v1456, 16
    %v1475 = vpop.permute.xlu0 %1474
    %1476 = vrot.lane.b32.xlu0 %v1458, 16
    %v1477 = vpop.permute.xlu0 %1476
    %1478 = vrot.lane.b32.xlu0 %v1459, 16
    %v1479 = vpop.permute.xlu0 %1478
    %1480 = vrot.lane.b32.xlu0 %v1461, 16
    %v1481 = vpop.permute.xlu0 %1480
    %1482 = vrot.lane.b32.xlu0 %v1463, 16
    %v1483 = vpop.permute.xlu0 %1482
    %1484 = vrot.lane.b32.xlu0 %v1460, 16
    %v1485 = vpop.permute.xlu0 %1484
    %1486 = vrot.lane.b32.xlu0 %v1462, 16
    %v1487 = vpop.permute.xlu0 %1486
    %v1488 = vsel %vm156, %v1465, %v1467
    %v1489 = vsel %vm156, %v1469, %v1471
    %v1490 = vsel %vm156, %v1473, %v1475
    %v1491 = vsel %vm156, %v1477, %v1479
    %v1492 = vsel %vm156, %v1481, %v1483
    %v1493 = vsel %vm156, %v1485, %v1487
    %1512 = vst.msk [vmem:[#allocation2] sm:$0xfe] %vm181, %v1465
    %1513 = vst [vmem:[#allocation2 + $0x8] sm:$0xfe] %v1488
    %1514 = vst.msk [vmem:[#allocation2 + $0x10] sm:$0xfe] %vm184, %v1467
    %1515 = vst.msk [vmem:[#allocation2 + $0x18] sm:$0xff] %vm186, %v1469
    %1516 = vst [vmem:[#allocation2 + $0x20] sm:$0xff] %v1489
    %1517 = vst.msk [vmem:[#allocation2 + $0x28] sm:$0xff] %vm156, %v1471
    %1518 = vst.msk [vmem:[#allocation2 + $0x30] sm:$0x1] %vm190, %v1473
    %1519 = vst [vmem:[#allocation2 + $0x38] sm:$0x1] %v1490
    %1520 = vst.msk [vmem:[#allocation2 + $0x40] sm:$0x1] %vm193, %v1475
    %1521 = vst.msk [vmem:[#allocation2 + $0x48] sm:$0xfe] %vm181, %v1477
    %1522 = vst [vmem:[#allocation2 + $0x50] sm:$0xfe] %v1491
    %1523 = vst.msk [vmem:[#allocation2 + $0x58] sm:$0xfe] %vm184, %v1479
    %1524 = vst.msk [vmem:[#allocation2 + $0x60] sm:$0xff] %vm186, %v1481
    %1525 = vst [vmem:[#allocation2 + $0x68] sm:$0xff] %v1492
    %1526 = vst.msk [vmem:[#allocation2 + $0x70] sm:$0xff] %vm156, %v1483
    %1527 = vst.msk [vmem:[#allocation2 + $0x78] sm:$0x1] %vm190, %v1485
    %1528 = vst [vmem:[#allocation2 + $0x80] sm:$0x1] %v1493
    %1529 = vst.msk [vmem:[#allocation2 + $0x88] sm:$0x1] %vm193, %v1487
    %v1530 = vld [vmem:[#allocation2] sm:$0xff]
    %v1531 = vld [vmem:[#allocation2 + $0x8] sm:$0xff]
    %v1532 = vld [vmem:[#allocation2 + $0x10] sm:$0xff]
    %v1533 = vld [vmem:[#allocation2 + $0x18] sm:$0xff]
    %v1534 = vld [vmem:[#allocation2 + $0x20] sm:$0xff]
    %v1535 = vld [vmem:[#allocation2 + $0x28] sm:$0xff]
    %v1536 = vld [vmem:[#allocation2 + $0x48] sm:$0xff]
    %v1537 = vld [vmem:[#allocation2 + $0x50] sm:$0xff]
    %v1538 = vld [vmem:[#allocation2 + $0x58] sm:$0xff]
    %v1539 = vld [vmem:[#allocation2 + $0x60] sm:$0xff]
    %v1540 = vld [vmem:[#allocation2 + $0x68] sm:$0xff]
    %v1541 = vld [vmem:[#allocation2 + $0x70] sm:$0xff]
    %s1542 = scalar_lea.vmem [#allocation6], 1728
    %v1543 = vld [vmem:[%s1542] sm:$0xff]
    %v1544 = vld [vmem:[%s1542 + $0x8] sm:$0xff]
    %v1545 = vld [vmem:[%s1542 + $0x10] sm:$0xff]
    %v1546 = vld [vmem:[%s1542 + $0x18] sm:$0xff]
    %v1547 = vld [vmem:[%s1542 + $0x20] sm:$0xff]
    %v1548 = vld [vmem:[%s1542 + $0x28] sm:$0xff]
    %v1549 = vld [vmem:[%s1542 + $0x30] sm:$0xff]
    %v1550 = vld [vmem:[%s1542 + $0x38] sm:$0xff]
    %v1551 = vld [vmem:[%s1542 + $0x40] sm:$0xff]
    %v1552 = vld [vmem:[%s1542 + $0x48] sm:$0xff]
    %v1553 = vld [vmem:[%s1542 + $0x50] sm:$0xff]
    %v1554 = vld [vmem:[%s1542 + $0x58] sm:$0xff]
    %v1555 = vld [vmem:[%s1542 + $0x60] sm:$0xff]
    %v1556 = vld [vmem:[%s1542 + $0x68] sm:$0xff]
    %v1557 = vld [vmem:[%s1542 + $0x70] sm:$0xff]
    %v1558 = vld [vmem:[%s1542 + $0x78] sm:$0xff]
    %v1559 = vld [vmem:[%s1542 + $0x80] sm:$0xff]
    %v1560 = vld [vmem:[%s1542 + $0x88] sm:$0xff]
    %v1561 = vld [vmem:[%s1542 + $0x90] sm:$0xff]
    %v1562 = vld [vmem:[%s1542 + $0x98] sm:$0xff]
    %v1563 = vld [vmem:[%s1542 + $0xa0] sm:$0xff]
    %v1564 = vld [vmem:[%s1542 + $0xa8] sm:$0xff]
    %v1565 = vld [vmem:[%s1542 + $0xb0] sm:$0xff]
    %v1566 = vld [vmem:[%s1542 + $0xb8] sm:$0xff]
    %v1567 = vld [vmem:[%s1542 + $0xc0] sm:$0xff]
    %v1568 = vld [vmem:[%s1542 + $0xc8] sm:$0xff]
    %v1569 = vld [vmem:[%s1542 + $0xd0] sm:$0xff]
    %v1570 = vld [vmem:[%s1542 + $0xd8] sm:$0xff]
    %v1571 = vld [vmem:[%s1542 + $0xe0] sm:$0xff]
    %v1572 = vld [vmem:[%s1542 + $0xe8] sm:$0xff]
    %v1573 = vld [vmem:[%s1542 + $0xf0] sm:$0xff]
    %v1574 = vld [vmem:[%s1542 + $0xf8] sm:$0xff]
    %v1575 = vld [vmem:[%s1542 + $0x100] sm:$0xff]
    %v1576 = vld [vmem:[%s1542 + $0x108] sm:$0xff]
    %v1577 = vld [vmem:[%s1542 + $0x110] sm:$0xff]
    %v1578 = vld [vmem:[%s1542 + $0x118] sm:$0xff]
    %v1579 = vld [vmem:[%s1542 + $0x120] sm:$0xff]
    %v1580 = vld [vmem:[%s1542 + $0x128] sm:$0xff]
    %v1581 = vld [vmem:[%s1542 + $0x130] sm:$0xff]
    %v1582 = vld [vmem:[%s1542 + $0x138] sm:$0xff]
    %v1583 = vld [vmem:[%s1542 + $0x140] sm:$0xff]
    %v1584 = vld [vmem:[%s1542 + $0x148] sm:$0xff]
    %v1585 = vld [vmem:[%s1542 + $0x150] sm:$0xff]
    %v1586 = vld [vmem:[%s1542 + $0x158] sm:$0xff]
    %v1587 = vld [vmem:[%s1542 + $0x160] sm:$0xff]
    %v1588 = vld [vmem:[%s1542 + $0x168] sm:$0xff]
    %v1589 = vld [vmem:[%s1542 + $0x170] sm:$0xff]
    %v1590 = vld [vmem:[%s1542 + $0x178] sm:$0xff]
    %v1591 = vld [vmem:[%s1542 + $0x180] sm:$0xff]
    %v1592 = vld [vmem:[%s1542 + $0x188] sm:$0xff]
    %v1593 = vld [vmem:[%s1542 + $0x190] sm:$0xff]
    %v1594 = vld [vmem:[%s1542 + $0x198] sm:$0xff]
    %v1595 = vld [vmem:[%s1542 + $0x1a0] sm:$0xff]
    %v1596 = vld [vmem:[%s1542 + $0x1a8] sm:$0xff]
    %v1597 = vld [vmem:[%s1542 + $0x1b0] sm:$0xff]
    %v1598 = vld [vmem:[%s1542 + $0x1b8] sm:$0xff]
    %v1599 = vld [vmem:[%s1542 + $0x1c0] sm:$0xff]
    %v1600 = vld [vmem:[%s1542 + $0x1c8] sm:$0xff]
    %v1601 = vld [vmem:[%s1542 + $0x1d0] sm:$0xff]
    %v1602 = vld [vmem:[%s1542 + $0x1d8] sm:$0xff]
    %v1603 = vld [vmem:[%s1542 + $0x1e0] sm:$0xff]
    %v1604 = vld [vmem:[%s1542 + $0x1e8] sm:$0xff]
    %v1605 = vld [vmem:[%s1542 + $0x1f0] sm:$0xff]
    %v1606 = vld [vmem:[%s1542 + $0x1f8] sm:$0xff]
    %v1607 = vld [vmem:[%s1542 + $0x200] sm:$0xff]
    %v1608 = vld [vmem:[%s1542 + $0x208] sm:$0xff]
    %v1609 = vld [vmem:[%s1542 + $0x210] sm:$0xff]
    %v1610 = vld [vmem:[%s1542 + $0x218] sm:$0xff]
    %v1611 = vld [vmem:[%s1542 + $0x220] sm:$0xff]
    %v1612 = vld [vmem:[%s1542 + $0x228] sm:$0xff]
    %v1613 = vld [vmem:[%s1542 + $0x230] sm:$0xff]
    %v1614 = vld [vmem:[%s1542 + $0x238] sm:$0xff]
    %v1615 = vld [vmem:[#allocation2] sm:$0xfe]
    %v1616 = vld [vmem:[#allocation2 + $0x8] sm:$0xfe]
    %v1617 = vld [vmem:[#allocation2 + $0x10] sm:$0xfe]
    %v1618 = vld [vmem:[#allocation2 + $0x30] sm:$0x1]
    %v1619 = vld [vmem:[#allocation2 + $0x38] sm:$0x1]
    %v1620 = vld [vmem:[#allocation2 + $0x40] sm:$0x1]
    %v1621 = vld [vmem:[#allocation2 + $0x48] sm:$0xfe]
    %v1622 = vld [vmem:[#allocation2 + $0x50] sm:$0xfe]
    %v1623 = vld [vmem:[#allocation2 + $0x58] sm:$0xfe]
    %v1624 = vld [vmem:[#allocation2 + $0x78] sm:$0x1]
    %v1625 = vld [vmem:[#allocation2 + $0x80] sm:$0x1]
    %v1626 = vld [vmem:[#allocation2 + $0x88] sm:$0x1]
    %v1645 = vrot.slane %v1615, 1
    %v1646 = vrot.slane %v1533, 1
    %v1647 = vsel %vm318, %v1645, %v1646
    %v1648 = vrot.slane %v1616, 1
    %v1649 = vrot.slane %v1534, 1
    %v1650 = vsel %vm318, %v1648, %v1649
    %v1651 = vrot.slane %v1617, 1
    %v1652 = vrot.slane %v1535, 1
    %v1653 = vsel %vm318, %v1651, %v1652
    %v1654 = vrot.slane %v1618, 1
    %v1655 = vsel %vm318, %v1646, %v1654
    %v1656 = vrot.slane %v1619, 1
    %v1657 = vsel %vm318, %v1649, %v1656
    %v1658 = vrot.slane %v1620, 1
    %v1659 = vsel %vm318, %v1652, %v1658
    %v1660 = vrot.slane %v1621, 1
    %v1661 = vrot.slane %v1539, 1
    %v1662 = vsel %vm318, %v1660, %v1661
    %v1663 = vrot.slane %v1622, 1
    %v1664 = vrot.slane %v1540, 1
    %v1665 = vsel %vm318, %v1663, %v1664
    %v1666 = vrot.slane %v1623, 1
    %v1667 = vrot.slane %v1541, 1
    %v1668 = vsel %vm318, %v1666, %v1667
    %v1669 = vrot.slane %v1624, 1
    %v1670 = vsel %vm318, %v1661, %v1669
    %v1671 = vrot.slane %v1625, 1
    %v1672 = vsel %vm318, %v1664, %v1671
    %v1673 = vrot.slane %v1626, 1
    %v1674 = vsel %vm318, %v1667, %v1673
    %s1683 = scalar_lea.vmem [#allocation6], 2304
    %v1684 = vld [vmem:[%s1683] sm:$0xff]
    %v1685 = vld [vmem:[%s1683 + $0x8] sm:$0xff]
    %v1686 = vld [vmem:[%s1683 + $0x10] sm:$0xff]
    %v1687 = vld [vmem:[%s1683 + $0x18] sm:$0xff]
    %v1688 = vld [vmem:[%s1683 + $0x20] sm:$0xff]
    %v1689 = vld [vmem:[%s1683 + $0x28] sm:$0xff]
    %v1690 = vld [vmem:[%s1683 + $0x30] sm:$0xff]
    %v1691 = vld [vmem:[%s1683 + $0x38] sm:$0xff]
    %v1692 = vld [vmem:[%s1683 + $0x40] sm:$0xff]
    %v1693 = vld [vmem:[%s1683 + $0x48] sm:$0xff]
    %v1694 = vld [vmem:[%s1683 + $0x50] sm:$0xff]
    %v1695 = vld [vmem:[%s1683 + $0x58] sm:$0xff]
    %v1696 = vld [vmem:[%s1683 + $0x60] sm:$0xff]
    %v1697 = vld [vmem:[%s1683 + $0x68] sm:$0xff]
    %v1698 = vld [vmem:[%s1683 + $0x70] sm:$0xff]
    %v1699 = vld [vmem:[%s1683 + $0x78] sm:$0xff]
    %v1700 = vld [vmem:[%s1683 + $0x80] sm:$0xff]
    %v1701 = vld [vmem:[%s1683 + $0x88] sm:$0xff]
    %v1702 = vld [vmem:[%s1683 + $0x90] sm:$0xff]
    %v1703 = vld [vmem:[%s1683 + $0x98] sm:$0xff]
    %v1704 = vld [vmem:[%s1683 + $0xa0] sm:$0xff]
    %v1705 = vld [vmem:[%s1683 + $0xa8] sm:$0xff]
    %v1706 = vld [vmem:[%s1683 + $0xb0] sm:$0xff]
    %v1707 = vld [vmem:[%s1683 + $0xb8] sm:$0xff]
    %v1708 = vld [vmem:[%s1683 + $0xc0] sm:$0xff]
    %v1709 = vld [vmem:[%s1683 + $0xc8] sm:$0xff]
    %v1710 = vld [vmem:[%s1683 + $0xd0] sm:$0xff]
    %v1711 = vld [vmem:[%s1683 + $0xd8] sm:$0xff]
    %v1712 = vld [vmem:[%s1683 + $0xe0] sm:$0xff]
    %v1713 = vld [vmem:[%s1683 + $0xe8] sm:$0xff]
    %v1714 = vld [vmem:[%s1683 + $0xf0] sm:$0xff]
    %v1715 = vld [vmem:[%s1683 + $0xf8] sm:$0xff]
    %v1716 = vld [vmem:[%s1683 + $0x100] sm:$0xff]
    %v1717 = vld [vmem:[%s1683 + $0x108] sm:$0xff]
    %v1718 = vld [vmem:[%s1683 + $0x110] sm:$0xff]
    %v1719 = vld [vmem:[%s1683 + $0x118] sm:$0xff]
    %v1720 = vld [vmem:[%s1683 + $0x120] sm:$0xff]
    %v1721 = vld [vmem:[%s1683 + $0x128] sm:$0xff]
    %v1722 = vld [vmem:[%s1683 + $0x130] sm:$0xff]
    %v1723 = vld [vmem:[%s1683 + $0x138] sm:$0xff]
    %v1724 = vld [vmem:[%s1683 + $0x140] sm:$0xff]
    %v1725 = vld [vmem:[%s1683 + $0x148] sm:$0xff]
    %v1726 = vld [vmem:[%s1683 + $0x150] sm:$0xff]
    %v1727 = vld [vmem:[%s1683 + $0x158] sm:$0xff]
    %v1728 = vld [vmem:[%s1683 + $0x160] sm:$0xff]
    %v1729 = vld [vmem:[%s1683 + $0x168] sm:$0xff]
    %v1730 = vld [vmem:[%s1683 + $0x170] sm:$0xff]
    %v1731 = vld [vmem:[%s1683 + $0x178] sm:$0xff]
    %v1732 = vld [vmem:[%s1683 + $0x180] sm:$0xff]
    %v1733 = vld [vmem:[%s1683 + $0x188] sm:$0xff]
    %v1734 = vld [vmem:[%s1683 + $0x190] sm:$0xff]
    %v1735 = vld [vmem:[%s1683 + $0x198] sm:$0xff]
    %v1736 = vld [vmem:[%s1683 + $0x1a0] sm:$0xff]
    %v1737 = vld [vmem:[%s1683 + $0x1a8] sm:$0xff]
    %v1738 = vld [vmem:[%s1683 + $0x1b0] sm:$0xff]
    %v1739 = vld [vmem:[%s1683 + $0x1b8] sm:$0xff]
    %v1740 = vld [vmem:[%s1683 + $0x1c0] sm:$0xff]
    %v1741 = vld [vmem:[%s1683 + $0x1c8] sm:$0xff]
    %v1742 = vld [vmem:[%s1683 + $0x1d0] sm:$0xff]
    %v1743 = vld [vmem:[%s1683 + $0x1d8] sm:$0xff]
    %v1744 = vld [vmem:[%s1683 + $0x1e0] sm:$0xff]
    %v1745 = vld [vmem:[%s1683 + $0x1e8] sm:$0xff]
    %v1746 = vld [vmem:[%s1683 + $0x1f0] sm:$0xff]
    %v1747 = vld [vmem:[%s1683 + $0x1f8] sm:$0xff]
    %v1748 = vld [vmem:[%s1683 + $0x200] sm:$0xff]
    %v1749 = vld [vmem:[%s1683 + $0x208] sm:$0xff]
    %v1750 = vld [vmem:[%s1683 + $0x210] sm:$0xff]
    %v1751 = vld [vmem:[%s1683 + $0x218] sm:$0xff]
    %v1752 = vld [vmem:[%s1683 + $0x220] sm:$0xff]
    %v1753 = vld [vmem:[%s1683 + $0x228] sm:$0xff]
    %v1754 = vld [vmem:[%s1683 + $0x230] sm:$0xff]
    %v1755 = vld [vmem:[%s1683 + $0x238] sm:$0xff]
    %v1756 = vsel %vm85, %v1653, 0
    %v1758 = vsel %vm85, %v1659, 0
    %v1760 = vsel %vm85, %v1668, 0
    %v1762 = vsel %vm85, %v1674, 0
    %1764 = vmatprep.subr.mxu0 %v1685
    %1765 = vmatpush1.msra.mxu0 %v1684
    %1766 = vmatprep.subr.mxu0 %v1687
    %1767 = vmatpush1.msra.mxu0 %v1686
    %1768 = vmatprep.subr.mxu0 %v1689
    %1769 = vmatpush1.msra.mxu0 %v1688
    %1770 = vmatprep.subr.mxu0 %v1691
    %1771 = vmatpush1.msra.mxu0 %v1690
    %1772 = vmatprep.subr.mxu0 %v1693
    %1773 = vmatpush1.msra.mxu0 %v1692
    %1774 = vmatprep.subr.mxu0 %v1695
    %1775 = vmatpush1.msra.mxu0 %v1694
    %1776 = vmatprep.subr.mxu0 %v1697
    %1777 = vmatpush1.msra.mxu0 %v1696
    %1778 = vmatprep.subr.mxu0 %v1699
    %1779 = vmatpush1.msra.mxu0 %v1698
    %1780 = vmatprep.subr.mxu0 %v1701
    %1781 = vmatpush1.msra.mxu0 %v1700
    %1782 = vmatprep.subr.mxu0 %v1703
    %1783 = vmatpush1.msra.mxu0 %v1702
    %1784 = vmatprep.subr.mxu0 %v1705
    %1785 = vmatpush1.msra.mxu0 %v1704
    %1786 = vmatprep.subr.mxu0 %v1707
    %1787 = vmatpush1.msra.mxu0 %v1706
    %1788 = vmatprep.subr.mxu0 %v1709
    %1789 = vmatpush1.msra.mxu0 %v1708
    %1790 = vmatprep.subr.mxu0 %v1711
    %1791 = vmatpush1.msra.mxu0 %v1710
    %1792 = vmatprep.subr.mxu0 %v1713
    %1793 = vmatpush1.msra.mxu0 %v1712
    %1794 = vmatprep.subr.mxu0 %v1715
    %1795 = vmatpush1.msra.mxu0 %v1714
    %1796 = vmatprep.subr.mxu0 %v1717
    %1797 = vmatpush1.msra.mxu0 %v1716
    %1798 = vmatprep.subr.mxu0 %v1719
    %1799 = vmatpush1.msra.mxu0 %v1718
    %1800 = vmatprep.subr.mxu0 %v1721
    %1801 = vmatpush1.msra.mxu0 %v1720
    %1802 = vmatprep.subr.mxu0 %v1723
    %1803 = vmatpush1.msra.mxu0 %v1722
    %1804 = vmatprep.subr.mxu0 %v1725
    %1805 = vmatpush1.msra.mxu0 %v1724
    %1806 = vmatprep.subr.mxu0 %v1727
    %1807 = vmatpush1.msra.mxu0 %v1726
    %1808 = vmatprep.subr.mxu0 %v1729
    %1809 = vmatpush1.msra.mxu0 %v1728
    %1810 = vmatprep.subr.mxu0 %v1731
    %1811 = vmatpush1.msra.mxu0 %v1730
    %1812 = vmatprep.subr.mxu0 %v1733
    %1813 = vmatpush1.msra.mxu0 %v1732
    %1814 = vmatprep.subr.mxu0 %v1735
    %1815 = vmatpush1.msra.mxu0 %v1734
    %1816 = vmatprep.subr.mxu0 %v1737
    %1817 = vmatpush1.msra.mxu0 %v1736
    %1818 = vmatprep.subr.mxu0 %v1739
    %1819 = vmatpush1.msra.mxu0 %v1738
    %1820 = vmatprep.subr.mxu0 %v1741
    %1821 = vmatpush1.msra.mxu0 %v1740
    %1822 = vmatprep.subr.mxu0 %v1743
    %1823 = vmatpush1.msra.mxu0 %v1742
    %1824 = vmatprep.subr.mxu0 %v1745
    %1825 = vmatpush1.msra.mxu0 %v1744
    %1826 = vmatprep.subr.mxu0 %v1747
    %1827 = vmatpush1.msra.mxu0 %v1746
    %1828 = vmatprep.mubr.f32.mxu0 %v1650
    %1829 = vmatmul.mubr.f32.gmra.mrb[0].mxu0 %v1647
    %v1830 = vpop.f32.mrb[0].mxu0
    %v1831 = vadd.f32 0.0, %v1830
    %v1832 = vpop.f32.mrb[0].mxu0
    %v1833 = vadd.f32 0.0, %v1832
    %1834 = vmatprep.mubr.f32.mxu0 %v1657
    %1835 = vmatmul.mubr.f32.gmra.mrb[0].mxu0 %v1655
    %v1836 = vpop.f32.mrb[0].mxu0
    %v1837 = vadd.f32 0.0, %v1836
    %v1838 = vpop.f32.mrb[0].mxu0
    %v1839 = vadd.f32 0.0, %v1838
    %1840 = vmatprep.mubr.f32.mxu0 %v1665
    %1841 = vmatmul.mubr.f32.gmra.mrb[0].mxu0 %v1662
    %v1842 = vpop.f32.mrb[0].mxu0
    %v1843 = vadd.f32 0.0, %v1842
    %v1844 = vpop.f32.mrb[0].mxu0
    %v1845 = vadd.f32 0.0, %v1844
    %1846 = vmatprep.mubr.f32.mxu0 %v1672
    %1847 = vmatmul.mubr.f32.gmra.mrb[0].mxu0 %v1670
    %v1848 = vpop.f32.mrb[0].mxu0
    %v1849 = vadd.f32 0.0, %v1848
    %v1850 = vpop.f32.mrb[0].mxu0
    %v1851 = vadd.f32 0.0, %v1850
    %1852 = vdwg.mxu0
    %1853 = vmatprep.subr.mxu0 %v1749
    %1854 = vmatpush1.msra.mxu0 %v1748
    %1855 = vmatprep.subr.mxu0 %v1751
    %1856 = vmatpush1.msra.mxu0 %v1750
    %1857 = vmatprep.subr.mxu0 %v1753
    %1858 = vmatpush1.msra.mxu0 %v1752
    %1859 = vmatprep.subr.mxu0 %v1755
    %1860 = vmatpush1.msra.mxu0 %v1754
    %1861 = vmatprep.subr.mxu0 0.0
    %1862 = vmatpush1.msra.mxu0 0.0
    %1863 = vmatprep.subr.mxu0 0.0
    %1864 = vmatpush1.msra.mxu0 0.0
    %1865 = vmatprep.subr.mxu0 0.0
    %1866 = vmatpush1.msra.mxu0 0.0
    %1867 = vmatprep.subr.mxu0 0.0
    %1868 = vmatpush1.msra.mxu0 0.0
    %1869 = vmatprep.subr.mxu0 0.0
    %1870 = vmatpush1.msra.mxu0 0.0
    %1871 = vmatprep.subr.mxu0 0.0
    %1872 = vmatpush1.msra.mxu0 0.0
    %1873 = vmatprep.subr.mxu0 0.0
    %1874 = vmatpush1.msra.mxu0 0.0
    %1875 = vmatprep.subr.mxu0 0.0
    %1876 = vmatpush1.msra.mxu0 0.0
    %1877 = vmatprep.subr.mxu0 0.0
    %1878 = vmatpush1.msra.mxu0 0.0
    %1879 = vmatprep.subr.mxu0 0.0
    %1880 = vmatpush1.msra.mxu0 0.0
    %1881 = vmatprep.subr.mxu0 0.0
    %1882 = vmatpush1.msra.mxu0 0.0
    %1883 = vmatprep.subr.mxu0 0.0
    %1884 = vmatpush1.msra.mxu0 0.0
    %1885 = vmatprep.subr.mxu0 0.0
    %1886 = vmatpush1.msra.mxu0 0.0
    %1887 = vmatprep.subr.mxu0 0.0
    %1888 = vmatpush1.msra.mxu0 0.0
    %1889 = vmatprep.subr.mxu0 0.0
    %1890 = vmatpush1.msra.mxu0 0.0
    %1891 = vmatprep.subr.mxu0 0.0
    %1892 = vmatpush1.msra.mxu0 0.0
    %1893 = vmatprep.subr.mxu0 0.0
    %1894 = vmatpush1.msra.mxu0 0.0
    %1895 = vmatprep.subr.mxu0 0.0
    %1896 = vmatpush1.msra.mxu0 0.0
    %1897 = vmatprep.subr.mxu0 0.0
    %1898 = vmatpush1.msra.mxu0 0.0
    %1899 = vmatprep.subr.mxu0 0.0
    %1900 = vmatpush1.msra.mxu0 0.0
    %1901 = vmatprep.subr.mxu0 0.0
    %1902 = vmatpush1.msra.mxu0 0.0
    %1903 = vmatprep.subr.mxu0 0.0
    %1904 = vmatpush1.msra.mxu0 0.0
    %1905 = vmatprep.subr.mxu0 0.0
    %1906 = vmatpush1.msra.mxu0 0.0
    %1907 = vmatprep.subr.mxu0 0.0
    %1908 = vmatpush1.msra.mxu0 0.0
    %1909 = vmatprep.subr.mxu0 0.0
    %1910 = vmatpush1.msra.mxu0 0.0
    %1911 = vmatprep.subr.mxu0 0.0
    %1912 = vmatpush1.msra.mxu0 0.0
    %1913 = vmatprep.subr.mxu0 0.0
    %1914 = vmatpush1.msra.mxu0 0.0
    %1915 = vmatprep.subr.mxu0 0.0
    %1916 = vmatpush1.msra.mxu0 0.0
    %1917 = vmatprep.mubr.f32.mxu0 0.0
    %1918 = vmatmul.mubr.f32.gmra.mrb[0].mxu0 %v1756
    %v1919 = vpop.f32.mrb[0].mxu0
    %v1920 = vadd.f32 %v1831, %v1919
    %v1921 = vpop.f32.mrb[0].mxu0
    %v1922 = vadd.f32 %v1833, %v1921
    %1923 = vmatprep.mubr.f32.mxu0 0.0
    %1924 = vmatmul.mubr.f32.gmra.mrb[0].mxu0 %v1758
    %v1925 = vpop.f32.mrb[0].mxu0
    %v1926 = vadd.f32 %v1837, %v1925
    %v1927 = vpop.f32.mrb[0].mxu0
    %v1928 = vadd.f32 %v1839, %v1927
    %1929 = vmatprep.mubr.f32.mxu0 0.0
    %1930 = vmatmul.mubr.f32.gmra.mrb[0].mxu0 %v1760
    %v1931 = vpop.f32.mrb[0].mxu0
    %v1932 = vadd.f32 %v1843, %v1931
    %v1933 = vpop.f32.mrb[0].mxu0
    %v1934 = vadd.f32 %v1845, %v1933
    %1935 = vmatprep.mubr.f32.mxu0 0.0
    %1936 = vmatmul.mubr.f32.gmra.mrb[0].mxu0 %v1762
    %v1937 = vpop.f32.mrb[0].mxu0
    %v1938 = vadd.f32 %v1849, %v1937
    %v1939 = vpop.f32.mrb[0].mxu0
    %v1940 = vadd.f32 %v1851, %v1939
    %1941 = vdwg.mxu0
    %v1943 = vsel %vm85, %v1532, 0
    %v1945 = vsel %vm85, %v1535, 0
    %v1948 = vsel %vm85, %v1538, 0
    %v1950 = vsel %vm85, %v1541, 0
    %1952 = vmatprep.subr.mxu0 %v1544
    %1953 = vmatpush1.msra.mxu0 %v1543
    %1954 = vmatprep.subr.mxu0 %v1546
    %1955 = vmatpush1.msra.mxu0 %v1545
    %1956 = vmatprep.subr.mxu0 %v1548
    %1957 = vmatpush1.msra.mxu0 %v1547
    %1958 = vmatprep.subr.mxu0 %v1550
    %1959 = vmatpush1.msra.mxu0 %v1549
    %1960 = vmatprep.subr.mxu0 %v1552
    %1961 = vmatpush1.msra.mxu0 %v1551
    %1962 = vmatprep.subr.mxu0 %v1554
    %1963 = vmatpush1.msra.mxu0 %v1553
    %1964 = vmatprep.subr.mxu0 %v1556
    %1965 = vmatpush1.msra.mxu0 %v1555
    %1966 = vmatprep.subr.mxu0 %v1558
    %1967 = vmatpush1.msra.mxu0 %v1557
    %1968 = vmatprep.subr.mxu0 %v1560
    %1969 = vmatpush1.msra.mxu0 %v1559
    %1970 = vmatprep.subr.mxu0 %v1562
    %1971 = vmatpush1.msra.mxu0 %v1561
    %1972 = vmatprep.subr.mxu0 %v1564
    %1973 = vmatpush1.msra.mxu0 %v1563
    %1974 = vmatprep.subr.mxu0 %v1566
    %1975 = vmatpush1.msra.mxu0 %v1565
    %1976 = vmatprep.subr.mxu0 %v1568
    %1977 = vmatpush1.msra.mxu0 %v1567
    %1978 = vmatprep.subr.mxu0 %v1570
    %1979 = vmatpush1.msra.mxu0 %v1569
    %1980 = vmatprep.subr.mxu0 %v1572
    %1981 = vmatpush1.msra.mxu0 %v1571
    %1982 = vmatprep.subr.mxu0 %v1574
    %1983 = vmatpush1.msra.mxu0 %v1573
    %1984 = vmatprep.subr.mxu0 %v1576
    %1985 = vmatpush1.msra.mxu0 %v1575
    %1986 = vmatprep.subr.mxu0 %v1578
    %1987 = vmatpush1.msra.mxu0 %v1577
    %1988 = vmatprep.subr.mxu0 %v1580
    %1989 = vmatpush1.msra.mxu0 %v1579
    %1990 = vmatprep.subr.mxu0 %v1582
    %1991 = vmatpush1.msra.mxu0 %v1581
    %1992 = vmatprep.subr.mxu0 %v1584
    %1993 = vmatpush1.msra.mxu0 %v1583
    %1994 = vmatprep.subr.mxu0 %v1586
    %1995 = vmatpush1.msra.mxu0 %v1585
    %1996 = vmatprep.subr.mxu0 %v1588
    %1997 = vmatpush1.msra.mxu0 %v1587
    %1998 = vmatprep.subr.mxu0 %v1590
    %1999 = vmatpush1.msra.mxu0 %v1589
    %2000 = vmatprep.subr.mxu0 %v1592
    %2001 = vmatpush1.msra.mxu0 %v1591
    %2002 = vmatprep.subr.mxu0 %v1594
    %2003 = vmatpush1.msra.mxu0 %v1593
    %2004 = vmatprep.subr.mxu0 %v1596
    %2005 = vmatpush1.msra.mxu0 %v1595
    %2006 = vmatprep.subr.mxu0 %v1598
    %2007 = vmatpush1.msra.mxu0 %v1597
    %2008 = vmatprep.subr.mxu0 %v1600
    %2009 = vmatpush1.msra.mxu0 %v1599
    %2010 = vmatprep.subr.mxu0 %v1602
    %2011 = vmatpush1.msra.mxu0 %v1601
    %2012 = vmatprep.subr.mxu0 %v1604
    %2013 = vmatpush1.msra.mxu0 %v1603
    %2014 = vmatprep.subr.mxu0 %v1606
    %2015 = vmatpush1.msra.mxu0 %v1605
    %2016 = vmatprep.mubr.f32.mxu0 %v1531
    %2017 = vmatmul.mubr.f32.gmra.mrb[0].mxu0 %v1530
    %v2018 = vpop.f32.mrb[0].mxu0
    %v2019 = vadd.f32 %v1920, %v2018
    %v2020 = vpop.f32.mrb[0].mxu0
    %v2021 = vadd.f32 %v1922, %v2020
    %2022 = vmatprep.mubr.f32.mxu0 %v1534
    %2023 = vmatmul.mubr.f32.gmra.mrb[0].mxu0 %v1533
    %v2024 = vpop.f32.mrb[0].mxu0
    %v2025 = vadd.f32 %v1926, %v2024
    %v2026 = vpop.f32.mrb[0].mxu0
    %v2027 = vadd.f32 %v1928, %v2026
    %2028 = vmatprep.mubr.f32.mxu0 %v1537
    %2029 = vmatmul.mubr.f32.gmra.mrb[0].mxu0 %v1536
    %v2030 = vpop.f32.mrb[0].mxu0
    %v2031 = vadd.f32 %v1932, %v2030
    %v2032 = vpop.f32.mrb[0].mxu0
    %v2033 = vadd.f32 %v1934, %v2032
    %2034 = vmatprep.mubr.f32.mxu0 %v1540
    %2035 = vmatmul.mubr.f32.gmra.mrb[0].mxu0 %v1539
    %v2036 = vpop.f32.mrb[0].mxu0
    %v2037 = vadd.f32 %v1938, %v2036
    %v2038 = vpop.f32.mrb[0].mxu0
    %v2039 = vadd.f32 %v1940, %v2038
    %2040 = vdwg.mxu0
    %2041 = vmatprep.subr.mxu0 %v1608
    %2042 = vmatpush1.msra.mxu0 %v1607
    %2043 = vmatprep.subr.mxu0 %v1610
    %2044 = vmatpush1.msra.mxu0 %v1609
    %2045 = vmatprep.subr.mxu0 %v1612
    %2046 = vmatpush1.msra.mxu0 %v1611
    %2047 = vmatprep.subr.mxu0 %v1614
    %2048 = vmatpush1.msra.mxu0 %v1613
    %2049 = vmatprep.subr.mxu0 0.0
    %2050 = vmatpush1.msra.mxu0 0.0
    %2051 = vmatprep.subr.mxu0 0.0
    %2052 = vmatpush1.msra.mxu0 0.0
    %2053 = vmatprep.subr.mxu0 0.0
    %2054 = vmatpush1.msra.mxu0 0.0
    %2055 = vmatprep.subr.mxu0 0.0
    %2056 = vmatpush1.msra.mxu0 0.0
    %2057 = vmatprep.subr.mxu0 0.0
    %2058 = vmatpush1.msra.mxu0 0.0
    %2059 = vmatprep.subr.mxu0 0.0
    %2060 = vmatpush1.msra.mxu0 0.0
    %2061 = vmatprep.subr.mxu0 0.0
    %2062 = vmatpush1.msra.mxu0 0.0
    %2063 = vmatprep.subr.mxu0 0.0
    %2064 = vmatpush1.msra.mxu0 0.0
    %2065 = vmatprep.subr.mxu0 0.0
    %2066 = vmatpush1.msra.mxu0 0.0
    %2067 = vmatprep.subr.mxu0 0.0
    %2068 = vmatpush1.msra.mxu0 0.0
    %2069 = vmatprep.subr.mxu0 0.0
    %2070 = vmatpush1.msra.mxu0 0.0
    %2071 = vmatprep.subr.mxu0 0.0
    %2072 = vmatpush1.msra.mxu0 0.0
    %2073 = vmatprep.subr.mxu0 0.0
    %2074 = vmatpush1.msra.mxu0 0.0
    %2075 = vmatprep.subr.mxu0 0.0
    %2076 = vmatpush1.msra.mxu0 0.0
    %2077 = vmatprep.subr.mxu0 0.0
    %2078 = vmatpush1.msra.mxu0 0.0
    %2079 = vmatprep.subr.mxu0 0.0
    %2080 = vmatpush1.msra.mxu0 0.0
    %2081 = vmatprep.subr.mxu0 0.0
    %2082 = vmatpush1.msra.mxu0 0.0
    %2083 = vmatprep.subr.mxu0 0.0
    %2084 = vmatpush1.msra.mxu0 0.0
    %2085 = vmatprep.subr.mxu0 0.0
    %2086 = vmatpush1.msra.mxu0 0.0
    %2087 = vmatprep.subr.mxu0 0.0
    %2088 = vmatpush1.msra.mxu0 0.0
    %2089 = vmatprep.subr.mxu0 0.0
    %2090 = vmatpush1.msra.mxu0 0.0
    %2091 = vmatprep.subr.mxu0 0.0
    %2092 = vmatpush1.msra.mxu0 0.0
    %2093 = vmatprep.subr.mxu0 0.0
    %2094 = vmatpush1.msra.mxu0 0.0
    %2095 = vmatprep.subr.mxu0 0.0
    %2096 = vmatpush1.msra.mxu0 0.0
    %2097 = vmatprep.subr.mxu0 0.0
    %2098 = vmatpush1.msra.mxu0 0.0
    %2099 = vmatprep.subr.mxu0 0.0
    %2100 = vmatpush1.msra.mxu0 0.0
    %2101 = vmatprep.subr.mxu0 0.0
    %2102 = vmatpush1.msra.mxu0 0.0
    %2103 = vmatprep.subr.mxu0 0.0
    %2104 = vmatpush1.msra.mxu0 0.0
    %2105 = vmatprep.mubr.f32.mxu0 0.0
    %2106 = vmatmul.mubr.f32.gmra.mrb[0].mxu0 %v1943
    %v2107 = vpop.f32.mrb[0].mxu0
    %v2108 = vadd.f32 %v2019, %v2107
    %v2109 = vpop.f32.mrb[0].mxu0
    %v2110 = vadd.f32 %v2021, %v2109
    %2111 = vmatprep.mubr.f32.mxu0 0.0
    %2112 = vmatmul.mubr.f32.gmra.mrb[0].mxu0 %v1945
    %v2113 = vpop.f32.mrb[0].mxu0
    %v2114 = vadd.f32 %v2025, %v2113
    %v2115 = vpop.f32.mrb[0].mxu0
    %v2116 = vadd.f32 %v2027, %v2115
    %2117 = vmatprep.mubr.f32.mxu0 0.0
    %2118 = vmatmul.mubr.f32.gmra.mrb[0].mxu0 %v1948
    %v2119 = vpop.f32.mrb[0].mxu0
    %v2120 = vadd.f32 %v2031, %v2119
    %v2121 = vpop.f32.mrb[0].mxu0
    %v2122 = vadd.f32 %v2033, %v2121
    %2123 = vmatprep.mubr.f32.mxu0 0.0
    %2124 = vmatmul.mubr.f32.gmra.mrb[0].mxu0 %v1950
    %v2125 = vpop.f32.mrb[0].mxu0
    %v2126 = vadd.f32 %v2037, %v2125
    %v2127 = vpop.f32.mrb[0].mxu0
    %v2128 = vadd.f32 %v2039, %v2127
    %2129 = vdwg.mxu0
    %v2130 = vld [vmem:[#allocation2] sm:$0xfc]
    %v2131 = vld [vmem:[#allocation2 + $0x8] sm:$0xfc]
    %v2132 = vld [vmem:[#allocation2 + $0x10] sm:$0xfc]
    %v2133 = vld [vmem:[#allocation2 + $0x30] sm:$0x3]
    %v2134 = vld [vmem:[#allocation2 + $0x38] sm:$0x3]
    %v2135 = vld [vmem:[#allocation2 + $0x40] sm:$0x3]
    %v2136 = vld [vmem:[#allocation2 + $0x48] sm:$0xfc]
    %v2137 = vld [vmem:[#allocation2 + $0x50] sm:$0xfc]
    %v2138 = vld [vmem:[#allocation2 + $0x58] sm:$0xfc]
    %v2139 = vld [vmem:[#allocation2 + $0x78] sm:$0x3]
    %v2140 = vld [vmem:[#allocation2 + $0x80] sm:$0x3]
    %v2141 = vld [vmem:[#allocation2 + $0x88] sm:$0x3]
    %v2154 = vrot.slane %v2130, 2
    %v2155 = vrot.slane %v1533, 2
    %v2156 = vsel %vm828, %v2154, %v2155
    %v2157 = vrot.slane %v2131, 2
    %v2158 = vrot.slane %v1534, 2
    %v2159 = vsel %vm828, %v2157, %v2158
    %v2160 = vrot.slane %v2132, 2
    %v2161 = vrot.slane %v1535, 2
    %v2162 = vsel %vm828, %v2160, %v2161
    %v2163 = vrot.slane %v2133, 2
    %v2164 = vsel %vm828, %v2155, %v2163
    %v2165 = vrot.slane %v2134, 2
    %v2166 = vsel %vm828, %v2158, %v2165
    %v2167 = vrot.slane %v2135, 2
    %v2168 = vsel %vm828, %v2161, %v2167
    %v2169 = vrot.slane %v2136, 2
    %v2170 = vrot.slane %v1539, 2
    %v2171 = vsel %vm828, %v2169, %v2170
    %v2172 = vrot.slane %v2137, 2
    %v2173 = vrot.slane %v1540, 2
    %v2174 = vsel %vm828, %v2172, %v2173
    %v2175 = vrot.slane %v2138, 2
    %v2176 = vrot.slane %v1541, 2
    %v2177 = vsel %vm828, %v2175, %v2176
    %v2178 = vrot.slane %v2139, 2
    %v2179 = vsel %vm828, %v2170, %v2178
    %v2180 = vrot.slane %v2140, 2
    %v2181 = vsel %vm828, %v2173, %v2180
    %v2182 = vrot.slane %v2141, 2
    %v2183 = vsel %vm828, %v2176, %v2182
    %s2192 = scalar_lea.vmem [#allocation6], 2880
    %v2193 = vld [vmem:[%s2192] sm:$0xff]
    %v2194 = vld [vmem:[%s2192 + $0x8] sm:$0xff]
    %v2195 = vld [vmem:[%s2192 + $0x10] sm:$0xff]
    %v2196 = vld [vmem:[%s2192 + $0x18] sm:$0xff]
    %v2197 = vld [vmem:[%s2192 + $0x20] sm:$0xff]
    %v2198 = vld [vmem:[%s2192 + $0x28] sm:$0xff]
    %v2199 = vld [vmem:[%s2192 + $0x30] sm:$0xff]
    %v2200 = vld [vmem:[%s2192 + $0x38] sm:$0xff]
    %v2201 = vld [vmem:[%s2192 + $0x40] sm:$0xff]
    %v2202 = vld [vmem:[%s2192 + $0x48] sm:$0xff]
    %v2203 = vld [vmem:[%s2192 + $0x50] sm:$0xff]
    %v2204 = vld [vmem:[%s2192 + $0x58] sm:$0xff]
    %v2205 = vld [vmem:[%s2192 + $0x60] sm:$0xff]
    %v2206 = vld [vmem:[%s2192 + $0x68] sm:$0xff]
    %v2207 = vld [vmem:[%s2192 + $0x70] sm:$0xff]
    %v2208 = vld [vmem:[%s2192 + $0x78] sm:$0xff]
    %v2209 = vld [vmem:[%s2192 + $0x80] sm:$0xff]
    %v2210 = vld [vmem:[%s2192 + $0x88] sm:$0xff]
    %v2211 = vld [vmem:[%s2192 + $0x90] sm:$0xff]
    %v2212 = vld [vmem:[%s2192 + $0x98] sm:$0xff]
    %v2213 = vld [vmem:[%s2192 + $0xa0] sm:$0xff]
    %v2214 = vld [vmem:[%s2192 + $0xa8] sm:$0xff]
    %v2215 = vld [vmem:[%s2192 + $0xb0] sm:$0xff]
    %v2216 = vld [vmem:[%s2192 + $0xb8] sm:$0xff]
    %v2217 = vld [vmem:[%s2192 + $0xc0] sm:$0xff]
    %v2218 = vld [vmem:[%s2192 + $0xc8] sm:$0xff]
    %v2219 = vld [vmem:[%s2192 + $0xd0] sm:$0xff]
    %v2220 = vld [vmem:[%s2192 + $0xd8] sm:$0xff]
    %v2221 = vld [vmem:[%s2192 + $0xe0] sm:$0xff]
    %v2222 = vld [vmem:[%s2192 + $0xe8] sm:$0xff]
    %v2223 = vld [vmem:[%s2192 + $0xf0] sm:$0xff]
    %v2224 = vld [vmem:[%s2192 + $0xf8] sm:$0xff]
    %v2225 = vld [vmem:[%s2192 + $0x100] sm:$0xff]
    %v2226 = vld [vmem:[%s2192 + $0x108] sm:$0xff]
    %v2227 = vld [vmem:[%s2192 + $0x110] sm:$0xff]
    %v2228 = vld [vmem:[%s2192 + $0x118] sm:$0xff]
    %v2229 = vld [vmem:[%s2192 + $0x120] sm:$0xff]
    %v2230 = vld [vmem:[%s2192 + $0x128] sm:$0xff]
    %v2231 = vld [vmem:[%s2192 + $0x130] sm:$0xff]
    %v2232 = vld [vmem:[%s2192 + $0x138] sm:$0xff]
    %v2233 = vld [vmem:[%s2192 + $0x140] sm:$0xff]
    %v2234 = vld [vmem:[%s2192 + $0x148] sm:$0xff]
    %v2235 = vld [vmem:[%s2192 + $0x150] sm:$0xff]
    %v2236 = vld [vmem:[%s2192 + $0x158] sm:$0xff]
    %v2237 = vld [vmem:[%s2192 + $0x160] sm:$0xff]
    %v2238 = vld [vmem:[%s2192 + $0x168] sm:$0xff]
    %v2239 = vld [vmem:[%s2192 + $0x170] sm:$0xff]
    %v2240 = vld [vmem:[%s2192 + $0x178] sm:$0xff]
    %v2241 = vld [vmem:[%s2192 + $0x180] sm:$0xff]
    %v2242 = vld [vmem:[%s2192 + $0x188] sm:$0xff]
    %v2243 = vld [vmem:[%s2192 + $0x190] sm:$0xff]
    %v2244 = vld [vmem:[%s2192 + $0x198] sm:$0xff]
    %v2245 = vld [vmem:[%s2192 + $0x1a0] sm:$0xff]
    %v2246 = vld [vmem:[%s2192 + $0x1a8] sm:$0xff]
    %v2247 = vld [vmem:[%s2192 + $0x1b0] sm:$0xff]
    %v2248 = vld [vmem:[%s2192 + $0x1b8] sm:$0xff]
    %v2249 = vld [vmem:[%s2192 + $0x1c0] sm:$0xff]
    %v2250 = vld [vmem:[%s2192 + $0x1c8] sm:$0xff]
    %v2251 = vld [vmem:[%s2192 + $0x1d0] sm:$0xff]
    %v2252 = vld [vmem:[%s2192 + $0x1d8] sm:$0xff]
    %v2253 = vld [vmem:[%s2192 + $0x1e0] sm:$0xff]
    %v2254 = vld [vmem:[%s2192 + $0x1e8] sm:$0xff]
    %v2255 = vld [vmem:[%s2192 + $0x1f0] sm:$0xff]
    %v2256 = vld [vmem:[%s2192 + $0x1f8] sm:$0xff]
    %v2257 = vld [vmem:[%s2192 + $0x200] sm:$0xff]
    %v2258 = vld [vmem:[%s2192 + $0x208] sm:$0xff]
    %v2259 = vld [vmem:[%s2192 + $0x210] sm:$0xff]
    %v2260 = vld [vmem:[%s2192 + $0x218] sm:$0xff]
    %v2261 = vld [vmem:[%s2192 + $0x220] sm:$0xff]
    %v2262 = vld [vmem:[%s2192 + $0x228] sm:$0xff]
    %v2263 = vld [vmem:[%s2192 + $0x230] sm:$0xff]
    %v2264 = vld [vmem:[%s2192 + $0x238] sm:$0xff]
    %v2265 = vsel %vm85, %v2162, 0
    %v2267 = vsel %vm85, %v2168, 0
    %v2269 = vsel %vm85, %v2177, 0
    %v2271 = vsel %vm85, %v2183, 0
    %2273 = vmatprep.subr.mxu0 %v2194
    %2274 = vmatpush1.msra.mxu0 %v2193
    %2275 = vmatprep.subr.mxu0 %v2196
    %2276 = vmatpush1.msra.mxu0 %v2195
    %2277 = vmatprep.subr.mxu0 %v2198
    %2278 = vmatpush1.msra.mxu0 %v2197
    %2279 = vmatprep.subr.mxu0 %v2200
    %2280 = vmatpush1.msra.mxu0 %v2199
    %2281 = vmatprep.subr.mxu0 %v2202
    %2282 = vmatpush1.msra.mxu0 %v2201
    %2283 = vmatprep.subr.mxu0 %v2204
    %2284 = vmatpush1.msra.mxu0 %v2203
    %2285 = vmatprep.subr.mxu0 %v2206
    %2286 = vmatpush1.msra.mxu0 %v2205
    %2287 = vmatprep.subr.mxu0 %v2208
    %2288 = vmatpush1.msra.mxu0 %v2207
    %2289 = vmatprep.subr.mxu0 %v2210
    %2290 = vmatpush1.msra.mxu0 %v2209
    %2291 = vmatprep.subr.mxu0 %v2212
    %2292 = vmatpush1.msra.mxu0 %v2211
    %2293 = vmatprep.subr.mxu0 %v2214
    %2294 = vmatpush1.msra.mxu0 %v2213
    %2295 = vmatprep.subr.mxu0 %v2216
    %2296 = vmatpush1.msra.mxu0 %v2215
    %2297 = vmatprep.subr.mxu0 %v2218
    %2298 = vmatpush1.msra.mxu0 %v2217
    %2299 = vmatprep.subr.mxu0 %v2220
    %2300 = vmatpush1.msra.mxu0 %v2219
    %2301 = vmatprep.subr.mxu0 %v2222
    %2302 = vmatpush1.msra.mxu0 %v2221
    %2303 = vmatprep.subr.mxu0 %v2224
    %2304 = vmatpush1.msra.mxu0 %v2223
    %2305 = vmatprep.subr.mxu0 %v2226
    %2306 = vmatpush1.msra.mxu0 %v2225
    %2307 = vmatprep.subr.mxu0 %v2228
    %2308 = vmatpush1.msra.mxu0 %v2227
    %2309 = vmatprep.subr.mxu0 %v2230
    %2310 = vmatpush1.msra.mxu0 %v2229
    %2311 = vmatprep.subr.mxu0 %v2232
    %2312 = vmatpush1.msra.mxu0 %v2231
    %2313 = vmatprep.subr.mxu0 %v2234
    %2314 = vmatpush1.msra.mxu0 %v2233
    %2315 = vmatprep.subr.mxu0 %v2236
    %2316 = vmatpush1.msra.mxu0 %v2235
    %2317 = vmatprep.subr.mxu0 %v2238
    %2318 = vmatpush1.msra.mxu0 %v2237
    %2319 = vmatprep.subr.mxu0 %v2240
    %2320 = vmatpush1.msra.mxu0 %v2239
    %2321 = vmatprep.subr.mxu0 %v2242
    %2322 = vmatpush1.msra.mxu0 %v2241
    %2323 = vmatprep.subr.mxu0 %v2244
    %2324 = vmatpush1.msra.mxu0 %v2243
    %2325 = vmatprep.subr.mxu0 %v2246
    %2326 = vmatpush1.msra.mxu0 %v2245
    %2327 = vmatprep.subr.mxu0 %v2248
    %2328 = vmatpush1.msra.mxu0 %v2247
    %2329 = vmatprep.subr.mxu0 %v2250
    %2330 = vmatpush1.msra.mxu0 %v2249
    %2331 = vmatprep.subr.mxu0 %v2252
    %2332 = vmatpush1.msra.mxu0 %v2251
    %2333 = vmatprep.subr.mxu0 %v2254
    %2334 = vmatpush1.msra.mxu0 %v2253
    %2335 = vmatprep.subr.mxu0 %v2256
    %2336 = vmatpush1.msra.mxu0 %v2255
    %2337 = vmatprep.mubr.f32.mxu0 %v2159
    %2338 = vmatmul.mubr.f32.gmra.mrb[0].mxu0 %v2156
    %v2339 = vpop.f32.mrb[0].mxu0
    %v2340 = vadd.f32 0.0, %v2339
    %v2341 = vpop.f32.mrb[0].mxu0
    %v2342 = vadd.f32 0.0, %v2341
    %2343 = vmatprep.mubr.f32.mxu0 %v2166
    %2344 = vmatmul.mubr.f32.gmra.mrb[0].mxu0 %v2164
    %v2345 = vpop.f32.mrb[0].mxu0
    %v2346 = vadd.f32 0.0, %v2345
    %v2347 = vpop.f32.mrb[0].mxu0
    %v2348 = vadd.f32 0.0, %v2347
    %2349 = vmatprep.mubr.f32.mxu0 %v2174
    %2350 = vmatmul.mubr.f32.gmra.mrb[0].mxu0 %v2171
    %v2351 = vpop.f32.mrb[0].mxu0
    %v2352 = vadd.f32 0.0, %v2351
    %v2353 = vpop.f32.mrb[0].mxu0
    %v2354 = vadd.f32 0.0, %v2353
    %2355 = vmatprep.mubr.f32.mxu0 %v2181
    %2356 = vmatmul.mubr.f32.gmra.mrb[0].mxu0 %v2179
    %v2357 = vpop.f32.mrb[0].mxu0
    %v2358 = vadd.f32 0.0, %v2357
    %v2359 = vpop.f32.mrb[0].mxu0
    %v2360 = vadd.f32 0.0, %v2359
    %2361 = vdwg.mxu0
    %2362 = vmatprep.subr.mxu0 %v2258
    %2363 = vmatpush1.msra.mxu0 %v2257
    %2364 = vmatprep.subr.mxu0 %v2260
    %2365 = vmatpush1.msra.mxu0 %v2259
    %2366 = vmatprep.subr.mxu0 %v2262
    %2367 = vmatpush1.msra.mxu0 %v2261
    %2368 = vmatprep.subr.mxu0 %v2264
    %2369 = vmatpush1.msra.mxu0 %v2263
    %2370 = vmatprep.subr.mxu0 0.0
    %2371 = vmatpush1.msra.mxu0 0.0
    %2372 = vmatprep.subr.mxu0 0.0
    %2373 = vmatpush1.msra.mxu0 0.0
    %2374 = vmatprep.subr.mxu0 0.0
    %2375 = vmatpush1.msra.mxu0 0.0
    %2376 = vmatprep.subr.mxu0 0.0
    %2377 = vmatpush1.msra.mxu0 0.0
    %2378 = vmatprep.subr.mxu0 0.0
    %2379 = vmatpush1.msra.mxu0 0.0
    %2380 = vmatprep.subr.mxu0 0.0
    %2381 = vmatpush1.msra.mxu0 0.0
    %2382 = vmatprep.subr.mxu0 0.0
    %2383 = vmatpush1.msra.mxu0 0.0
    %2384 = vmatprep.subr.mxu0 0.0
    %2385 = vmatpush1.msra.mxu0 0.0
    %2386 = vmatprep.subr.mxu0 0.0
    %2387 = vmatpush1.msra.mxu0 0.0
    %2388 = vmatprep.subr.mxu0 0.0
    %2389 = vmatpush1.msra.mxu0 0.0
    %2390 = vmatprep.subr.mxu0 0.0
    %2391 = vmatpush1.msra.mxu0 0.0
    %2392 = vmatprep.subr.mxu0 0.0
    %2393 = vmatpush1.msra.mxu0 0.0
    %2394 = vmatprep.subr.mxu0 0.0
    %2395 = vmatpush1.msra.mxu0 0.0
    %2396 = vmatprep.subr.mxu0 0.0
    %2397 = vmatpush1.msra.mxu0 0.0
    %2398 = vmatprep.subr.mxu0 0.0
    %2399 = vmatpush1.msra.mxu0 0.0
    %2400 = vmatprep.subr.mxu0 0.0
    %2401 = vmatpush1.msra.mxu0 0.0
    %2402 = vmatprep.subr.mxu0 0.0
    %2403 = vmatpush1.msra.mxu0 0.0
    %2404 = vmatprep.subr.mxu0 0.0
    %2405 = vmatpush1.msra.mxu0 0.0
    %2406 = vmatprep.subr.mxu0 0.0
    %2407 = vmatpush1.msra.mxu0 0.0
    %2408 = vmatprep.subr.mxu0 0.0
    %2409 = vmatpush1.msra.mxu0 0.0
    %2410 = vmatprep.subr.mxu0 0.0
    %2411 = vmatpush1.msra.mxu0 0.0
    %2412 = vmatprep.subr.mxu0 0.0
    %2413 = vmatpush1.msra.mxu0 0.0
    %2414 = vmatprep.subr.mxu0 0.0
    %2415 = vmatpush1.msra.mxu0 0.0
    %2416 = vmatprep.subr.mxu0 0.0
    %2417 = vmatpush1.msra.mxu0 0.0
    %2418 = vmatprep.subr.mxu0 0.0
    %2419 = vmatpush1.msra.mxu0 0.0
    %2420 = vmatprep.subr.mxu0 0.0
    %2421 = vmatpush1.msra.mxu0 0.0
    %2422 = vmatprep.subr.mxu0 0.0
    %2423 = vmatpush1.msra.mxu0 0.0
    %2424 = vmatprep.subr.mxu0 0.0
    %2425 = vmatpush1.msra.mxu0 0.0
    %2426 = vmatprep.mubr.f32.mxu0 0.0
    %2427 = vmatmul.mubr.f32.gmra.mrb[0].mxu0 %v2265
    %v2428 = vpop.f32.mrb[0].mxu0
    %v2429 = vadd.f32 %v2340, %v2428
    %v2430 = vpop.f32.mrb[0].mxu0
    %v2431 = vadd.f32 %v2342, %v2430
    %2432 = vmatprep.mubr.f32.mxu0 0.0
    %2433 = vmatmul.mubr.f32.gmra.mrb[0].mxu0 %v2267
    %v2434 = vpop.f32.mrb[0].mxu0
    %v2435 = vadd.f32 %v2346, %v2434
    %v2436 = vpop.f32.mrb[0].mxu0
    %v2437 = vadd.f32 %v2348, %v2436
    %2438 = vmatprep.mubr.f32.mxu0 0.0
    %2439 = vmatmul.mubr.f32.gmra.mrb[0].mxu0 %v2269
    %v2440 = vpop.f32.mrb[0].mxu0
    %v2441 = vadd.f32 %v2352, %v2440
    %v2442 = vpop.f32.mrb[0].mxu0
    %v2443 = vadd.f32 %v2354, %v2442
    %2444 = vmatprep.mubr.f32.mxu0 0.0
    %2445 = vmatmul.mubr.f32.gmra.mrb[0].mxu0 %v2271
    %v2446 = vpop.f32.mrb[0].mxu0
    %v2447 = vadd.f32 %v2358, %v2446
    %v2448 = vpop.f32.mrb[0].mxu0
    %v2449 = vadd.f32 %v2360, %v2448
    %2450 = vdwg.mxu0
    %v2451 = vadd.f32 %v2108, %v2429
    %v2452 = vadd.f32 %v2110, %v2431
    %v2453 = vadd.f32 %v2114, %v2435
    %v2454 = vadd.f32 %v2116, %v2437
    %v2455 = vadd.f32 %v2120, %v2441
    %v2456 = vadd.f32 %v2122, %v2443
    %v2457 = vadd.f32 %v2126, %v2447
    %v2458 = vadd.f32 %v2128, %v2449
    %v2459 = vld [vmem:[#allocation8 + $0x1] sm:$0x1]
    %2461 = vrot.lane.b32.xlu0 %v2459, 16
    %v2462 = vpop.permute.xlu0 %2461
    %2464 = vrot.lane.b32.xlu0 %v2459, 32
    %v2465 = vpop.permute.xlu0 %2464
    %2467 = vrot.lane.b32.xlu0 %v2459, 48
    %v2468 = vpop.permute.xlu0 %2467
    %2470 = vrot.lane.b32.xlu0 %v2459, 64
    %v2471 = vpop.permute.xlu0 %2470
    %2473 = vrot.lane.b32.xlu0 %v2459, 80
    %v2474 = vpop.permute.xlu0 %2473
    %2476 = vrot.lane.b32.xlu0 %v2459, 96
    %v2477 = vpop.permute.xlu0 %2476
    %2479 = vrot.lane.b32.xlu0 %v2459, 112
    %v2480 = vpop.permute.xlu0 %2479
    %v2482 = vsel %vm156, %v2459, %v2462
    %v2483 = vsel %vm85, %v2482, %v2465
    %v2484 = vsel %vm1159, %v2483, %v2468
    %v2485 = vsel %vm1161, %v2484, %v2471
    %v2486 = vsel %vm1163, %v2485, %v2474
    %v2487 = vsel %vm1165, %v2486, %v2477
    %v2488 = vsel %vm1167, %v2487, %v2480
    %v2489 = vlaneseq
    %v2490 = vshrl.u32 %v2489, 7
    %v2491 = vsub.s32 0, %v2490
    %v2492 = vrot.slane %v2488, %v2491
    %v2493 = vadd.f32 %v2451, %v2492
    %v2494 = vadd.f32 %v2452, %v2492
    %v2495 = vadd.f32 %v2453, %v2492
    %v2496 = vadd.f32 %v2454, %v2492
    %v2497 = vadd.f32 %v2455, %v2492
    %v2498 = vadd.f32 %v2456, %v2492
    %v2499 = vadd.f32 %v2457, %v2492
    %v2500 = vadd.f32 %v2458, %v2492
    %v2501 = vadd.f32 %v2493, %v2495
    %v2502 = vadd.f32 %v2501, %v2497
    %v2503 = vadd.f32 %v2502, %v2499
    %v2504 = vrot.slane %v2503, 4
    %v2505 = vadd.f32 %v2503, %v2504
    %v2506 = vrot.slane %v2505, 2
    %v2507 = vadd.f32 %v2505, %v2506
    %v2508 = vrot.slane %v2507, 1
    %v2509 = vadd.f32 %v2507, %v2508
    %v2510 = vadd.f32 %v2494, %v2496
    %v2511 = vadd.f32 %v2510, %v2498
    %v2512 = vadd.f32 %v2511, %v2500
    %v2513 = vrot.slane %v2512, 4
    %v2514 = vadd.f32 %v2512, %v2513
    %v2515 = vrot.slane %v2514, 2
    %v2516 = vadd.f32 %v2514, %v2515
    %v2517 = vrot.slane %v2516, 1
    %v2518 = vadd.f32 %v2516, %v2517
    %v2519 = vmul.f32 %v2493, %v2493
    %v2520 = vmul.f32 %v2494, %v2494
    %v2521 = vmul.f32 %v2495, %v2495
    %v2522 = vmul.f32 %v2496, %v2496
    %v2523 = vmul.f32 %v2497, %v2497
    %v2524 = vmul.f32 %v2498, %v2498
    %v2525 = vmul.f32 %v2499, %v2499
    %v2526 = vmul.f32 %v2500, %v2500
    %v2527 = vadd.f32 %v2519, %v2521
    %v2528 = vadd.f32 %v2527, %v2523
    %v2529 = vadd.f32 %v2528, %v2525
    %v2530 = vrot.slane %v2529, 4
    %v2531 = vadd.f32 %v2529, %v2530
    %v2532 = vrot.slane %v2531, 2
    %v2533 = vadd.f32 %v2531, %v2532
    %v2534 = vrot.slane %v2533, 1
    %v2535 = vadd.f32 %v2533, %v2534
    %v2536 = vadd.f32 %v2520, %v2522
    %v2537 = vadd.f32 %v2536, %v2524
    %v2538 = vadd.f32 %v2537, %v2526
    %v2539 = vrot.slane %v2538, 4
    %v2540 = vadd.f32 %v2538, %v2539
    %v2541 = vrot.slane %v2540, 2
    %v2542 = vadd.f32 %v2540, %v2541
    %v2543 = vrot.slane %v2542, 1
    %v2544 = vadd.f32 %v2542, %v2543
    %2546 = vrot.lane.b32.xlu0 %v2509, 112
    %v2547 = vpop.permute.xlu0 %2546
    %v2549 = vadd.f32 %v2509, %v2547
    %2551 = vrot.lane.b32.xlu0 %v2535, 112
    %v2552 = vpop.permute.xlu0 %2551
    %v2554 = vadd.f32 %v2535, %v2552
    %2555 = vrot.lane.b32.xlu0 %v2509, 96
    %v2556 = vpop.permute.xlu0 %2555
    %v2558 = vadd.f32 %v2549, %v2556
    %2559 = vrot.lane.b32.xlu0 %v2535, 96
    %v2560 = vpop.permute.xlu0 %2559
    %v2562 = vadd.f32 %v2554, %v2560
    %2563 = vrot.lane.b32.xlu0 %v2509, 80
    %v2564 = vpop.permute.xlu0 %2563
    %v2566 = vadd.f32 %v2558, %v2564
    %2567 = vrot.lane.b32.xlu0 %v2535, 80
    %v2568 = vpop.permute.xlu0 %2567
    %v2570 = vadd.f32 %v2562, %v2568
    %2571 = vrot.lane.b32.xlu0 %v2509, 64
    %v2572 = vpop.permute.xlu0 %2571
    %v2574 = vadd.f32 %v2566, %v2572
    %2575 = vrot.lane.b32.xlu0 %v2535, 64
    %v2576 = vpop.permute.xlu0 %2575
    %v2578 = vadd.f32 %v2570, %v2576
    %2579 = vrot.lane.b32.xlu0 %v2509, 48
    %v2580 = vpop.permute.xlu0 %2579
    %v2582 = vadd.f32 %v2574, %v2580
    %2583 = vrot.lane.b32.xlu0 %v2535, 48
    %v2584 = vpop.permute.xlu0 %2583
    %v2586 = vadd.f32 %v2578, %v2584
    %2587 = vrot.lane.b32.xlu0 %v2509, 32
    %v2588 = vpop.permute.xlu0 %2587
    %v2590 = vadd.f32 %v2582, %v2588
    %2591 = vrot.lane.b32.xlu0 %v2535, 32
    %v2592 = vpop.permute.xlu0 %2591
    %v2594 = vadd.f32 %v2586, %v2592
    %2595 = vrot.lane.b32.xlu0 %v2509, 16
    %v2596 = vpop.permute.xlu0 %2595
    %v2598 = vadd.f32 %v2590, %v2596
    %2599 = vrot.lane.b32.xlu0 %v2535, 16
    %v2600 = vpop.permute.xlu0 %2599
    %v2602 = vadd.f32 %v2594, %v2600
    %v2603 = vadd.f32 %v2598, %v2518
    %v2604 = vadd.f32 %v2602, %v2544
    %2606 = vrot.lane.b32.xlu0 %v2518, 112
    %v2607 = vpop.permute.xlu0 %2606
    %v2609 = vadd.f32 %v2603, %v2607
    %2611 = vrot.lane.b32.xlu0 %v2544, 112
    %v2612 = vpop.permute.xlu0 %2611
    %v2614 = vadd.f32 %v2604, %v2612
    %2615 = vrot.lane.b32.xlu0 %v2518, 96
    %v2616 = vpop.permute.xlu0 %2615
    %v2618 = vadd.f32 %v2609, %v2616
    %2619 = vrot.lane.b32.xlu0 %v2544, 96
    %v2620 = vpop.permute.xlu0 %2619
    %v2622 = vadd.f32 %v2614, %v2620
    %2623 = vrot.lane.b32.xlu0 %v2518, 80
    %v2624 = vpop.permute.xlu0 %2623
    %v2626 = vadd.f32 %v2618, %v2624
    %2627 = vrot.lane.b32.xlu0 %v2544, 80
    %v2628 = vpop.permute.xlu0 %2627
    %v2630 = vadd.f32 %v2622, %v2628
    %2631 = vrot.lane.b32.xlu0 %v2518, 64
    %v2632 = vpop.permute.xlu0 %2631
    %v2634 = vadd.f32 %v2626, %v2632
    %2635 = vrot.lane.b32.xlu0 %v2544, 64
    %v2636 = vpop.permute.xlu0 %2635
    %v2638 = vadd.f32 %v2630, %v2636
    %2639 = vrot.lane.b32.xlu0 %v2518, 48
    %v2640 = vpop.permute.xlu0 %2639
    %v2642 = vadd.f32 %v2634, %v2640
    %2643 = vrot.lane.b32.xlu0 %v2544, 48
    %v2644 = vpop.permute.xlu0 %2643
    %v2646 = vadd.f32 %v2638, %v2644
    %2647 = vrot.lane.b32.xlu0 %v2518, 32
    %v2648 = vpop.permute.xlu0 %2647
    %v2650 = vadd.f32 %v2642, %v2648
    %2651 = vrot.lane.b32.xlu0 %v2544, 32
    %v2652 = vpop.permute.xlu0 %2651
    %v2654 = vadd.f32 %v2646, %v2652
    %2655 = vrot.lane.b32.xlu0 %v2518, 16
    %v2656 = vpop.permute.xlu0 %2655
    %v2658 = vadd.f32 %v2650, %v2656
    %2659 = vrot.lane.b32.xlu0 %v2544, 16
    %v2660 = vpop.permute.xlu0 %2659
    %v2662 = vadd.f32 %v2654, %v2660
    %v2663 = vmul.f32 %v2658, 0.001953125
    %v2664 = vmul.f32 %v2662, 0.001953125
    %v2665 = vmul.f32 %v2663, %v2663
    %v2666 = vsub.f32 %v2664, %v2665
    %v2667 = vld [vmem:[#allocation9 + $0x1] sm:$0x1]
    %v2668 = vadd.f32 %v2666, 1e-05
    %v2669 = vrsqrt.pop %v2668
    %v2670 = vmul.f32 %v2667, %v2669
    %v2671 = vld [vmem:[#allocation11 + $0x1] sm:$0x1]
    %v2672 = vmul.f32 %v2663, %v2670
    %v2673 = vsub.f32 %v2671, %v2672
    %2675 = vrot.lane.b32.xlu0 %v2670, 16
    %v2676 = vpop.permute.xlu0 %2675
    %2678 = vrot.lane.b32.xlu0 %v2670, 32
    %v2679 = vpop.permute.xlu0 %2678
    %2681 = vrot.lane.b32.xlu0 %v2670, 48
    %v2682 = vpop.permute.xlu0 %2681
    %2684 = vrot.lane.b32.xlu0 %v2670, 64
    %v2685 = vpop.permute.xlu0 %2684
    %2687 = vrot.lane.b32.xlu0 %v2670, 80
    %v2688 = vpop.permute.xlu0 %2687
    %2690 = vrot.lane.b32.xlu0 %v2670, 96
    %v2691 = vpop.permute.xlu0 %2690
    %2693 = vrot.lane.b32.xlu0 %v2670, 112
    %v2694 = vpop.permute.xlu0 %2693
    %v2696 = vsel %vm156, %v2670, %v2676
    %v2697 = vsel %vm85, %v2696, %v2679
    %v2698 = vsel %vm1159, %v2697, %v2682
    %v2699 = vsel %vm1161, %v2698, %v2685
    %v2700 = vsel %vm1163, %v2699, %v2688
    %v2701 = vsel %vm1165, %v2700, %v2691
    %v2702 = vsel %vm1167, %v2701, %v2694
    %v2703 = vlaneseq
    %v2704 = vshrl.u32 %v2703, 7
    %v2705 = vsub.s32 0, %v2704
    %v2706 = vrot.slane %v2702, %v2705
    %v2707 = vmul.f32 %v2493, %v2706
    %v2708 = vmul.f32 %v2494, %v2706
    %v2709 = vmul.f32 %v2495, %v2706
    %v2710 = vmul.f32 %v2496, %v2706
    %v2711 = vmul.f32 %v2497, %v2706
    %v2712 = vmul.f32 %v2498, %v2706
    %v2713 = vmul.f32 %v2499, %v2706
    %v2714 = vmul.f32 %v2500, %v2706
    %2716 = vrot.lane.b32.xlu0 %v2673, 16
    %v2717 = vpop.permute.xlu0 %2716
    %2719 = vrot.lane.b32.xlu0 %v2673, 32
    %v2720 = vpop.permute.xlu0 %2719
    %2722 = vrot.lane.b32.xlu0 %v2673, 48
    %v2723 = vpop.permute.xlu0 %2722
    %2725 = vrot.lane.b32.xlu0 %v2673, 64
    %v2726 = vpop.permute.xlu0 %2725
    %2728 = vrot.lane.b32.xlu0 %v2673, 80
    %v2729 = vpop.permute.xlu0 %2728
    %2731 = vrot.lane.b32.xlu0 %v2673, 96
    %v2732 = vpop.permute.xlu0 %2731
    %2734 = vrot.lane.b32.xlu0 %v2673, 112
    %v2735 = vpop.permute.xlu0 %2734
    %v2737 = vsel %vm156, %v2673, %v2717
    %v2738 = vsel %vm85, %v2737, %v2720
    %v2739 = vsel %vm1159, %v2738, %v2723
    %v2740 = vsel %vm1161, %v2739, %v2726
    %v2741 = vsel %vm1163, %v2740, %v2729
    %v2742 = vsel %vm1165, %v2741, %v2732
    %v2743 = vsel %vm1167, %v2742, %v2735
    %v2744 = vlaneseq
    %v2745 = vshrl.u32 %v2744, 7
    %v2746 = vsub.s32 0, %v2745
    %v2747 = vrot.slane %v2743, %v2746
    %v2748 = vadd.f32 %v2707, %v2747
    %v2749 = vadd.f32 %v2708, %v2747
    %v2750 = vadd.f32 %v2709, %v2747
    %v2751 = vadd.f32 %v2710, %v2747
    %v2752 = vadd.f32 %v2711, %v2747
    %v2753 = vadd.f32 %v2712, %v2747
    %v2754 = vadd.f32 %v2713, %v2747
    %v2755 = vadd.f32 %v2714, %v2747
    %v2756 = vmax.f32 %v2748, 0.0
    %v2757 = vmax.f32 %v2749, 0.0
    %v2758 = vmax.f32 %v2750, 0.0
    %v2759 = vmax.f32 %v2751, 0.0
    %v2760 = vmax.f32 %v2752, 0.0
    %v2761 = vmax.f32 %v2753, 0.0
    %v2762 = vmax.f32 %v2754, 0.0
    %v2763 = vmax.f32 %v2755, 0.0
    %v2772 = vrot.slane %v2756, 7
    %v2773 = vrot.slane %v2757, 7
    %v2774 = vrot.slane %v2758, 7
    %v2775 = vsel %vm119, %v2772, %v2774
    %v2776 = vrot.slane %v2759, 7
    %v2777 = vsel %vm119, %v2773, %v2776
    %v2778 = vrot.slane %v2760, 7
    %v2779 = vrot.slane %v2761, 7
    %v2780 = vrot.slane %v2762, 7
    %v2781 = vsel %vm119, %v2778, %v2780
    %v2782 = vrot.slane %v2763, 7
    %v2783 = vsel %vm119, %v2779, %v2782
    %2784 = vrot.lane.b32.xlu0 %v2772, 16
    %v2785 = vpop.permute.xlu0 %2784
    %2786 = vrot.lane.b32.xlu0 %v2773, 16
    %v2787 = vpop.permute.xlu0 %2786
    %2788 = vrot.lane.b32.xlu0 %v2775, 16
    %v2789 = vpop.permute.xlu0 %2788
    %2790 = vrot.lane.b32.xlu0 %v2777, 16
    %v2791 = vpop.permute.xlu0 %2790
    %2792 = vrot.lane.b32.xlu0 %v2774, 16
    %v2793 = vpop.permute.xlu0 %2792
    %2794 = vrot.lane.b32.xlu0 %v2776, 16
    %v2795 = vpop.permute.xlu0 %2794
    %2796 = vrot.lane.b32.xlu0 %v2778, 16
    %v2797 = vpop.permute.xlu0 %2796
    %2798 = vrot.lane.b32.xlu0 %v2779, 16
    %v2799 = vpop.permute.xlu0 %2798
    %2800 = vrot.lane.b32.xlu0 %v2781, 16
    %v2801 = vpop.permute.xlu0 %2800
    %2802 = vrot.lane.b32.xlu0 %v2783, 16
    %v2803 = vpop.permute.xlu0 %2802
    %2804 = vrot.lane.b32.xlu0 %v2780, 16
    %v2805 = vpop.permute.xlu0 %2804
    %2806 = vrot.lane.b32.xlu0 %v2782, 16
    %v2807 = vpop.permute.xlu0 %2806
    %v2808 = vsel %vm156, %v2785, %v2787
    %v2809 = vsel %vm156, %v2789, %v2791
    %v2810 = vsel %vm156, %v2793, %v2795
    %v2811 = vsel %vm156, %v2797, %v2799
    %v2812 = vsel %vm156, %v2801, %v2803
    %v2813 = vsel %vm156, %v2805, %v2807
    %2832 = vst.msk [vmem:[#allocation2] sm:$0xfe] %vm181, %v2785
    %2833 = vst [vmem:[#allocation2 + $0x8] sm:$0xfe] %v2808
    %2834 = vst.msk [vmem:[#allocation2 + $0x10] sm:$0xfe] %vm184, %v2787
    %2835 = vst.msk [vmem:[#allocation2 + $0x18] sm:$0xff] %vm186, %v2789
    %2836 = vst [vmem:[#allocation2 + $0x20] sm:$0xff] %v2809
    %2837 = vst.msk [vmem:[#allocation2 + $0x28] sm:$0xff] %vm156, %v2791
    %2838 = vst.msk [vmem:[#allocation2 + $0x30] sm:$0x1] %vm190, %v2793
    %2839 = vst [vmem:[#allocation2 + $0x38] sm:$0x1] %v2810
    %2840 = vst.msk [vmem:[#allocation2 + $0x40] sm:$0x1] %vm193, %v2795
    %2841 = vst.msk [vmem:[#allocation2 + $0x48] sm:$0xfe] %vm181, %v2797
    %2842 = vst [vmem:[#allocation2 + $0x50] sm:$0xfe] %v2811
    %2843 = vst.msk [vmem:[#allocation2 + $0x58] sm:$0xfe] %vm184, %v2799
    %2844 = vst.msk [vmem:[#allocation2 + $0x60] sm:$0xff] %vm186, %v2801
    %2845 = vst [vmem:[#allocation2 + $0x68] sm:$0xff] %v2812
    %2846 = vst.msk [vmem:[#allocation2 + $0x70] sm:$0xff] %vm156, %v2803
    %2847 = vst.msk [vmem:[#allocation2 + $0x78] sm:$0x1] %vm190, %v2805
    %2848 = vst [vmem:[#allocation2 + $0x80] sm:$0x1] %v2813
    %2849 = vst.msk [vmem:[#allocation2 + $0x88] sm:$0x1] %vm193, %v2807
    %v2850 = vld [vmem:[#allocation2] sm:$0xff]
    %v2851 = vld [vmem:[#allocation2 + $0x8] sm:$0xff]
    %v2852 = vld [vmem:[#allocation2 + $0x10] sm:$0xff]
    %v2853 = vld [vmem:[#allocation2 + $0x18] sm:$0xff]
    %v2854 = vld [vmem:[#allocation2 + $0x20] sm:$0xff]
    %v2855 = vld [vmem:[#allocation2 + $0x28] sm:$0xff]
    %v2856 = vld [vmem:[#allocation2 + $0x48] sm:$0xff]
    %v2857 = vld [vmem:[#allocation2 + $0x50] sm:$0xff]
    %v2858 = vld [vmem:[#allocation2 + $0x58] sm:$0xff]
    %v2859 = vld [vmem:[#allocation2 + $0x60] sm:$0xff]
    %v2860 = vld [vmem:[#allocation2 + $0x68] sm:$0xff]
    %v2861 = vld [vmem:[#allocation2 + $0x70] sm:$0xff]
    %s2862 = scalar_lea.vmem [#allocation6], 3456
    %v2863 = vld [vmem:[%s2862] sm:$0xff]
    %v2864 = vld [vmem:[%s2862 + $0x8] sm:$0xff]
    %v2865 = vld [vmem:[%s2862 + $0x10] sm:$0xff]
    %v2866 = vld [vmem:[%s2862 + $0x18] sm:$0xff]
    %v2867 = vld [vmem:[%s2862 + $0x20] sm:$0xff]
    %v2868 = vld [vmem:[%s2862 + $0x28] sm:$0xff]
    %v2869 = vld [vmem:[%s2862 + $0x30] sm:$0xff]
    %v2870 = vld [vmem:[%s2862 + $0x38] sm:$0xff]
    %v2871 = vld [vmem:[%s2862 + $0x40] sm:$0xff]
    %v2872 = vld [vmem:[%s2862 + $0x48] sm:$0xff]
    %v2873 = vld [vmem:[%s2862 + $0x50] sm:$0xff]
    %v2874 = vld [vmem:[%s2862 + $0x58] sm:$0xff]
    %v2875 = vld [vmem:[%s2862 + $0x60] sm:$0xff]
    %v2876 = vld [vmem:[%s2862 + $0x68] sm:$0xff]
    %v2877 = vld [vmem:[%s2862 + $0x70] sm:$0xff]
    %v2878 = vld [vmem:[%s2862 + $0x78] sm:$0xff]
    %v2879 = vld [vmem:[%s2862 + $0x80] sm:$0xff]
    %v2880 = vld [vmem:[%s2862 + $0x88] sm:$0xff]
    %v2881 = vld [vmem:[%s2862 + $0x90] sm:$0xff]
    %v2882 = vld [vmem:[%s2862 + $0x98] sm:$0xff]
    %v2883 = vld [vmem:[%s2862 + $0xa0] sm:$0xff]
    %v2884 = vld [vmem:[%s2862 + $0xa8] sm:$0xff]
    %v2885 = vld [vmem:[%s2862 + $0xb0] sm:$0xff]
    %v2886 = vld [vmem:[%s2862 + $0xb8] sm:$0xff]
    %v2887 = vld [vmem:[%s2862 + $0xc0] sm:$0xff]
    %v2888 = vld [vmem:[%s2862 + $0xc8] sm:$0xff]
    %v2889 = vld [vmem:[%s2862 + $0xd0] sm:$0xff]
    %v2890 = vld [vmem:[%s2862 + $0xd8] sm:$0xff]
    %v2891 = vld [vmem:[%s2862 + $0xe0] sm:$0xff]
    %v2892 = vld [vmem:[%s2862 + $0xe8] sm:$0xff]
    %v2893 = vld [vmem:[%s2862 + $0xf0] sm:$0xff]
    %v2894 = vld [vmem:[%s2862 + $0xf8] sm:$0xff]
    %v2895 = vld [vmem:[%s2862 + $0x100] sm:$0xff]
    %v2896 = vld [vmem:[%s2862 + $0x108] sm:$0xff]
    %v2897 = vld [vmem:[%s2862 + $0x110] sm:$0xff]
    %v2898 = vld [vmem:[%s2862 + $0x118] sm:$0xff]
    %v2899 = vld [vmem:[%s2862 + $0x120] sm:$0xff]
    %v2900 = vld [vmem:[%s2862 + $0x128] sm:$0xff]
    %v2901 = vld [vmem:[%s2862 + $0x130] sm:$0xff]
    %v2902 = vld [vmem:[%s2862 + $0x138] sm:$0xff]
    %v2903 = vld [vmem:[%s2862 + $0x140] sm:$0xff]
    %v2904 = vld [vmem:[%s2862 + $0x148] sm:$0xff]
    %v2905 = vld [vmem:[%s2862 + $0x150] sm:$0xff]
    %v2906 = vld [vmem:[%s2862 + $0x158] sm:$0xff]
    %v2907 = vld [vmem:[%s2862 + $0x160] sm:$0xff]
    %v2908 = vld [vmem:[%s2862 + $0x168] sm:$0xff]
    %v2909 = vld [vmem:[%s2862 + $0x170] sm:$0xff]
    %v2910 = vld [vmem:[%s2862 + $0x178] sm:$0xff]
    %v2911 = vld [vmem:[%s2862 + $0x180] sm:$0xff]
    %v2912 = vld [vmem:[%s2862 + $0x188] sm:$0xff]
    %v2913 = vld [vmem:[%s2862 + $0x190] sm:$0xff]
    %v2914 = vld [vmem:[%s2862 + $0x198] sm:$0xff]
    %v2915 = vld [vmem:[%s2862 + $0x1a0] sm:$0xff]
    %v2916 = vld [vmem:[%s2862 + $0x1a8] sm:$0xff]
    %v2917 = vld [vmem:[%s2862 + $0x1b0] sm:$0xff]
    %v2918 = vld [vmem:[%s2862 + $0x1b8] sm:$0xff]
    %v2919 = vld [vmem:[%s2862 + $0x1c0] sm:$0xff]
    %v2920 = vld [vmem:[%s2862 + $0x1c8] sm:$0xff]
    %v2921 = vld [vmem:[%s2862 + $0x1d0] sm:$0xff]
    %v2922 = vld [vmem:[%s2862 + $0x1d8] sm:$0xff]
    %v2923 = vld [vmem:[%s2862 + $0x1e0] sm:$0xff]
    %v2924 = vld [vmem:[%s2862 + $0x1e8] sm:$0xff]
    %v2925 = vld [vmem:[%s2862 + $0x1f0] sm:$0xff]
    %v2926 = vld [vmem:[%s2862 + $0x1f8] sm:$0xff]
    %v2927 = vld [vmem:[%s2862 + $0x200] sm:$0xff]
    %v2928 = vld [vmem:[%s2862 + $0x208] sm:$0xff]
    %v2929 = vld [vmem:[%s2862 + $0x210] sm:$0xff]
    %v2930 = vld [vmem:[%s2862 + $0x218] sm:$0xff]
    %v2931 = vld [vmem:[%s2862 + $0x220] sm:$0xff]
    %v2932 = vld [vmem:[%s2862 + $0x228] sm:$0xff]
    %v2933 = vld [vmem:[%s2862 + $0x230] sm:$0xff]
    %v2934 = vld [vmem:[%s2862 + $0x238] sm:$0xff]
    %v2935 = vld [vmem:[#allocation2] sm:$0xfe]
    %v2936 = vld [vmem:[#allocation2 + $0x8] sm:$0xfe]
    %v2937 = vld [vmem:[#allocation2 + $0x10] sm:$0xfe]
    %v2938 = vld [vmem:[#allocation2 + $0x30] sm:$0x1]
    %v2939 = vld [vmem:[#allocation2 + $0x38] sm:$0x1]
    %v2940 = vld [vmem:[#allocation2 + $0x40] sm:$0x1]
    %v2941 = vld [vmem:[#allocation2 + $0x48] sm:$0xfe]
    %v2942 = vld [vmem:[#allocation2 + $0x50] sm:$0xfe]
    %v2943 = vld [vmem:[#allocation2 + $0x58] sm:$0xfe]
    %v2944 = vld [vmem:[#allocation2 + $0x78] sm:$0x1]
    %v2945 = vld [vmem:[#allocation2 + $0x80] sm:$0x1]
    %v2946 = vld [vmem:[#allocation2 + $0x88] sm:$0x1]
    %v2965 = vrot.slane %v2935, 1
    %v2966 = vrot.slane %v2853, 1
    %v2967 = vsel %vm318, %v2965, %v2966
    %v2968 = vrot.slane %v2936, 1
    %v2969 = vrot.slane %v2854, 1
    %v2970 = vsel %vm318, %v2968, %v2969
    %v2971 = vrot.slane %v2937, 1
    %v2972 = vrot.slane %v2855, 1
    %v2973 = vsel %vm318, %v2971, %v2972
    %v2974 = vrot.slane %v2938, 1
    %v2975 = vsel %vm318, %v2966, %v2974
    %v2976 = vrot.slane %v2939, 1
    %v2977 = vsel %vm318, %v2969, %v2976
    %v2978 = vrot.slane %v2940, 1
    %v2979 = vsel %vm318, %v2972, %v2978
    %v2980 = vrot.slane %v2941, 1
    %v2981 = vrot.slane %v2859, 1
    %v2982 = vsel %vm318, %v2980, %v2981
    %v2983 = vrot.slane %v2942, 1
    %v2984 = vrot.slane %v2860, 1
    %v2985 = vsel %vm318, %v2983, %v2984
    %v2986 = vrot.slane %v2943, 1
    %v2987 = vrot.slane %v2861, 1
    %v2988 = vsel %vm318, %v2986, %v2987
    %v2989 = vrot.slane %v2944, 1
    %v2990 = vsel %vm318, %v2981, %v2989
    %v2991 = vrot.slane %v2945, 1
    %v2992 = vsel %vm318, %v2984, %v2991
    %v2993 = vrot.slane %v2946, 1
    %v2994 = vsel %vm318, %v2987, %v2993
    %s3003 = scalar_lea.vmem [#allocation6], 4032
    %v3004 = vld [vmem:[%s3003] sm:$0xff]
    %v3005 = vld [vmem:[%s3003 + $0x8] sm:$0xff]
    %v3006 = vld [vmem:[%s3003 + $0x10] sm:$0xff]
    %v3007 = vld [vmem:[%s3003 + $0x18] sm:$0xff]
    %v3008 = vld [vmem:[%s3003 + $0x20] sm:$0xff]
    %v3009 = vld [vmem:[%s3003 + $0x28] sm:$0xff]
    %v3010 = vld [vmem:[%s3003 + $0x30] sm:$0xff]
    %v3011 = vld [vmem:[%s3003 + $0x38] sm:$0xff]
    %v3012 = vld [vmem:[%s3003 + $0x40] sm:$0xff]
    %v3013 = vld [vmem:[%s3003 + $0x48] sm:$0xff]
    %v3014 = vld [vmem:[%s3003 + $0x50] sm:$0xff]
    %v3015 = vld [vmem:[%s3003 + $0x58] sm:$0xff]
    %v3016 = vld [vmem:[%s3003 + $0x60] sm:$0xff]
    %v3017 = vld [vmem:[%s3003 + $0x68] sm:$0xff]
    %v3018 = vld [vmem:[%s3003 + $0x70] sm:$0xff]
    %v3019 = vld [vmem:[%s3003 + $0x78] sm:$0xff]
    %v3020 = vld [vmem:[%s3003 + $0x80] sm:$0xff]
    %v3021 = vld [vmem:[%s3003 + $0x88] sm:$0xff]
    %v3022 = vld [vmem:[%s3003 + $0x90] sm:$0xff]
    %v3023 = vld [vmem:[%s3003 + $0x98] sm:$0xff]
    %v3024 = vld [vmem:[%s3003 + $0xa0] sm:$0xff]
    %v3025 = vld [vmem:[%s3003 + $0xa8] sm:$0xff]
    %v3026 = vld [vmem:[%s3003 + $0xb0] sm:$0xff]
    %v3027 = vld [vmem:[%s3003 + $0xb8] sm:$0xff]
    %v3028 = vld [vmem:[%s3003 + $0xc0] sm:$0xff]
    %v3029 = vld [vmem:[%s3003 + $0xc8] sm:$0xff]
    %v3030 = vld [vmem:[%s3003 + $0xd0] sm:$0xff]
    %v3031 = vld [vmem:[%s3003 + $0xd8] sm:$0xff]
    %v3032 = vld [vmem:[%s3003 + $0xe0] sm:$0xff]
    %v3033 = vld [vmem:[%s3003 + $0xe8] sm:$0xff]
    %v3034 = vld [vmem:[%s3003 + $0xf0] sm:$0xff]
    %v3035 = vld [vmem:[%s3003 + $0xf8] sm:$0xff]
    %v3036 = vld [vmem:[%s3003 + $0x100] sm:$0xff]
    %v3037 = vld [vmem:[%s3003 + $0x108] sm:$0xff]
    %v3038 = vld [vmem:[%s3003 + $0x110] sm:$0xff]
    %v3039 = vld [vmem:[%s3003 + $0x118] sm:$0xff]
    %v3040 = vld [vmem:[%s3003 + $0x120] sm:$0xff]
    %v3041 = vld [vmem:[%s3003 + $0x128] sm:$0xff]
    %v3042 = vld [vmem:[%s3003 + $0x130] sm:$0xff]
    %v3043 = vld [vmem:[%s3003 + $0x138] sm:$0xff]
    %v3044 = vld [vmem:[%s3003 + $0x140] sm:$0xff]
    %v3045 = vld [vmem:[%s3003 + $0x148] sm:$0xff]
    %v3046 = vld [vmem:[%s3003 + $0x150] sm:$0xff]
    %v3047 = vld [vmem:[%s3003 + $0x158] sm:$0xff]
    %v3048 = vld [vmem:[%s3003 + $0x160] sm:$0xff]
    %v3049 = vld [vmem:[%s3003 + $0x168] sm:$0xff]
    %v3050 = vld [vmem:[%s3003 + $0x170] sm:$0xff]
    %v3051 = vld [vmem:[%s3003 + $0x178] sm:$0xff]
    %v3052 = vld [vmem:[%s3003 + $0x180] sm:$0xff]
    %v3053 = vld [vmem:[%s3003 + $0x188] sm:$0xff]
    %v3054 = vld [vmem:[%s3003 + $0x190] sm:$0xff]
    %v3055 = vld [vmem:[%s3003 + $0x198] sm:$0xff]
    %v3056 = vld [vmem:[%s3003 + $0x1a0] sm:$0xff]
    %v3057 = vld [vmem:[%s3003 + $0x1a8] sm:$0xff]
    %v3058 = vld [vmem:[%s3003 + $0x1b0] sm:$0xff]
    %v3059 = vld [vmem:[%s3003 + $0x1b8] sm:$0xff]
    %v3060 = vld [vmem:[%s3003 + $0x1c0] sm:$0xff]
    %v3061 = vld [vmem:[%s3003 + $0x1c8] sm:$0xff]
    %v3062 = vld [vmem:[%s3003 + $0x1d0] sm:$0xff]
    %v3063 = vld [vmem:[%s3003 + $0x1d8] sm:$0xff]
    %v3064 = vld [vmem:[%s3003 + $0x1e0] sm:$0xff]
    %v3065 = vld [vmem:[%s3003 + $0x1e8] sm:$0xff]
    %v3066 = vld [vmem:[%s3003 + $0x1f0] sm:$0xff]
    %v3067 = vld [vmem:[%s3003 + $0x1f8] sm:$0xff]
    %v3068 = vld [vmem:[%s3003 + $0x200] sm:$0xff]
    %v3069 = vld [vmem:[%s3003 + $0x208] sm:$0xff]
    %v3070 = vld [vmem:[%s3003 + $0x210] sm:$0xff]
    %v3071 = vld [vmem:[%s3003 + $0x218] sm:$0xff]
    %v3072 = vld [vmem:[%s3003 + $0x220] sm:$0xff]
    %v3073 = vld [vmem:[%s3003 + $0x228] sm:$0xff]
    %v3074 = vld [vmem:[%s3003 + $0x230] sm:$0xff]
    %v3075 = vld [vmem:[%s3003 + $0x238] sm:$0xff]
    %v3076 = vsel %vm85, %v2973, 0
    %v3078 = vsel %vm85, %v2979, 0
    %v3080 = vsel %vm85, %v2988, 0
    %v3082 = vsel %vm85, %v2994, 0
    %3084 = vmatprep.subr.mxu0 %v3005
    %3085 = vmatpush1.msra.mxu0 %v3004
    %3086 = vmatprep.subr.mxu0 %v3007
    %3087 = vmatpush1.msra.mxu0 %v3006
    %3088 = vmatprep.subr.mxu0 %v3009
    %3089 = vmatpush1.msra.mxu0 %v3008
    %3090 = vmatprep.subr.mxu0 %v3011
    %3091 = vmatpush1.msra.mxu0 %v3010
    %3092 = vmatprep.subr.mxu0 %v3013
    %3093 = vmatpush1.msra.mxu0 %v3012
    %3094 = vmatprep.subr.mxu0 %v3015
    %3095 = vmatpush1.msra.mxu0 %v3014
    %3096 = vmatprep.subr.mxu0 %v3017
    %3097 = vmatpush1.msra.mxu0 %v3016
    %3098 = vmatprep.subr.mxu0 %v3019
    %3099 = vmatpush1.msra.mxu0 %v3018
    %3100 = vmatprep.subr.mxu0 %v3021
    %3101 = vmatpush1.msra.mxu0 %v3020
    %3102 = vmatprep.subr.mxu0 %v3023
    %3103 = vmatpush1.msra.mxu0 %v3022
    %3104 = vmatprep.subr.mxu0 %v3025
    %3105 = vmatpush1.msra.mxu0 %v3024
    %3106 = vmatprep.subr.mxu0 %v3027
    %3107 = vmatpush1.msra.mxu0 %v3026
    %3108 = vmatprep.subr.mxu0 %v3029
    %3109 = vmatpush1.msra.mxu0 %v3028
    %3110 = vmatprep.subr.mxu0 %v3031
    %3111 = vmatpush1.msra.mxu0 %v3030
    %3112 = vmatprep.subr.mxu0 %v3033
    %3113 = vmatpush1.msra.mxu0 %v3032
    %3114 = vmatprep.subr.mxu0 %v3035
    %3115 = vmatpush1.msra.mxu0 %v3034
    %3116 = vmatprep.subr.mxu0 %v3037
    %3117 = vmatpush1.msra.mxu0 %v3036
    %3118 = vmatprep.subr.mxu0 %v3039
    %3119 = vmatpush1.msra.mxu0 %v3038
    %3120 = vmatprep.subr.mxu0 %v3041
    %3121 = vmatpush1.msra.mxu0 %v3040
    %3122 = vmatprep.subr.mxu0 %v3043
    %3123 = vmatpush1.msra.mxu0 %v3042
    %3124 = vmatprep.subr.mxu0 %v3045
    %3125 = vmatpush1.msra.mxu0 %v3044
    %3126 = vmatprep.subr.mxu0 %v3047
    %3127 = vmatpush1.msra.mxu0 %v3046
    %3128 = vmatprep.subr.mxu0 %v3049
    %3129 = vmatpush1.msra.mxu0 %v3048
    %3130 = vmatprep.subr.mxu0 %v3051
    %3131 = vmatpush1.msra.mxu0 %v3050
    %3132 = vmatprep.subr.mxu0 %v3053
    %3133 = vmatpush1.msra.mxu0 %v3052
    %3134 = vmatprep.subr.mxu0 %v3055
    %3135 = vmatpush1.msra.mxu0 %v3054
    %3136 = vmatprep.subr.mxu0 %v3057
    %3137 = vmatpush1.msra.mxu0 %v3056
    %3138 = vmatprep.subr.mxu0 %v3059
    %3139 = vmatpush1.msra.mxu0 %v3058
    %3140 = vmatprep.subr.mxu0 %v3061
    %3141 = vmatpush1.msra.mxu0 %v3060
    %3142 = vmatprep.subr.mxu0 %v3063
    %3143 = vmatpush1.msra.mxu0 %v3062
    %3144 = vmatprep.subr.mxu0 %v3065
    %3145 = vmatpush1.msra.mxu0 %v3064
    %3146 = vmatprep.subr.mxu0 %v3067
    %3147 = vmatpush1.msra.mxu0 %v3066
    %3148 = vmatprep.mubr.f32.mxu0 %v2970
    %3149 = vmatmul.mubr.f32.gmra.mrb[0].mxu0 %v2967
    %v3150 = vpop.f32.mrb[0].mxu0
    %v3151 = vadd.f32 0.0, %v3150
    %v3152 = vpop.f32.mrb[0].mxu0
    %v3153 = vadd.f32 0.0, %v3152
    %3154 = vmatprep.mubr.f32.mxu0 %v2977
    %3155 = vmatmul.mubr.f32.gmra.mrb[0].mxu0 %v2975
    %v3156 = vpop.f32.mrb[0].mxu0
    %v3157 = vadd.f32 0.0, %v3156
    %v3158 = vpop.f32.mrb[0].mxu0
    %v3159 = vadd.f32 0.0, %v3158
    %3160 = vmatprep.mubr.f32.mxu0 %v2985
    %3161 = vmatmul.mubr.f32.gmra.mrb[0].mxu0 %v2982
    %v3162 = vpop.f32.mrb[0].mxu0
    %v3163 = vadd.f32 0.0, %v3162
    %v3164 = vpop.f32.mrb[0].mxu0
    %v3165 = vadd.f32 0.0, %v3164
    %3166 = vmatprep.mubr.f32.mxu0 %v2992
    %3167 = vmatmul.mubr.f32.gmra.mrb[0].mxu0 %v2990
    %v3168 = vpop.f32.mrb[0].mxu0
    %v3169 = vadd.f32 0.0, %v3168
    %v3170 = vpop.f32.mrb[0].mxu0
    %v3171 = vadd.f32 0.0, %v3170
    %3172 = vdwg.mxu0
    %3173 = vmatprep.subr.mxu0 %v3069
    %3174 = vmatpush1.msra.mxu0 %v3068
    %3175 = vmatprep.subr.mxu0 %v3071
    %3176 = vmatpush1.msra.mxu0 %v3070
    %3177 = vmatprep.subr.mxu0 %v3073
    %3178 = vmatpush1.msra.mxu0 %v3072
    %3179 = vmatprep.subr.mxu0 %v3075
    %3180 = vmatpush1.msra.mxu0 %v3074
    %3181 = vmatprep.subr.mxu0 0.0
    %3182 = vmatpush1.msra.mxu0 0.0
    %3183 = vmatprep.subr.mxu0 0.0
    %3184 = vmatpush1.msra.mxu0 0.0
    %3185 = vmatprep.subr.mxu0 0.0
    %3186 = vmatpush1.msra.mxu0 0.0
    %3187 = vmatprep.subr.mxu0 0.0
    %3188 = vmatpush1.msra.mxu0 0.0
    %3189 = vmatprep.subr.mxu0 0.0
    %3190 = vmatpush1.msra.mxu0 0.0
    %3191 = vmatprep.subr.mxu0 0.0
    %3192 = vmatpush1.msra.mxu0 0.0
    %3193 = vmatprep.subr.mxu0 0.0
    %3194 = vmatpush1.msra.mxu0 0.0
    %3195 = vmatprep.subr.mxu0 0.0
    %3196 = vmatpush1.msra.mxu0 0.0
    %3197 = vmatprep.subr.mxu0 0.0
    %3198 = vmatpush1.msra.mxu0 0.0
    %3199 = vmatprep.subr.mxu0 0.0
    %3200 = vmatpush1.msra.mxu0 0.0
    %3201 = vmatprep.subr.mxu0 0.0
    %3202 = vmatpush1.msra.mxu0 0.0
    %3203 = vmatprep.subr.mxu0 0.0
    %3204 = vmatpush1.msra.mxu0 0.0
    %3205 = vmatprep.subr.mxu0 0.0
    %3206 = vmatpush1.msra.mxu0 0.0
    %3207 = vmatprep.subr.mxu0 0.0
    %3208 = vmatpush1.msra.mxu0 0.0
    %3209 = vmatprep.subr.mxu0 0.0
    %3210 = vmatpush1.msra.mxu0 0.0
    %3211 = vmatprep.subr.mxu0 0.0
    %3212 = vmatpush1.msra.mxu0 0.0
    %3213 = vmatprep.subr.mxu0 0.0
    %3214 = vmatpush1.msra.mxu0 0.0
    %3215 = vmatprep.subr.mxu0 0.0
    %3216 = vmatpush1.msra.mxu0 0.0
    %3217 = vmatprep.subr.mxu0 0.0
    %3218 = vmatpush1.msra.mxu0 0.0
    %3219 = vmatprep.subr.mxu0 0.0
    %3220 = vmatpush1.msra.mxu0 0.0
    %3221 = vmatprep.subr.mxu0 0.0
    %3222 = vmatpush1.msra.mxu0 0.0
    %3223 = vmatprep.subr.mxu0 0.0
    %3224 = vmatpush1.msra.mxu0 0.0
    %3225 = vmatprep.subr.mxu0 0.0
    %3226 = vmatpush1.msra.mxu0 0.0
    %3227 = vmatprep.subr.mxu0 0.0
    %3228 = vmatpush1.msra.mxu0 0.0
    %3229 = vmatprep.subr.mxu0 0.0
    %3230 = vmatpush1.msra.mxu0 0.0
    %3231 = vmatprep.subr.mxu0 0.0
    %3232 = vmatpush1.msra.mxu0 0.0
    %3233 = vmatprep.subr.mxu0 0.0
    %3234 = vmatpush1.msra.mxu0 0.0
    %3235 = vmatprep.subr.mxu0 0.0
    %3236 = vmatpush1.msra.mxu0 0.0
    %3237 = vmatprep.mubr.f32.mxu0 0.0
    %3238 = vmatmul.mubr.f32.gmra.mrb[0].mxu0 %v3076
    %v3239 = vpop.f32.mrb[0].mxu0
    %v3240 = vadd.f32 %v3151, %v3239
    %v3241 = vpop.f32.mrb[0].mxu0
    %v3242 = vadd.f32 %v3153, %v3241
    %3243 = vmatprep.mubr.f32.mxu0 0.0
    %3244 = vmatmul.mubr.f32.gmra.mrb[0].mxu0 %v3078
    %v3245 = vpop.f32.mrb[0].mxu0
    %v3246 = vadd.f32 %v3157, %v3245
    %v3247 = vpop.f32.mrb[0].mxu0
    %v3248 = vadd.f32 %v3159, %v3247
    %3249 = vmatprep.mubr.f32.mxu0 0.0
    %3250 = vmatmul.mubr.f32.gmra.mrb[0].mxu0 %v3080
    %v3251 = vpop.f32.mrb[0].mxu0
    %v3252 = vadd.f32 %v3163, %v3251
    %v3253 = vpop.f32.mrb[0].mxu0
    %v3254 = vadd.f32 %v3165, %v3253
    %3255 = vmatprep.mubr.f32.mxu0 0.0
    %3256 = vmatmul.mubr.f32.gmra.mrb[0].mxu0 %v3082
    %v3257 = vpop.f32.mrb[0].mxu0
    %v3258 = vadd.f32 %v3169, %v3257
    %v3259 = vpop.f32.mrb[0].mxu0
    %v3260 = vadd.f32 %v3171, %v3259
    %3261 = vdwg.mxu0
    %v3263 = vsel %vm85, %v2852, 0
    %v3265 = vsel %vm85, %v2855, 0
    %v3268 = vsel %vm85, %v2858, 0
    %v3270 = vsel %vm85, %v2861, 0
    %3272 = vmatprep.subr.mxu0 %v2864
    %3273 = vmatpush1.msra.mxu0 %v2863
    %3274 = vmatprep.subr.mxu0 %v2866
    %3275 = vmatpush1.msra.mxu0 %v2865
    %3276 = vmatprep.subr.mxu0 %v2868
    %3277 = vmatpush1.msra.mxu0 %v2867
    %3278 = vmatprep.subr.mxu0 %v2870
    %3279 = vmatpush1.msra.mxu0 %v2869
    %3280 = vmatprep.subr.mxu0 %v2872
    %3281 = vmatpush1.msra.mxu0 %v2871
    %3282 = vmatprep.subr.mxu0 %v2874
    %3283 = vmatpush1.msra.mxu0 %v2873
    %3284 = vmatprep.subr.mxu0 %v2876
    %3285 = vmatpush1.msra.mxu0 %v2875
    %3286 = vmatprep.subr.mxu0 %v2878
    %3287 = vmatpush1.msra.mxu0 %v2877
    %3288 = vmatprep.subr.mxu0 %v2880
    %3289 = vmatpush1.msra.mxu0 %v2879
    %3290 = vmatprep.subr.mxu0 %v2882
    %3291 = vmatpush1.msra.mxu0 %v2881
    %3292 = vmatprep.subr.mxu0 %v2884
    %3293 = vmatpush1.msra.mxu0 %v2883
    %3294 = vmatprep.subr.mxu0 %v2886
    %3295 = vmatpush1.msra.mxu0 %v2885
    %3296 = vmatprep.subr.mxu0 %v2888
    %3297 = vmatpush1.msra.mxu0 %v2887
    %3298 = vmatprep.subr.mxu0 %v2890
    %3299 = vmatpush1.msra.mxu0 %v2889
    %3300 = vmatprep.subr.mxu0 %v2892
    %3301 = vmatpush1.msra.mxu0 %v2891
    %3302 = vmatprep.subr.mxu0 %v2894
    %3303 = vmatpush1.msra.mxu0 %v2893
    %3304 = vmatprep.subr.mxu0 %v2896
    %3305 = vmatpush1.msra.mxu0 %v2895
    %3306 = vmatprep.subr.mxu0 %v2898
    %3307 = vmatpush1.msra.mxu0 %v2897
    %3308 = vmatprep.subr.mxu0 %v2900
    %3309 = vmatpush1.msra.mxu0 %v2899
    %3310 = vmatprep.subr.mxu0 %v2902
    %3311 = vmatpush1.msra.mxu0 %v2901
    %3312 = vmatprep.subr.mxu0 %v2904
    %3313 = vmatpush1.msra.mxu0 %v2903
    %3314 = vmatprep.subr.mxu0 %v2906
    %3315 = vmatpush1.msra.mxu0 %v2905
    %3316 = vmatprep.subr.mxu0 %v2908
    %3317 = vmatpush1.msra.mxu0 %v2907
    %3318 = vmatprep.subr.mxu0 %v2910
    %3319 = vmatpush1.msra.mxu0 %v2909
    %3320 = vmatprep.subr.mxu0 %v2912
    %3321 = vmatpush1.msra.mxu0 %v2911
    %3322 = vmatprep.subr.mxu0 %v2914
    %3323 = vmatpush1.msra.mxu0 %v2913
    %3324 = vmatprep.subr.mxu0 %v2916
    %3325 = vmatpush1.msra.mxu0 %v2915
    %3326 = vmatprep.subr.mxu0 %v2918
    %3327 = vmatpush1.msra.mxu0 %v2917
    %3328 = vmatprep.subr.mxu0 %v2920
    %3329 = vmatpush1.msra.mxu0 %v2919
    %3330 = vmatprep.subr.mxu0 %v2922
    %3331 = vmatpush1.msra.mxu0 %v2921
    %3332 = vmatprep.subr.mxu0 %v2924
    %3333 = vmatpush1.msra.mxu0 %v2923
    %3334 = vmatprep.subr.mxu0 %v2926
    %3335 = vmatpush1.msra.mxu0 %v2925
    %3336 = vmatprep.mubr.f32.mxu0 %v2851
    %3337 = vmatmul.mubr.f32.gmra.mrb[0].mxu0 %v2850
    %v3338 = vpop.f32.mrb[0].mxu0
    %v3339 = vadd.f32 %v3240, %v3338
    %v3340 = vpop.f32.mrb[0].mxu0
    %v3341 = vadd.f32 %v3242, %v3340
    %3342 = vmatprep.mubr.f32.mxu0 %v2854
    %3343 = vmatmul.mubr.f32.gmra.mrb[0].mxu0 %v2853
    %v3344 = vpop.f32.mrb[0].mxu0
    %v3345 = vadd.f32 %v3246, %v3344
    %v3346 = vpop.f32.mrb[0].mxu0
    %v3347 = vadd.f32 %v3248, %v3346
    %3348 = vmatprep.mubr.f32.mxu0 %v2857
    %3349 = vmatmul.mubr.f32.gmra.mrb[0].mxu0 %v2856
    %v3350 = vpop.f32.mrb[0].mxu0
    %v3351 = vadd.f32 %v3252, %v3350
    %v3352 = vpop.f32.mrb[0].mxu0
    %v3353 = vadd.f32 %v3254, %v3352
    %3354 = vmatprep.mubr.f32.mxu0 %v2860
    %3355 = vmatmul.mubr.f32.gmra.mrb[0].mxu0 %v2859
    %v3356 = vpop.f32.mrb[0].mxu0
    %v3357 = vadd.f32 %v3258, %v3356
    %v3358 = vpop.f32.mrb[0].mxu0
    %v3359 = vadd.f32 %v3260, %v3358
    %3360 = vdwg.mxu0
    %3361 = vmatprep.subr.mxu0 %v2928
    %3362 = vmatpush1.msra.mxu0 %v2927
    %3363 = vmatprep.subr.mxu0 %v2930
    %3364 = vmatpush1.msra.mxu0 %v2929
    %3365 = vmatprep.subr.mxu0 %v2932
    %3366 = vmatpush1.msra.mxu0 %v2931
    %3367 = vmatprep.subr.mxu0 %v2934
    %3368 = vmatpush1.msra.mxu0 %v2933
    %3369 = vmatprep.subr.mxu0 0.0
    %3370 = vmatpush1.msra.mxu0 0.0
    %3371 = vmatprep.subr.mxu0 0.0
    %3372 = vmatpush1.msra.mxu0 0.0
    %3373 = vmatprep.subr.mxu0 0.0
    %3374 = vmatpush1.msra.mxu0 0.0
    %3375 = vmatprep.subr.mxu0 0.0
    %3376 = vmatpush1.msra.mxu0 0.0
    %3377 = vmatprep.subr.mxu0 0.0
    %3378 = vmatpush1.msra.mxu0 0.0
    %3379 = vmatprep.subr.mxu0 0.0
    %3380 = vmatpush1.msra.mxu0 0.0
    %3381 = vmatprep.subr.mxu0 0.0
    %3382 = vmatpush1.msra.mxu0 0.0
    %3383 = vmatprep.subr.mxu0 0.0
    %3384 = vmatpush1.msra.mxu0 0.0
    %3385 = vmatprep.subr.mxu0 0.0
    %3386 = vmatpush1.msra.mxu0 0.0
    %3387 = vmatprep.subr.mxu0 0.0
    %3388 = vmatpush1.msra.mxu0 0.0
    %3389 = vmatprep.subr.mxu0 0.0
    %3390 = vmatpush1.msra.mxu0 0.0
    %3391 = vmatprep.subr.mxu0 0.0
    %3392 = vmatpush1.msra.mxu0 0.0
    %3393 = vmatprep.subr.mxu0 0.0
    %3394 = vmatpush1.msra.mxu0 0.0
    %3395 = vmatprep.subr.mxu0 0.0
    %3396 = vmatpush1.msra.mxu0 0.0
    %3397 = vmatprep.subr.mxu0 0.0
    %3398 = vmatpush1.msra.mxu0 0.0
    %3399 = vmatprep.subr.mxu0 0.0
    %3400 = vmatpush1.msra.mxu0 0.0
    %3401 = vmatprep.subr.mxu0 0.0
    %3402 = vmatpush1.msra.mxu0 0.0
    %3403 = vmatprep.subr.mxu0 0.0
    %3404 = vmatpush1.msra.mxu0 0.0
    %3405 = vmatprep.subr.mxu0 0.0
    %3406 = vmatpush1.msra.mxu0 0.0
    %3407 = vmatprep.subr.mxu0 0.0
    %3408 = vmatpush1.msra.mxu0 0.0
    %3409 = vmatprep.subr.mxu0 0.0
    %3410 = vmatpush1.msra.mxu0 0.0
    %3411 = vmatprep.subr.mxu0 0.0
    %3412 = vmatpush1.msra.mxu0 0.0
    %3413 = vmatprep.subr.mxu0 0.0
    %3414 = vmatpush1.msra.mxu0 0.0
    %3415 = vmatprep.subr.mxu0 0.0
    %3416 = vmatpush1.msra.mxu0 0.0
    %3417 = vmatprep.subr.mxu0 0.0
    %3418 = vmatpush1.msra.mxu0 0.0
    %3419 = vmatprep.subr.mxu0 0.0
    %3420 = vmatpush1.msra.mxu0 0.0
    %3421 = vmatprep.subr.mxu0 0.0
    %3422 = vmatpush1.msra.mxu0 0.0
    %3423 = vmatprep.subr.mxu0 0.0
    %3424 = vmatpush1.msra.mxu0 0.0
    %3425 = vmatprep.mubr.f32.mxu0 0.0
    %3426 = vmatmul.mubr.f32.gmra.mrb[0].mxu0 %v3263
    %v3427 = vpop.f32.mrb[0].mxu0
    %v3428 = vadd.f32 %v3339, %v3427
    %v3429 = vpop.f32.mrb[0].mxu0
    %v3430 = vadd.f32 %v3341, %v3429
    %3431 = vmatprep.mubr.f32.mxu0 0.0
    %3432 = vmatmul.mubr.f32.gmra.mrb[0].mxu0 %v3265
    %v3433 = vpop.f32.mrb[0].mxu0
    %v3434 = vadd.f32 %v3345, %v3433
    %v3435 = vpop.f32.mrb[0].mxu0
    %v3436 = vadd.f32 %v3347, %v3435
    %3437 = vmatprep.mubr.f32.mxu0 0.0
    %3438 = vmatmul.mubr.f32.gmra.mrb[0].mxu0 %v3268
    %v3439 = vpop.f32.mrb[0].mxu0
    %v3440 = vadd.f32 %v3351, %v3439
    %v3441 = vpop.f32.mrb[0].mxu0
    %v3442 = vadd.f32 %v3353, %v3441
    %3443 = vmatprep.mubr.f32.mxu0 0.0
    %3444 = vmatmul.mubr.f32.gmra.mrb[0].mxu0 %v3270
    %v3445 = vpop.f32.mrb[0].mxu0
    %v3446 = vadd.f32 %v3357, %v3445
    %v3447 = vpop.f32.mrb[0].mxu0
    %v3448 = vadd.f32 %v3359, %v3447
    %3449 = vdwg.mxu0
    %v3450 = vld [vmem:[#allocation2] sm:$0xfc]
    %v3451 = vld [vmem:[#allocation2 + $0x8] sm:$0xfc]
    %v3452 = vld [vmem:[#allocation2 + $0x10] sm:$0xfc]
    %v3453 = vld [vmem:[#allocation2 + $0x30] sm:$0x3]
    %v3454 = vld [vmem:[#allocation2 + $0x38] sm:$0x3]
    %v3455 = vld [vmem:[#allocation2 + $0x40] sm:$0x3]
    %v3456 = vld [vmem:[#allocation2 + $0x48] sm:$0xfc]
    %v3457 = vld [vmem:[#allocation2 + $0x50] sm:$0xfc]
    %v3458 = vld [vmem:[#allocation2 + $0x58] sm:$0xfc]
    %v3459 = vld [vmem:[#allocation2 + $0x78] sm:$0x3]
    %v3460 = vld [vmem:[#allocation2 + $0x80] sm:$0x3]
    %v3461 = vld [vmem:[#allocation2 + $0x88] sm:$0x3]
    %v3474 = vrot.slane %v3450, 2
    %v3475 = vrot.slane %v2853, 2
    %v3476 = vsel %vm828, %v3474, %v3475
    %v3477 = vrot.slane %v3451, 2
    %v3478 = vrot.slane %v2854, 2
    %v3479 = vsel %vm828, %v3477, %v3478
    %v3480 = vrot.slane %v3452, 2
    %v3481 = vrot.slane %v2855, 2
    %v3482 = vsel %vm828, %v3480, %v3481
    %v3483 = vrot.slane %v3453, 2
    %v3484 = vsel %vm828, %v3475, %v3483
    %v3485 = vrot.slane %v3454, 2
    %v3486 = vsel %vm828, %v3478, %v3485
    %v3487 = vrot.slane %v3455, 2
    %v3488 = vsel %vm828, %v3481, %v3487
    %v3489 = vrot.slane %v3456, 2
    %v3490 = vrot.slane %v2859, 2
    %v3491 = vsel %vm828, %v3489, %v3490
    %v3492 = vrot.slane %v3457, 2
    %v3493 = vrot.slane %v2860, 2
    %v3494 = vsel %vm828, %v3492, %v3493
    %v3495 = vrot.slane %v3458, 2
    %v3496 = vrot.slane %v2861, 2
    %v3497 = vsel %vm828, %v3495, %v3496
    %v3498 = vrot.slane %v3459, 2
    %v3499 = vsel %vm828, %v3490, %v3498
    %v3500 = vrot.slane %v3460, 2
    %v3501 = vsel %vm828, %v3493, %v3500
    %v3502 = vrot.slane %v3461, 2
    %v3503 = vsel %vm828, %v3496, %v3502
    %s3512 = scalar_lea.vmem [#allocation6], 4608
    %v3513 = vld [vmem:[%s3512] sm:$0xff]
    %v3514 = vld [vmem:[%s3512 + $0x8] sm:$0xff]
    %v3515 = vld [vmem:[%s3512 + $0x10] sm:$0xff]
    %v3516 = vld [vmem:[%s3512 + $0x18] sm:$0xff]
    %v3517 = vld [vmem:[%s3512 + $0x20] sm:$0xff]
    %v3518 = vld [vmem:[%s3512 + $0x28] sm:$0xff]
    %v3519 = vld [vmem:[%s3512 + $0x30] sm:$0xff]
    %v3520 = vld [vmem:[%s3512 + $0x38] sm:$0xff]
    %v3521 = vld [vmem:[%s3512 + $0x40] sm:$0xff]
    %v3522 = vld [vmem:[%s3512 + $0x48] sm:$0xff]
    %v3523 = vld [vmem:[%s3512 + $0x50] sm:$0xff]
    %v3524 = vld [vmem:[%s3512 + $0x58] sm:$0xff]
    %v3525 = vld [vmem:[%s3512 + $0x60] sm:$0xff]
    %v3526 = vld [vmem:[%s3512 + $0x68] sm:$0xff]
    %v3527 = vld [vmem:[%s3512 + $0x70] sm:$0xff]
    %v3528 = vld [vmem:[%s3512 + $0x78] sm:$0xff]
    %v3529 = vld [vmem:[%s3512 + $0x80] sm:$0xff]
    %v3530 = vld [vmem:[%s3512 + $0x88] sm:$0xff]
    %v3531 = vld [vmem:[%s3512 + $0x90] sm:$0xff]
    %v3532 = vld [vmem:[%s3512 + $0x98] sm:$0xff]
    %v3533 = vld [vmem:[%s3512 + $0xa0] sm:$0xff]
    %v3534 = vld [vmem:[%s3512 + $0xa8] sm:$0xff]
    %v3535 = vld [vmem:[%s3512 + $0xb0] sm:$0xff]
    %v3536 = vld [vmem:[%s3512 + $0xb8] sm:$0xff]
    %v3537 = vld [vmem:[%s3512 + $0xc0] sm:$0xff]
    %v3538 = vld [vmem:[%s3512 + $0xc8] sm:$0xff]
    %v3539 = vld [vmem:[%s3512 + $0xd0] sm:$0xff]
    %v3540 = vld [vmem:[%s3512 + $0xd8] sm:$0xff]
    %v3541 = vld [vmem:[%s3512 + $0xe0] sm:$0xff]
    %v3542 = vld [vmem:[%s3512 + $0xe8] sm:$0xff]
    %v3543 = vld [vmem:[%s3512 + $0xf0] sm:$0xff]
    %v3544 = vld [vmem:[%s3512 + $0xf8] sm:$0xff]
    %v3545 = vld [vmem:[%s3512 + $0x100] sm:$0xff]
    %v3546 = vld [vmem:[%s3512 + $0x108] sm:$0xff]
    %v3547 = vld [vmem:[%s3512 + $0x110] sm:$0xff]
    %v3548 = vld [vmem:[%s3512 + $0x118] sm:$0xff]
    %v3549 = vld [vmem:[%s3512 + $0x120] sm:$0xff]
    %v3550 = vld [vmem:[%s3512 + $0x128] sm:$0xff]
    %v3551 = vld [vmem:[%s3512 + $0x130] sm:$0xff]
    %v3552 = vld [vmem:[%s3512 + $0x138] sm:$0xff]
    %v3553 = vld [vmem:[%s3512 + $0x140] sm:$0xff]
    %v3554 = vld [vmem:[%s3512 + $0x148] sm:$0xff]
    %v3555 = vld [vmem:[%s3512 + $0x150] sm:$0xff]
    %v3556 = vld [vmem:[%s3512 + $0x158] sm:$0xff]
    %v3557 = vld [vmem:[%s3512 + $0x160] sm:$0xff]
    %v3558 = vld [vmem:[%s3512 + $0x168] sm:$0xff]
    %v3559 = vld [vmem:[%s3512 + $0x170] sm:$0xff]
    %v3560 = vld [vmem:[%s3512 + $0x178] sm:$0xff]
    %v3561 = vld [vmem:[%s3512 + $0x180] sm:$0xff]
    %v3562 = vld [vmem:[%s3512 + $0x188] sm:$0xff]
    %v3563 = vld [vmem:[%s3512 + $0x190] sm:$0xff]
    %v3564 = vld [vmem:[%s3512 + $0x198] sm:$0xff]
    %v3565 = vld [vmem:[%s3512 + $0x1a0] sm:$0xff]
    %v3566 = vld [vmem:[%s3512 + $0x1a8] sm:$0xff]
    %v3567 = vld [vmem:[%s3512 + $0x1b0] sm:$0xff]
    %v3568 = vld [vmem:[%s3512 + $0x1b8] sm:$0xff]
    %v3569 = vld [vmem:[%s3512 + $0x1c0] sm:$0xff]
    %v3570 = vld [vmem:[%s3512 + $0x1c8] sm:$0xff]
    %v3571 = vld [vmem:[%s3512 + $0x1d0] sm:$0xff]
    %v3572 = vld [vmem:[%s3512 + $0x1d8] sm:$0xff]
    %v3573 = vld [vmem:[%s3512 + $0x1e0] sm:$0xff]
    %v3574 = vld [vmem:[%s3512 + $0x1e8] sm:$0xff]
    %v3575 = vld [vmem:[%s3512 + $0x1f0] sm:$0xff]
    %v3576 = vld [vmem:[%s3512 + $0x1f8] sm:$0xff]
    %v3577 = vld [vmem:[%s3512 + $0x200] sm:$0xff]
    %v3578 = vld [vmem:[%s3512 + $0x208] sm:$0xff]
    %v3579 = vld [vmem:[%s3512 + $0x210] sm:$0xff]
    %v3580 = vld [vmem:[%s3512 + $0x218] sm:$0xff]
    %v3581 = vld [vmem:[%s3512 + $0x220] sm:$0xff]
    %v3582 = vld [vmem:[%s3512 + $0x228] sm:$0xff]
    %v3583 = vld [vmem:[%s3512 + $0x230] sm:$0xff]
    %v3584 = vld [vmem:[%s3512 + $0x238] sm:$0xff]
    %v3585 = vsel %vm85, %v3482, 0
    %v3587 = vsel %vm85, %v3488, 0
    %v3589 = vsel %vm85, %v3497, 0
    %v3591 = vsel %vm85, %v3503, 0
    %3593 = vmatprep.subr.mxu0 %v3514
    %3594 = vmatpush1.msra.mxu0 %v3513
    %3595 = vmatprep.subr.mxu0 %v3516
    %3596 = vmatpush1.msra.mxu0 %v3515
    %3597 = vmatprep.subr.mxu0 %v3518
    %3598 = vmatpush1.msra.mxu0 %v3517
    %3599 = vmatprep.subr.mxu0 %v3520
    %3600 = vmatpush1.msra.mxu0 %v3519
    %3601 = vmatprep.subr.mxu0 %v3522
    %3602 = vmatpush1.msra.mxu0 %v3521
    %3603 = vmatprep.subr.mxu0 %v3524
    %3604 = vmatpush1.msra.mxu0 %v3523
    %3605 = vmatprep.subr.mxu0 %v3526
    %3606 = vmatpush1.msra.mxu0 %v3525
    %3607 = vmatprep.subr.mxu0 %v3528
    %3608 = vmatpush1.msra.mxu0 %v3527
    %3609 = vmatprep.subr.mxu0 %v3530
    %3610 = vmatpush1.msra.mxu0 %v3529
    %3611 = vmatprep.subr.mxu0 %v3532
    %3612 = vmatpush1.msra.mxu0 %v3531
    %3613 = vmatprep.subr.mxu0 %v3534
    %3614 = vmatpush1.msra.mxu0 %v3533
    %3615 = vmatprep.subr.mxu0 %v3536
    %3616 = vmatpush1.msra.mxu0 %v3535
    %3617 = vmatprep.subr.mxu0 %v3538
    %3618 = vmatpush1.msra.mxu0 %v3537
    %3619 = vmatprep.subr.mxu0 %v3540
    %3620 = vmatpush1.msra.mxu0 %v3539
    %3621 = vmatprep.subr.mxu0 %v3542
    %3622 = vmatpush1.msra.mxu0 %v3541
    %3623 = vmatprep.subr.mxu0 %v3544
    %3624 = vmatpush1.msra.mxu0 %v3543
    %3625 = vmatprep.subr.mxu0 %v3546
    %3626 = vmatpush1.msra.mxu0 %v3545
    %3627 = vmatprep.subr.mxu0 %v3548
    %3628 = vmatpush1.msra.mxu0 %v3547
    %3629 = vmatprep.subr.mxu0 %v3550
    %3630 = vmatpush1.msra.mxu0 %v3549
    %3631 = vmatprep.subr.mxu0 %v3552
    %3632 = vmatpush1.msra.mxu0 %v3551
    %3633 = vmatprep.subr.mxu0 %v3554
    %3634 = vmatpush1.msra.mxu0 %v3553
    %3635 = vmatprep.subr.mxu0 %v3556
    %3636 = vmatpush1.msra.mxu0 %v3555
    %3637 = vmatprep.subr.mxu0 %v3558
    %3638 = vmatpush1.msra.mxu0 %v3557
    %3639 = vmatprep.subr.mxu0 %v3560
    %3640 = vmatpush1.msra.mxu0 %v3559
    %3641 = vmatprep.subr.mxu0 %v3562
    %3642 = vmatpush1.msra.mxu0 %v3561
    %3643 = vmatprep.subr.mxu0 %v3564
    %3644 = vmatpush1.msra.mxu0 %v3563
    %3645 = vmatprep.subr.mxu0 %v3566
    %3646 = vmatpush1.msra.mxu0 %v3565
    %3647 = vmatprep.subr.mxu0 %v3568
    %3648 = vmatpush1.msra.mxu0 %v3567
    %3649 = vmatprep.subr.mxu0 %v3570
    %3650 = vmatpush1.msra.mxu0 %v3569
    %3651 = vmatprep.subr.mxu0 %v3572
    %3652 = vmatpush1.msra.mxu0 %v3571
    %3653 = vmatprep.subr.mxu0 %v3574
    %3654 = vmatpush1.msra.mxu0 %v3573
    %3655 = vmatprep.subr.mxu0 %v3576
    %3656 = vmatpush1.msra.mxu0 %v3575
    %3657 = vmatprep.mubr.f32.mxu0 %v3479
    %3658 = vmatmul.mubr.f32.gmra.mrb[0].mxu0 %v3476
    %v3659 = vpop.f32.mrb[0].mxu0
    %v3660 = vadd.f32 0.0, %v3659
    %v3661 = vpop.f32.mrb[0].mxu0
    %v3662 = vadd.f32 0.0, %v3661
    %3663 = vmatprep.mubr.f32.mxu0 %v3486
    %3664 = vmatmul.mubr.f32.gmra.mrb[0].mxu0 %v3484
    %v3665 = vpop.f32.mrb[0].mxu0
    %v3666 = vadd.f32 0.0, %v3665
    %v3667 = vpop.f32.mrb[0].mxu0
    %v3668 = vadd.f32 0.0, %v3667
    %3669 = vmatprep.mubr.f32.mxu0 %v3494
    %3670 = vmatmul.mubr.f32.gmra.mrb[0].mxu0 %v3491
    %v3671 = vpop.f32.mrb[0].mxu0
    %v3672 = vadd.f32 0.0, %v3671
    %v3673 = vpop.f32.mrb[0].mxu0
    %v3674 = vadd.f32 0.0, %v3673
    %3675 = vmatprep.mubr.f32.mxu0 %v3501
    %3676 = vmatmul.mubr.f32.gmra.mrb[0].mxu0 %v3499
    %v3677 = vpop.f32.mrb[0].mxu0
    %v3678 = vadd.f32 0.0, %v3677
    %v3679 = vpop.f32.mrb[0].mxu0
    %v3680 = vadd.f32 0.0, %v3679
    %3681 = vdwg.mxu0
    %3682 = vmatprep.subr.mxu0 %v3578
    %3683 = vmatpush1.msra.mxu0 %v3577
    %3684 = vmatprep.subr.mxu0 %v3580
    %3685 = vmatpush1.msra.mxu0 %v3579
    %3686 = vmatprep.subr.mxu0 %v3582
    %3687 = vmatpush1.msra.mxu0 %v3581
    %3688 = vmatprep.subr.mxu0 %v3584
    %3689 = vmatpush1.msra.mxu0 %v3583
    %3690 = vmatprep.subr.mxu0 0.0
    %3691 = vmatpush1.msra.mxu0 0.0
    %3692 = vmatprep.subr.mxu0 0.0
    %3693 = vmatpush1.msra.mxu0 0.0
    %3694 = vmatprep.subr.mxu0 0.0
    %3695 = vmatpush1.msra.mxu0 0.0
    %3696 = vmatprep.subr.mxu0 0.0
    %3697 = vmatpush1.msra.mxu0 0.0
    %3698 = vmatprep.subr.mxu0 0.0
    %3699 = vmatpush1.msra.mxu0 0.0
    %3700 = vmatprep.subr.mxu0 0.0
    %3701 = vmatpush1.msra.mxu0 0.0
    %3702 = vmatprep.subr.mxu0 0.0
    %3703 = vmatpush1.msra.mxu0 0.0
    %3704 = vmatprep.subr.mxu0 0.0
    %3705 = vmatpush1.msra.mxu0 0.0
    %3706 = vmatprep.subr.mxu0 0.0
    %3707 = vmatpush1.msra.mxu0 0.0
    %3708 = vmatprep.subr.mxu0 0.0
    %3709 = vmatpush1.msra.mxu0 0.0
    %3710 = vmatprep.subr.mxu0 0.0
    %3711 = vmatpush1.msra.mxu0 0.0
    %3712 = vmatprep.subr.mxu0 0.0
    %3713 = vmatpush1.msra.mxu0 0.0
    %3714 = vmatprep.subr.mxu0 0.0
    %3715 = vmatpush1.msra.mxu0 0.0
    %3716 = vmatprep.subr.mxu0 0.0
    %3717 = vmatpush1.msra.mxu0 0.0
    %3718 = vmatprep.subr.mxu0 0.0
    %3719 = vmatpush1.msra.mxu0 0.0
    %3720 = vmatprep.subr.mxu0 0.0
    %3721 = vmatpush1.msra.mxu0 0.0
    %3722 = vmatprep.subr.mxu0 0.0
    %3723 = vmatpush1.msra.mxu0 0.0
    %3724 = vmatprep.subr.mxu0 0.0
    %3725 = vmatpush1.msra.mxu0 0.0
    %3726 = vmatprep.subr.mxu0 0.0
    %3727 = vmatpush1.msra.mxu0 0.0
    %3728 = vmatprep.subr.mxu0 0.0
    %3729 = vmatpush1.msra.mxu0 0.0
    %3730 = vmatprep.subr.mxu0 0.0
    %3731 = vmatpush1.msra.mxu0 0.0
    %3732 = vmatprep.subr.mxu0 0.0
    %3733 = vmatpush1.msra.mxu0 0.0
    %3734 = vmatprep.subr.mxu0 0.0
    %3735 = vmatpush1.msra.mxu0 0.0
    %3736 = vmatprep.subr.mxu0 0.0
    %3737 = vmatpush1.msra.mxu0 0.0
    %3738 = vmatprep.subr.mxu0 0.0
    %3739 = vmatpush1.msra.mxu0 0.0
    %3740 = vmatprep.subr.mxu0 0.0
    %3741 = vmatpush1.msra.mxu0 0.0
    %3742 = vmatprep.subr.mxu0 0.0
    %3743 = vmatpush1.msra.mxu0 0.0
    %3744 = vmatprep.subr.mxu0 0.0
    %3745 = vmatpush1.msra.mxu0 0.0
    %3746 = vmatprep.mubr.f32.mxu0 0.0
    %3747 = vmatmul.mubr.f32.gmra.mrb[0].mxu0 %v3585
    %v3748 = vpop.f32.mrb[0].mxu0
    %v3749 = vadd.f32 %v3660, %v3748
    %v3750 = vpop.f32.mrb[0].mxu0
    %v3751 = vadd.f32 %v3662, %v3750
    %3752 = vmatprep.mubr.f32.mxu0 0.0
    %3753 = vmatmul.mubr.f32.gmra.mrb[0].mxu0 %v3587
    %v3754 = vpop.f32.mrb[0].mxu0
    %v3755 = vadd.f32 %v3666, %v3754
    %v3756 = vpop.f32.mrb[0].mxu0
    %v3757 = vadd.f32 %v3668, %v3756
    %3758 = vmatprep.mubr.f32.mxu0 0.0
    %3759 = vmatmul.mubr.f32.gmra.mrb[0].mxu0 %v3589
    %v3760 = vpop.f32.mrb[0].mxu0
    %v3761 = vadd.f32 %v3672, %v3760
    %v3762 = vpop.f32.mrb[0].mxu0
    %v3763 = vadd.f32 %v3674, %v3762
    %3764 = vmatprep.mubr.f32.mxu0 0.0
    %3765 = vmatmul.mubr.f32.gmra.mrb[0].mxu0 %v3591
    %v3766 = vpop.f32.mrb[0].mxu0
    %v3767 = vadd.f32 %v3678, %v3766
    %v3768 = vpop.f32.mrb[0].mxu0
    %v3769 = vadd.f32 %v3680, %v3768
    %3770 = vdwg.mxu0
    %v3771 = vadd.f32 %v3428, %v3749
    %v3772 = vadd.f32 %v3430, %v3751
    %v3773 = vadd.f32 %v3434, %v3755
    %v3774 = vadd.f32 %v3436, %v3757
    %v3775 = vadd.f32 %v3440, %v3761
    %v3776 = vadd.f32 %v3442, %v3763
    %v3777 = vadd.f32 %v3446, %v3767
    %v3778 = vadd.f32 %v3448, %v3769
    %v3779 = vld [vmem:[#allocation8 + $0x2] sm:$0x1]
    %3781 = vrot.lane.b32.xlu0 %v3779, 16
    %v3782 = vpop.permute.xlu0 %3781
    %3784 = vrot.lane.b32.xlu0 %v3779, 32
    %v3785 = vpop.permute.xlu0 %3784
    %3787 = vrot.lane.b32.xlu0 %v3779, 48
    %v3788 = vpop.permute.xlu0 %3787
    %3790 = vrot.lane.b32.xlu0 %v3779, 64
    %v3791 = vpop.permute.xlu0 %3790
    %3793 = vrot.lane.b32.xlu0 %v3779, 80
    %v3794 = vpop.permute.xlu0 %3793
    %3796 = vrot.lane.b32.xlu0 %v3779, 96
    %v3797 = vpop.permute.xlu0 %3796
    %3799 = vrot.lane.b32.xlu0 %v3779, 112
    %v3800 = vpop.permute.xlu0 %3799
    %v3802 = vsel %vm156, %v3779, %v3782
    %v3803 = vsel %vm85, %v3802, %v3785
    %v3804 = vsel %vm1159, %v3803, %v3788
    %v3805 = vsel %vm1161, %v3804, %v3791
    %v3806 = vsel %vm1163, %v3805, %v3794
    %v3807 = vsel %vm1165, %v3806, %v3797
    %v3808 = vsel %vm1167, %v3807, %v3800
    %v3809 = vlaneseq
    %v3810 = vshrl.u32 %v3809, 7
    %v3811 = vsub.s32 0, %v3810
    %v3812 = vrot.slane %v3808, %v3811
    %v3813 = vadd.f32 %v3771, %v3812
    %v3814 = vadd.f32 %v3772, %v3812
    %v3815 = vadd.f32 %v3773, %v3812
    %v3816 = vadd.f32 %v3774, %v3812
    %v3817 = vadd.f32 %v3775, %v3812
    %v3818 = vadd.f32 %v3776, %v3812
    %v3819 = vadd.f32 %v3777, %v3812
    %v3820 = vadd.f32 %v3778, %v3812
    %v3821 = vadd.f32 %v3813, %v3815
    %v3822 = vadd.f32 %v3821, %v3817
    %v3823 = vadd.f32 %v3822, %v3819
    %v3824 = vrot.slane %v3823, 4
    %v3825 = vadd.f32 %v3823, %v3824
    %v3826 = vrot.slane %v3825, 2
    %v3827 = vadd.f32 %v3825, %v3826
    %v3828 = vrot.slane %v3827, 1
    %v3829 = vadd.f32 %v3827, %v3828
    %v3830 = vadd.f32 %v3814, %v3816
    %v3831 = vadd.f32 %v3830, %v3818
    %v3832 = vadd.f32 %v3831, %v3820
    %v3833 = vrot.slane %v3832, 4
    %v3834 = vadd.f32 %v3832, %v3833
    %v3835 = vrot.slane %v3834, 2
    %v3836 = vadd.f32 %v3834, %v3835
    %v3837 = vrot.slane %v3836, 1
    %v3838 = vadd.f32 %v3836, %v3837
    %v3839 = vmul.f32 %v3813, %v3813
    %v3840 = vmul.f32 %v3814, %v3814
    %v3841 = vmul.f32 %v3815, %v3815
    %v3842 = vmul.f32 %v3816, %v3816
    %v3843 = vmul.f32 %v3817, %v3817
    %v3844 = vmul.f32 %v3818, %v3818
    %v3845 = vmul.f32 %v3819, %v3819
    %v3846 = vmul.f32 %v3820, %v3820
    %v3847 = vadd.f32 %v3839, %v3841
    %v3848 = vadd.f32 %v3847, %v3843
    %v3849 = vadd.f32 %v3848, %v3845
    %v3850 = vrot.slane %v3849, 4
    %v3851 = vadd.f32 %v3849, %v3850
    %v3852 = vrot.slane %v3851, 2
    %v3853 = vadd.f32 %v3851, %v3852
    %v3854 = vrot.slane %v3853, 1
    %v3855 = vadd.f32 %v3853, %v3854
    %v3856 = vadd.f32 %v3840, %v3842
    %v3857 = vadd.f32 %v3856, %v3844
    %v3858 = vadd.f32 %v3857, %v3846
    %v3859 = vrot.slane %v3858, 4
    %v3860 = vadd.f32 %v3858, %v3859
    %v3861 = vrot.slane %v3860, 2
    %v3862 = vadd.f32 %v3860, %v3861
    %v3863 = vrot.slane %v3862, 1
    %v3864 = vadd.f32 %v3862, %v3863
    %3866 = vrot.lane.b32.xlu0 %v3829, 112
    %v3867 = vpop.permute.xlu0 %3866
    %v3869 = vadd.f32 %v3829, %v3867
    %3871 = vrot.lane.b32.xlu0 %v3855, 112
    %v3872 = vpop.permute.xlu0 %3871
    %v3874 = vadd.f32 %v3855, %v3872
    %3875 = vrot.lane.b32.xlu0 %v3829, 96
    %v3876 = vpop.permute.xlu0 %3875
    %v3878 = vadd.f32 %v3869, %v3876
    %3879 = vrot.lane.b32.xlu0 %v3855, 96
    %v3880 = vpop.permute.xlu0 %3879
    %v3882 = vadd.f32 %v3874, %v3880
    %3883 = vrot.lane.b32.xlu0 %v3829, 80
    %v3884 = vpop.permute.xlu0 %3883
    %v3886 = vadd.f32 %v3878, %v3884
    %3887 = vrot.lane.b32.xlu0 %v3855, 80
    %v3888 = vpop.permute.xlu0 %3887
    %v3890 = vadd.f32 %v3882, %v3888
    %3891 = vrot.lane.b32.xlu0 %v3829, 64
    %v3892 = vpop.permute.xlu0 %3891
    %v3894 = vadd.f32 %v3886, %v3892
    %3895 = vrot.lane.b32.xlu0 %v3855, 64
    %v3896 = vpop.permute.xlu0 %3895
    %v3898 = vadd.f32 %v3890, %v3896
    %3899 = vrot.lane.b32.xlu0 %v3829, 48
    %v3900 = vpop.permute.xlu0 %3899
    %v3902 = vadd.f32 %v3894, %v3900
    %3903 = vrot.lane.b32.xlu0 %v3855, 48
    %v3904 = vpop.permute.xlu0 %3903
    %v3906 = vadd.f32 %v3898, %v3904
    %3907 = vrot.lane.b32.xlu0 %v3829, 32
    %v3908 = vpop.permute.xlu0 %3907
    %v3910 = vadd.f32 %v3902, %v3908
    %3911 = vrot.lane.b32.xlu0 %v3855, 32
    %v3912 = vpop.permute.xlu0 %3911
    %v3914 = vadd.f32 %v3906, %v3912
    %3915 = vrot.lane.b32.xlu0 %v3829, 16
    %v3916 = vpop.permute.xlu0 %3915
    %v3918 = vadd.f32 %v3910, %v3916
    %3919 = vrot.lane.b32.xlu0 %v3855, 16
    %v3920 = vpop.permute.xlu0 %3919
    %v3922 = vadd.f32 %v3914, %v3920
    %v3923 = vadd.f32 %v3918, %v3838
    %v3924 = vadd.f32 %v3922, %v3864
    %3926 = vrot.lane.b32.xlu0 %v3838, 112
    %v3927 = vpop.permute.xlu0 %3926
    %v3929 = vadd.f32 %v3923, %v3927
    %3931 = vrot.lane.b32.xlu0 %v3864, 112
    %v3932 = vpop.permute.xlu0 %3931
    %v3934 = vadd.f32 %v3924, %v3932
    %3935 = vrot.lane.b32.xlu0 %v3838, 96
    %v3936 = vpop.permute.xlu0 %3935
    %v3938 = vadd.f32 %v3929, %v3936
    %3939 = vrot.lane.b32.xlu0 %v3864, 96
    %v3940 = vpop.permute.xlu0 %3939
    %v3942 = vadd.f32 %v3934, %v3940
    %3943 = vrot.lane.b32.xlu0 %v3838, 80
    %v3944 = vpop.permute.xlu0 %3943
    %v3946 = vadd.f32 %v3938, %v3944
    %3947 = vrot.lane.b32.xlu0 %v3864, 80
    %v3948 = vpop.permute.xlu0 %3947
    %v3950 = vadd.f32 %v3942, %v3948
    %3951 = vrot.lane.b32.xlu0 %v3838, 64
    %v3952 = vpop.permute.xlu0 %3951
    %v3954 = vadd.f32 %v3946, %v3952
    %3955 = vrot.lane.b32.xlu0 %v3864, 64
    %v3956 = vpop.permute.xlu0 %3955
    %v3958 = vadd.f32 %v3950, %v3956
    %3959 = vrot.lane.b32.xlu0 %v3838, 48
    %v3960 = vpop.permute.xlu0 %3959
    %v3962 = vadd.f32 %v3954, %v3960
    %3963 = vrot.lane.b32.xlu0 %v3864, 48
    %v3964 = vpop.permute.xlu0 %3963
    %v3966 = vadd.f32 %v3958, %v3964
    %3967 = vrot.lane.b32.xlu0 %v3838, 32
    %v3968 = vpop.permute.xlu0 %3967
    %v3970 = vadd.f32 %v3962, %v3968
    %3971 = vrot.lane.b32.xlu0 %v3864, 32
    %v3972 = vpop.permute.xlu0 %3971
    %v3974 = vadd.f32 %v3966, %v3972
    %3975 = vrot.lane.b32.xlu0 %v3838, 16
    %v3976 = vpop.permute.xlu0 %3975
    %v3978 = vadd.f32 %v3970, %v3976
    %3979 = vrot.lane.b32.xlu0 %v3864, 16
    %v3980 = vpop.permute.xlu0 %3979
    %v3982 = vadd.f32 %v3974, %v3980
    %v3983 = vmul.f32 %v3978, 0.001953125
    %v3984 = vmul.f32 %v3982, 0.001953125
    %v3985 = vmul.f32 %v3983, %v3983
    %v3986 = vsub.f32 %v3984, %v3985
    %v3987 = vld [vmem:[#allocation9 + $0x2] sm:$0x1]
    %v3988 = vadd.f32 %v3986, 1e-05
    %v3989 = vrsqrt.pop %v3988
    %v3990 = vmul.f32 %v3987, %v3989
    %v3991 = vld [vmem:[#allocation11 + $0x2] sm:$0x1]
    %v3992 = vmul.f32 %v3983, %v3990
    %v3993 = vsub.f32 %v3991, %v3992
    %3995 = vrot.lane.b32.xlu0 %v3990, 16
    %v3996 = vpop.permute.xlu0 %3995
    %3998 = vrot.lane.b32.xlu0 %v3990, 32
    %v3999 = vpop.permute.xlu0 %3998
    %4001 = vrot.lane.b32.xlu0 %v3990, 48
    %v4002 = vpop.permute.xlu0 %4001
    %4004 = vrot.lane.b32.xlu0 %v3990, 64
    %v4005 = vpop.permute.xlu0 %4004
    %4007 = vrot.lane.b32.xlu0 %v3990, 80
    %v4008 = vpop.permute.xlu0 %4007
    %4010 = vrot.lane.b32.xlu0 %v3990, 96
    %v4011 = vpop.permute.xlu0 %4010
    %4013 = vrot.lane.b32.xlu0 %v3990, 112
    %v4014 = vpop.permute.xlu0 %4013
    %v4016 = vsel %vm156, %v3990, %v3996
    %v4017 = vsel %vm85, %v4016, %v3999
    %v4018 = vsel %vm1159, %v4017, %v4002
    %v4019 = vsel %vm1161, %v4018, %v4005
    %v4020 = vsel %vm1163, %v4019, %v4008
    %v4021 = vsel %vm1165, %v4020, %v4011
    %v4022 = vsel %vm1167, %v4021, %v4014
    %v4023 = vlaneseq
    %v4024 = vshrl.u32 %v4023, 7
    %v4025 = vsub.s32 0, %v4024
    %v4026 = vrot.slane %v4022, %v4025
    %v4027 = vmul.f32 %v3813, %v4026
    %v4028 = vmul.f32 %v3814, %v4026
    %v4029 = vmul.f32 %v3815, %v4026
    %v4030 = vmul.f32 %v3816, %v4026
    %v4031 = vmul.f32 %v3817, %v4026
    %v4032 = vmul.f32 %v3818, %v4026
    %v4033 = vmul.f32 %v3819, %v4026
    %v4034 = vmul.f32 %v3820, %v4026
    %4036 = vrot.lane.b32.xlu0 %v3993, 16
    %v4037 = vpop.permute.xlu0 %4036
    %4039 = vrot.lane.b32.xlu0 %v3993, 32
    %v4040 = vpop.permute.xlu0 %4039
    %4042 = vrot.lane.b32.xlu0 %v3993, 48
    %v4043 = vpop.permute.xlu0 %4042
    %4045 = vrot.lane.b32.xlu0 %v3993, 64
    %v4046 = vpop.permute.xlu0 %4045
    %4048 = vrot.lane.b32.xlu0 %v3993, 80
    %v4049 = vpop.permute.xlu0 %4048
    %4051 = vrot.lane.b32.xlu0 %v3993, 96
    %v4052 = vpop.permute.xlu0 %4051
    %4054 = vrot.lane.b32.xlu0 %v3993, 112
    %v4055 = vpop.permute.xlu0 %4054
    %v4057 = vsel %vm156, %v3993, %v4037
    %v4058 = vsel %vm85, %v4057, %v4040
    %v4059 = vsel %vm1159, %v4058, %v4043
    %v4060 = vsel %vm1161, %v4059, %v4046
    %v4061 = vsel %vm1163, %v4060, %v4049
    %v4062 = vsel %vm1165, %v4061, %v4052
    %v4063 = vsel %vm1167, %v4062, %v4055
    %v4064 = vlaneseq
    %v4065 = vshrl.u32 %v4064, 7
    %v4066 = vsub.s32 0, %v4065
    %v4067 = vrot.slane %v4063, %v4066
    %v4068 = vadd.f32 %v4027, %v4067
    %v4069 = vadd.f32 %v4028, %v4067
    %v4070 = vadd.f32 %v4029, %v4067
    %v4071 = vadd.f32 %v4030, %v4067
    %v4072 = vadd.f32 %v4031, %v4067
    %v4073 = vadd.f32 %v4032, %v4067
    %v4074 = vadd.f32 %v4033, %v4067
    %v4075 = vadd.f32 %v4034, %v4067
    %4076 = vst [vmem:[#allocation12] sm:$0xff] %v4068
    %4077 = vst [vmem:[#allocation12 + $0x8] sm:$0xff] %v4069
    %4078 = vst [vmem:[#allocation12 + $0x10] sm:$0xff] %v4070
    %4079 = vst [vmem:[#allocation12 + $0x18] sm:$0xff] %v4071
    %4080 = vst [vmem:[#allocation12 + $0x20] sm:$0xff] %v4072
    %4081 = vst [vmem:[#allocation12 + $0x28] sm:$0xff] %v4073
    %4082 = vst [vmem:[#allocation12 + $0x30] sm:$0xff] %v4074
    %4083 = vst [vmem:[#allocation12 + $0x38] sm:$0xff] %v4075
    // Predicated region
    $region42: #{tpu_custom_call.1} parent=1 // pred_check
      _
    $region43: #{tpu_custom_call.1} parent=1 // pred_check_branch
      %4085 = sbr.rel (0) target = $region45
    $region44: #{tpu_custom_call.1} parent=1 // pred_region
      %s4087 = ssub.s32 1024, 1024
      %4088 = vsyncadd [#allocation5], %s4087
      %s4089 = sshll.u32 [#allocation12], 4
      %s4090 = int_to_ptr.vmem [resolvable:$true] %s4089
      %4095 = dma.vmem_to_hbm [thread:$0]  %s4090, 1024, %s5, [#allocation5], 256, 256, 16
    $region45: #{tpu_custom_call.1} parent=1 // pred_fallthru
      _
    // Predicated region
    $region46: #{tpu_custom_call.1} parent=1 // pred_check
      _
    $region47: #{tpu_custom_call.1} parent=1 // pred_check_branch
      %4097 = sbr.rel (0) target = $region49
    $region48: #{tpu_custom_call.1} parent=1 // pred_region
      %4098 = dma.done [#allocation5], 1024
    $region49: #{tpu_custom_call.1} parent=1 // pred_fallthru
      _
    %4099 = vsyncpa [#allocation4], 1
    %4100 = vsyncpa [#allocation7], 1
    %4101 = vsyncpa [#allocation10], 1
    %4102 = vsyncpa [#allocation5], 1

</llo_original>
